<compile_context>
chip_gen: v5e
topology: v5e:2x2
jax: 0.10.0
libtpu: 0.0.40
codegen_flags: <defaults>
</compile_context>

<pallas_src>
import functools

import jax
import jax.numpy as jnp
from jax.experimental import pallas as pl
from jax.experimental.pallas import tpu as pltpu


def _round_up(x, m):
    return ((x + m - 1) // m) * m


# --------------------------------------------------------------------------- #
# Kernel
# --------------------------------------------------------------------------- #
def _num_graph_kernel(node_ref, g1_ref, g2_ref,
                      w11_ref, b11_ref, w12_ref, b12_ref,
                      w21_ref, b21_ref, w22_ref, b22_ref,
                      wg1_ref, wg2_ref, bg_ref,
                      won_ref, woi_ref, bo_ref,
                      out_ref, *, matmul_dtype):
    node3 = node_ref[...]                       # (Bb, N, Dp) f32
    g1 = g1_ref[...]                            # (Bb, N, N)  f32
    g2 = g2_ref[...]                            # (Bb, N, N)  f32
    Bb, N, Dp = node3.shape
    BN = Bb * N

    # normalize(graph, symmetric=False): diag(rowsum^-1) @ graph.
    # approx=True -> EUP vrcp (separate VLIW slot). A zero row gives inf and
    # then 0*inf = NaN downstream, matching torch's diag(0^-1) behavior.
    g1 = g1 * pl.reciprocal(jnp.sum(g1, axis=-1, keepdims=True), approx=True)
    g2 = g2 * pl.reciprocal(jnp.sum(g2, axis=-1, keepdims=True), approx=True)

    def gconv(g, x3):
        # batched graph aggregation: (Bb,N,N) @ (Bb,N,Dp) -> (Bb,N,Dp)
        if N <= 16:
            # K = N is tiny: MXU K-utilization would be N/256. Do it on the
            # VPU/XLU (broadcast-multiply + reduce over m) and keep the MXU
            # free for the stacked linears that carry the bulk of the FLOPs.
            return jnp.sum(g[..., None] * x3[:, None, :, :], axis=2)
        return jnp.einsum('bnm,bmd->bnd',
                          g.astype(matmul_dtype), x3.astype(matmul_dtype),
                          preferred_element_type=jnp.float32)

    def linear(x2, w_ref, b_ref):
        # Linear on the stacked (Bb*N, Dp) row view -> one MXU matmul,
        # bf16 (or f32) operands with f32 accumulation.
        return jnp.dot(x2.astype(matmul_dtype), w_ref[...].astype(matmul_dtype),
                       preferred_element_type=jnp.float32) + b_ref[...]

    def branch(g, wA_ref, bA_ref, wB_ref, bB_ref):
        # reshapes stay on f32 data with Dp % 128 == 0 and N % 8 == 0
        # -> tile-aligned merge/split of the leading dims, no relayout copies.
        h = jnp.maximum(linear(gconv(g, node3).reshape(BN, Dp),
                               wA_ref, bA_ref), 0.0)
        h = jnp.maximum(linear(gconv(g, h.reshape(Bb, N, Dp)).reshape(BN, Dp),
                               wB_ref, bB_ref), 0.0)
        return h                                # (Bb*N, Dp)

    ni1 = branch(g1, w11_ref, b11_ref, w12_ref, b12_ref)
    ni2 = branch(g2, w21_ref, b21_ref, w22_ref, b22_ref)

    # gate = sigmoid([ni1, ni2, ni1+ni2, ni1-ni2] @ Wg + bg), Wg pre-folded
    # wrapper-side into two (Dp,Dp) matrices (no lane-axis concat, half FLOPs).
    gate = jax.nn.sigmoid(
        jnp.dot(ni1.astype(matmul_dtype), wg1_ref[...].astype(matmul_dtype),
                preferred_element_type=jnp.float32)
        + jnp.dot(ni2.astype(matmul_dtype), wg2_ref[...].astype(matmul_dtype),
                  preferred_element_type=jnp.float32)
        + bg_ref[...])
    # == gate*ni1 + (1-gate)*ni2 with one fewer multiply / live temp.
    node_info = ni2 + gate * (ni1 - ni2)

    # agg = relu([node, node_info] @ Wo + bo), Wo split into two (Dp,Dp) slices.
    node2 = node3.reshape(BN, Dp)
    out2 = jnp.maximum(
        jnp.dot(node2.astype(matmul_dtype), won_ref[...].astype(matmul_dtype),
                preferred_element_type=jnp.float32)
        + jnp.dot(node_info.astype(matmul_dtype), woi_ref[...].astype(matmul_dtype),
                  preferred_element_type=jnp.float32)
        + bo_ref[...], 0.0)
    out_ref[...] = out2.reshape(Bb, N, Dp)


# --------------------------------------------------------------------------- #
# Wrapper
# --------------------------------------------------------------------------- #
def _tpu_vmem_capacity_bytes():
    try:
        return int(pltpu.get_tpu_info().vmem_capacity_bytes)
    except Exception:
        return 64 * 1024 * 1024          # conservative (v7x per-TC size)


def _num_tensorcores_per_chip():
    try:
        kind = jax.devices()[0].device_kind.lower()
        return 2 if ("v7" in kind or "7x" in kind) else 1
    except Exception:
        return 1


def _pick_block_b(B, N, Dp, use_vpu_gconv, vmem_budget_bytes, num_tc):
    """Largest divisor of B whose block fits the budget; keep grid >= num_tc."""
    itemsize = 4
    def footprint(bb):
        io = 2 * itemsize * (2 * bb * N * Dp + 2 * bb * N * N)   # dbl-buffered I/O
        wts = itemsize * (8 * Dp * Dp + 6 * Dp)                  # single-buffered
        inter = itemsize * bb * N * (10 * Dp + (N * Dp if use_vpu_gconv else 0))
        return io + wts + inter
    for bb in [d for d in range(B, 0, -1) if B % d == 0]:
        if num_tc > 1 and B >= num_tc and (B // bb) < num_tc:
            continue     # v7x: shard the parallel batch axis across both TCs
        if footprint(bb) <= vmem_budget_bytes:
            return bb
    return 1


def num_graph_module(node, graph1, graph2, params, *, block_b=None,
                     matmul_dtype=jnp.bfloat16):
    """node: (B,N,D), graph1/graph2: (B,N,N). params: pre-transposed weights."""
    B, N, D = node.shape
    node = node.astype(jnp.float32)
    graph1 = graph1.astype(jnp.float32)
    graph2 = graph2.astype(jnp.float32)

    # Lane-dense feature axis: pad D up to a multiple of 128 (>=128) with zeros.
    # Zero-padded weight rows/cols + zero biases keep columns [0:D] exact.
    Dp = max(128, _round_up(D, 128))
    pad_d = Dp - D

    wg, wo = params["wg"], params["wo"]
    # Fold the gate concat-Linear (exactly equivalent):
    #   [n1,n2,n1+n2,n1-n2] @ Wg = n1 @ (Wg0+Wg2+Wg3) + n2 @ (Wg1+Wg2-Wg3)
    wg1 = wg[0:D] + wg[2 * D:3 * D] + wg[3 * D:4 * D]
    wg2 = wg[D:2 * D] + wg[2 * D:3 * D] - wg[3 * D:4 * D]
    won, woi = wo[0:D], wo[D:2 * D]

    def padw(w):
        return jnp.pad(w.astype(jnp.float32), ((0, pad_d), (0, pad_d)))

    def padb(b):
        return jnp.pad(b.reshape(1, D).astype(jnp.float32), ((0, 0), (0, pad_d)))

    weights = [padw(params["w11"]), padb(params["b11"]),
               padw(params["w12"]), padb(params["b12"]),
               padw(params["w21"]), padb(params["b21"]),
               padw(params["w22"]), padb(params["b22"]),
               padw(wg1), padw(wg2), padb(params["bg"]),
               padw(won), padw(woi), padb(params["bo"])]

    node_p = jnp.pad(node, ((0, 0), (0, 0), (0, pad_d)))

    # Per-generation resource management.
    vmem_cap = _tpu_vmem_capacity_bytes()
    vmem_limit = int(min(int(vmem_cap * 0.9), 128 * 1024 * 1024))
    num_tc = _num_tensorcores_per_chip()
    if block_b is None:
        block_b = _pick_block_b(B, N, Dp, N <= 16,
                                int(vmem_limit * 0.6), num_tc)
    assert B % block_b == 0, "block_b must divide the batch size"
    grid = (B // block_b,)

    def make_wspec(w, single_buffer):
        shape = w.shape
        idx = lambda i, _n=len(shape): (0,) * _n
        if single_buffer:
            # Grid-invariant -> the second pipeline buffer is pure VMEM waste.
            return pl.BlockSpec(shape, idx, pipeline_mode=pl.Buffered(1))
        return pl.BlockSpec(shape, idx)

    def build(single_buffer_weights):
        in_specs = [
            pl.BlockSpec((block_b, N, Dp), lambda i: (i, 0, 0)),   # node
            pl.BlockSpec((block_b, N, N), lambda i: (i, 0, 0)),    # graph1
            pl.BlockSpec((block_b, N, N), lambda i: (i, 0, 0)),    # graph2
        ] + [make_wspec(w, single_buffer_weights) for w in weights]
        out_spec = pl.BlockSpec((block_b, N, Dp), lambda i: (i, 0, 0))

        flops = B * (8 * N * N * Dp + 16 * N * Dp * Dp)
        cost = pl.CostEstimate(
            flops=flops,
            transcendentals=B * N * Dp + 2 * B * N,        # sigmoid + 2 vrcp rows
            bytes_accessed=4 * (2 * B * N * Dp + 2 * B * N * N)
                           + 4 * (8 * Dp * Dp + 6 * Dp))

        return pl.pallas_call(
            functools.partial(_num_graph_kernel, matmul_dtype=matmul_dtype),
            out_shape=jax.ShapeDtypeStruct((B, N, Dp), jnp.float32),
            grid=grid,
            in_specs=in_specs,
            out_specs=out_spec,
            compiler_params=pltpu.CompilerParams(
                dimension_semantics=("parallel",),
                vmem_limit_bytes=vmem_limit),
            cost_estimate=cost,
        )

    args = (node_p, graph1, graph2, *weights)
    try:
        out_p = build(single_buffer_weights=True)(*args)
    except Exception:
        # Older jax without BlockSpec(pipeline_mode=...): default buffering.
        out_p = build(single_buffer_weights=False)(*args)
    return out_p[..., :D]


# --------------------------------------------------------------------------- #
# Pure-JAX reference (mirrors the PyTorch forward: concat form, division)
# --------------------------------------------------------------------------- #
def _reference(node, graph1, graph2, params):
    g1 = graph1.astype(jnp.float32)
    g2 = graph2.astype(jnp.float32)
    g1 = g1 / jnp.sum(g1, axis=2, keepdims=True)
    g2 = g2 / jnp.sum(g2, axis=2, keepdims=True)

    def lin(x, w, b):
        return x @ w + b

    ni1 = jax.nn.relu(lin(g1 @ node, params["w11"], params["b11"]))
    ni1 = jax.nn.relu(lin(g1 @ ni1, params["w12"], params["b12"]))
    ni2 = jax.nn.relu(lin(g2 @ node, params["w21"], params["b21"]))
    ni2 = jax.nn.relu(lin(g2 @ ni2, params["w22"], params["b22"]))
    gate = jax.nn.sigmoid(lin(jnp.concatenate([ni1, ni2, ni1 + ni2, ni1 - ni2], axis=2),
                              params["wg"], params["bg"]))
    node_info = gate * ni1 + (1 - gate) * ni2
    return jax.nn.relu(lin(jnp.concatenate([node, node_info], axis=2),
                           params["wo"], params["bo"]))


def _init_params(key, D):
    """Deterministic Linear params; weights stored as (in_features, out_features)."""
    def linear_init(k, fan_in, fan_out):
        kw, kb = jax.random.split(k)
        bound = 1.0 / jnp.sqrt(fan_in)
        w = jax.random.uniform(kw, (fan_in, fan_out), jnp.float32, -bound, bound)
        b = jax.random.uniform(kb, (1, fan_out), jnp.float32, -bound, bound)
        return w, b

    keys = jax.random.split(key, 6)
    p = {}
    p["w11"], p["b11"] = linear_init(keys[0], D, D)        # node1_fc1
    p["w12"], p["b12"] = linear_init(keys[1], D, D)        # node1_fc2
    p["w21"], p["b21"] = linear_init(keys[2], D, D)        # node2_fc1
    p["w22"], p["b22"] = linear_init(keys[3], D, D)        # node2_fc2
    p["wg"], p["bg"] = linear_init(keys[4], 4 * D, D)      # graph_weight
    p["wo"], p["bo"] = linear_init(keys[5], 2 * D, D)      # node_out
    return p


if __name__ == "__main__":
    B, N, D = 2, 8, 32   # batch, num_nodes, node_dim

    key = jax.random.PRNGKey(0)
    k_node, k_g1, k_g2, k_params = jax.random.split(key, 4)

    node = jax.random.normal(k_node, (B, N, D), jnp.float32)
    # strictly positive graphs so row sums are nonzero (as in real adjacency use)
    graph1 = jax.random.uniform(k_g1, (B, N, N), jnp.float32, 0.1, 1.0)
    graph2 = jax.random.uniform(k_g2, (B, N, N), jnp.float32, 0.1, 1.0)

    params = _init_params(k_params, D)
    ref = _reference(node, graph1, graph2, params)

    # f32-MXU path: tight check against the concat/division reference.
    out_f32 = jax.block_until_ready(
        num_graph_module(node, graph1, graph2, params, matmul_dtype=jnp.float32))
    assert out_f32.shape == (B, N, D)
    assert jnp.allclose(out_f32, ref, atol=1e-2, rtol=1e-2), "f32 kernel mismatch"

    # Default bf16-MXU path: auto block_b and explicit per-sample blocks.
    for bb in (None, 1):
        out = jax.block_until_ready(
            num_graph_module(node, graph1, graph2, params, block_b=bb))
        assert out.shape == (B, N, D)
        assert jnp.allclose(out, ref, atol=5e-2, rtol=5e-2), \
            f"bf16 kernel mismatch (block_b={bb})"

    print("KERNEL_OK")
</pallas_src>

<mosaic_0001>
module attributes {stable_mosaic.version = 11 : i64} {
  func.func @_num_graph_kernel(%arg0: i32, %arg1: memref<2x8x128xf32, #tpu.memory_space<vmem>>, %arg2: memref<2x8x8xf32, #tpu.memory_space<vmem>>, %arg3: memref<2x8x8xf32, #tpu.memory_space<vmem>>, %arg4: memref<128x128xf32, #tpu.memory_space<vmem>>, %arg5: memref<1x128xf32, #tpu.memory_space<vmem>>, %arg6: memref<128x128xf32, #tpu.memory_space<vmem>>, %arg7: memref<1x128xf32, #tpu.memory_space<vmem>>, %arg8: memref<128x128xf32, #tpu.memory_space<vmem>>, %arg9: memref<1x128xf32, #tpu.memory_space<vmem>>, %arg10: memref<128x128xf32, #tpu.memory_space<vmem>>, %arg11: memref<1x128xf32, #tpu.memory_space<vmem>>, %arg12: memref<128x128xf32, #tpu.memory_space<vmem>>, %arg13: memref<128x128xf32, #tpu.memory_space<vmem>>, %arg14: memref<1x128xf32, #tpu.memory_space<vmem>>, %arg15: memref<128x128xf32, #tpu.memory_space<vmem>>, %arg16: memref<128x128xf32, #tpu.memory_space<vmem>>, %arg17: memref<1x128xf32, #tpu.memory_space<vmem>>, %arg18: memref<2x8x128xf32, #tpu.memory_space<vmem>>) attributes {dimension_semantics = [#tpu.dimension_semantics<parallel>], iteration_bounds = array<i64: 1>, scalar_prefetch = 0 : i64, scratch_operands = 0 : i64, tpu.core_type = #tpu.core_type<tc>, window_params = [{transform_indices = @transform_0, window_bounds = array<i64: 2, 8, 128>}, {transform_indices = @transform_1, window_bounds = array<i64: 2, 8, 8>}, {transform_indices = @transform_2, window_bounds = array<i64: 2, 8, 8>}, {pipeline_mode = #tpu.pipeline_mode<synchronous>, transform_indices = @transform_3, window_bounds = array<i64: 128, 128>}, {pipeline_mode = #tpu.pipeline_mode<synchronous>, transform_indices = @transform_4, window_bounds = array<i64: 1, 128>}, {pipeline_mode = #tpu.pipeline_mode<synchronous>, transform_indices = @transform_5, window_bounds = array<i64: 128, 128>}, {pipeline_mode = #tpu.pipeline_mode<synchronous>, transform_indices = @transform_6, window_bounds = array<i64: 1, 128>}, {pipeline_mode = #tpu.pipeline_mode<synchronous>, transform_indices = @transform_7, window_bounds = array<i64: 128, 128>}, {pipeline_mode = #tpu.pipeline_mode<synchronous>, transform_indices = @transform_8, window_bounds = array<i64: 1, 128>}, {pipeline_mode = #tpu.pipeline_mode<synchronous>, transform_indices = @transform_9, window_bounds = array<i64: 128, 128>}, {pipeline_mode = #tpu.pipeline_mode<synchronous>, transform_indices = @transform_10, window_bounds = array<i64: 1, 128>}, {pipeline_mode = #tpu.pipeline_mode<synchronous>, transform_indices = @transform_11, window_bounds = array<i64: 128, 128>}, {pipeline_mode = #tpu.pipeline_mode<synchronous>, transform_indices = @transform_12, window_bounds = array<i64: 128, 128>}, {pipeline_mode = #tpu.pipeline_mode<synchronous>, transform_indices = @transform_13, window_bounds = array<i64: 1, 128>}, {pipeline_mode = #tpu.pipeline_mode<synchronous>, transform_indices = @transform_14, window_bounds = array<i64: 128, 128>}, {pipeline_mode = #tpu.pipeline_mode<synchronous>, transform_indices = @transform_15, window_bounds = array<i64: 128, 128>}, {pipeline_mode = #tpu.pipeline_mode<synchronous>, transform_indices = @transform_16, window_bounds = array<i64: 1, 128>}, {transform_indices = @transform_17, window_bounds = array<i64: 2, 8, 128>}]} {
    %c0 = arith.constant 0 : index
    %c0_0 = arith.constant 0 : index
    %c0_1 = arith.constant 0 : index
    %0 = vector.load %arg1[%c0, %c0_0, %c0_1] : memref<2x8x128xf32, #tpu.memory_space<vmem>>, vector<2x8x128xf32>
    %c0_2 = arith.constant 0 : index
    %c0_3 = arith.constant 0 : index
    %c0_4 = arith.constant 0 : index
    %1 = vector.load %arg2[%c0_2, %c0_3, %c0_4] : memref<2x8x8xf32, #tpu.memory_space<vmem>>, vector<2x8x8xf32>
    %c0_5 = arith.constant 0 : index
    %c0_6 = arith.constant 0 : index
    %c0_7 = arith.constant 0 : index
    %2 = vector.load %arg3[%c0_5, %c0_6, %c0_7] : memref<2x8x8xf32, #tpu.memory_space<vmem>>, vector<2x8x8xf32>
    %cst = arith.constant dense<0.000000e+00> : vector<2x8xf32>
    %3 = vector.multi_reduction <add>, %1, %cst [2] : vector<2x8x8xf32> to vector<2x8xf32>
    %4 = vector.shape_cast %3 : vector<2x8xf32> to vector<2x8x1xf32>
    %5 = tpu.reciprocal %4 {approx = true} : vector<2x8x1xf32> -> vector<2x8x1xf32>
    %6 = vector.broadcast %5 : vector<2x8x1xf32> to vector<2x8x8xf32>
    %7 = arith.mulf %1, %6 : vector<2x8x8xf32>
    %cst_8 = arith.constant dense<0.000000e+00> : vector<2x8xf32>
    %8 = vector.multi_reduction <add>, %2, %cst_8 [2] : vector<2x8x8xf32> to vector<2x8xf32>
    %9 = vector.shape_cast %8 : vector<2x8xf32> to vector<2x8x1xf32>
    %10 = tpu.reciprocal %9 {approx = true} : vector<2x8x1xf32> -> vector<2x8x1xf32>
    %11 = vector.broadcast %10 : vector<2x8x1xf32> to vector<2x8x8xf32>
    %12 = arith.mulf %2, %11 : vector<2x8x8xf32>
    %13 = vector.shape_cast %7 : vector<2x8x8xf32> to vector<2x8x8x1xf32>
    %14 = vector.shape_cast %0 : vector<2x8x128xf32> to vector<2x1x8x128xf32>
    %15 = vector.broadcast %13 : vector<2x8x8x1xf32> to vector<2x8x8x128xf32>
    %16 = vector.broadcast %14 : vector<2x1x8x128xf32> to vector<2x8x8x128xf32>
    %17 = arith.mulf %15, %16 : vector<2x8x8x128xf32>
    %cst_9 = arith.constant dense<0.000000e+00> : vector<2x8x128xf32>
    %18 = vector.multi_reduction <add>, %17, %cst_9 [2] : vector<2x8x8x128xf32> to vector<2x8x128xf32>
    %19 = vector.shape_cast %18 : vector<2x8x128xf32> to vector<16x128xf32>
    %c0_10 = arith.constant 0 : index
    %c0_11 = arith.constant 0 : index
    %20 = vector.load %arg4[%c0_10, %c0_11] : memref<128x128xf32, #tpu.memory_space<vmem>>, vector<128x128xf32>
    %cst_12 = arith.constant dense<0.000000e+00> : vector<16x128xf32>
    %21 = tpu.matmul %19, %20, %cst_12 {dimension_numbers = #tpu.dot_dimension_numbers<[1], [0], [0], [1], [0, 0, 1, 1], [], []>} : vector<16x128xf32>, vector<128x128xf32>, vector<16x128xf32> -> vector<16x128xf32>
    %c0_13 = arith.constant 0 : index
    %c0_14 = arith.constant 0 : index
    %22 = vector.load %arg5[%c0_13, %c0_14] : memref<1x128xf32, #tpu.memory_space<vmem>>, vector<1x128xf32>
    %23 = vector.broadcast %22 : vector<1x128xf32> to vector<16x128xf32>
    %24 = arith.addf %21, %23 : vector<16x128xf32>
    %cst_15 = arith.constant 0.000000e+00 : f32
    %25 = vector.broadcast %cst_15 : f32 to vector<16x128xf32>
    %26 = arith.maximumf %24, %25 : vector<16x128xf32>
    %27 = vector.shape_cast %26 : vector<16x128xf32> to vector<2x8x128xf32>
    %28 = vector.shape_cast %7 : vector<2x8x8xf32> to vector<2x8x8x1xf32>
    %29 = vector.shape_cast %27 : vector<2x8x128xf32> to vector<2x1x8x128xf32>
    %30 = vector.broadcast %28 : vector<2x8x8x1xf32> to vector<2x8x8x128xf32>
    %31 = vector.broadcast %29 : vector<2x1x8x128xf32> to vector<2x8x8x128xf32>
    %32 = arith.mulf %30, %31 : vector<2x8x8x128xf32>
    %cst_16 = arith.constant dense<0.000000e+00> : vector<2x8x128xf32>
    %33 = vector.multi_reduction <add>, %32, %cst_16 [2] : vector<2x8x8x128xf32> to vector<2x8x128xf32>
    %34 = vector.shape_cast %33 : vector<2x8x128xf32> to vector<16x128xf32>
    %c0_17 = arith.constant 0 : index
    %c0_18 = arith.constant 0 : index
    %35 = vector.load %arg6[%c0_17, %c0_18] : memref<128x128xf32, #tpu.memory_space<vmem>>, vector<128x128xf32>
    %cst_19 = arith.constant dense<0.000000e+00> : vector<16x128xf32>
    %36 = tpu.matmul %34, %35, %cst_19 {dimension_numbers = #tpu.dot_dimension_numbers<[1], [0], [0], [1], [0, 0, 1, 1], [], []>} : vector<16x128xf32>, vector<128x128xf32>, vector<16x128xf32> -> vector<16x128xf32>
    %c0_20 = arith.constant 0 : index
    %c0_21 = arith.constant 0 : index
    %37 = vector.load %arg7[%c0_20, %c0_21] : memref<1x128xf32, #tpu.memory_space<vmem>>, vector<1x128xf32>
    %38 = vector.broadcast %37 : vector<1x128xf32> to vector<16x128xf32>
    %39 = arith.addf %36, %38 : vector<16x128xf32>
    %cst_22 = arith.constant 0.000000e+00 : f32
    %40 = vector.broadcast %cst_22 : f32 to vector<16x128xf32>
    %41 = arith.maximumf %39, %40 : vector<16x128xf32>
    %42 = vector.shape_cast %12 : vector<2x8x8xf32> to vector<2x8x8x1xf32>
    %43 = vector.shape_cast %0 : vector<2x8x128xf32> to vector<2x1x8x128xf32>
    %44 = vector.broadcast %42 : vector<2x8x8x1xf32> to vector<2x8x8x128xf32>
    %45 = vector.broadcast %43 : vector<2x1x8x128xf32> to vector<2x8x8x128xf32>
    %46 = arith.mulf %44, %45 : vector<2x8x8x128xf32>
    %cst_23 = arith.constant dense<0.000000e+00> : vector<2x8x128xf32>
    %47 = vector.multi_reduction <add>, %46, %cst_23 [2] : vector<2x8x8x128xf32> to vector<2x8x128xf32>
    %48 = vector.shape_cast %47 : vector<2x8x128xf32> to vector<16x128xf32>
    %c0_24 = arith.constant 0 : index
    %c0_25 = arith.constant 0 : index
    %49 = vector.load %arg8[%c0_24, %c0_25] : memref<128x128xf32, #tpu.memory_space<vmem>>, vector<128x128xf32>
    %cst_26 = arith.constant dense<0.000000e+00> : vector<16x128xf32>
    %50 = tpu.matmul %48, %49, %cst_26 {dimension_numbers = #tpu.dot_dimension_numbers<[1], [0], [0], [1], [0, 0, 1, 1], [], []>} : vector<16x128xf32>, vector<128x128xf32>, vector<16x128xf32> -> vector<16x128xf32>
    %c0_27 = arith.constant 0 : index
    %c0_28 = arith.constant 0 : index
    %51 = vector.load %arg9[%c0_27, %c0_28] : memref<1x128xf32, #tpu.memory_space<vmem>>, vector<1x128xf32>
    %52 = vector.broadcast %51 : vector<1x128xf32> to vector<16x128xf32>
    %53 = arith.addf %50, %52 : vector<16x128xf32>
    %cst_29 = arith.constant 0.000000e+00 : f32
    %54 = vector.broadcast %cst_29 : f32 to vector<16x128xf32>
    %55 = arith.maximumf %53, %54 : vector<16x128xf32>
    %56 = vector.shape_cast %55 : vector<16x128xf32> to vector<2x8x128xf32>
    %57 = vector.shape_cast %12 : vector<2x8x8xf32> to vector<2x8x8x1xf32>
    %58 = vector.shape_cast %56 : vector<2x8x128xf32> to vector<2x1x8x128xf32>
    %59 = vector.broadcast %57 : vector<2x8x8x1xf32> to vector<2x8x8x128xf32>
    %60 = vector.broadcast %58 : vector<2x1x8x128xf32> to vector<2x8x8x128xf32>
    %61 = arith.mulf %59, %60 : vector<2x8x8x128xf32>
    %cst_30 = arith.constant dense<0.000000e+00> : vector<2x8x128xf32>
    %62 = vector.multi_reduction <add>, %61, %cst_30 [2] : vector<2x8x8x128xf32> to vector<2x8x128xf32>
    %63 = vector.shape_cast %62 : vector<2x8x128xf32> to vector<16x128xf32>
    %c0_31 = arith.constant 0 : index
    %c0_32 = arith.constant 0 : index
    %64 = vector.load %arg10[%c0_31, %c0_32] : memref<128x128xf32, #tpu.memory_space<vmem>>, vector<128x128xf32>
    %cst_33 = arith.constant dense<0.000000e+00> : vector<16x128xf32>
    %65 = tpu.matmul %63, %64, %cst_33 {dimension_numbers = #tpu.dot_dimension_numbers<[1], [0], [0], [1], [0, 0, 1, 1], [], []>} : vector<16x128xf32>, vector<128x128xf32>, vector<16x128xf32> -> vector<16x128xf32>
    %c0_34 = arith.constant 0 : index
    %c0_35 = arith.constant 0 : index
    %66 = vector.load %arg11[%c0_34, %c0_35] : memref<1x128xf32, #tpu.memory_space<vmem>>, vector<1x128xf32>
    %67 = vector.broadcast %66 : vector<1x128xf32> to vector<16x128xf32>
    %68 = arith.addf %65, %67 : vector<16x128xf32>
    %cst_36 = arith.constant 0.000000e+00 : f32
    %69 = vector.broadcast %cst_36 : f32 to vector<16x128xf32>
    %70 = arith.maximumf %68, %69 : vector<16x128xf32>
    %c0_37 = arith.constant 0 : index
    %c0_38 = arith.constant 0 : index
    %71 = vector.load %arg12[%c0_37, %c0_38] : memref<128x128xf32, #tpu.memory_space<vmem>>, vector<128x128xf32>
    %cst_39 = arith.constant dense<0.000000e+00> : vector<16x128xf32>
    %72 = tpu.matmul %41, %71, %cst_39 {dimension_numbers = #tpu.dot_dimension_numbers<[1], [0], [0], [1], [0, 0, 1, 1], [], []>} : vector<16x128xf32>, vector<128x128xf32>, vector<16x128xf32> -> vector<16x128xf32>
    %c0_40 = arith.constant 0 : index
    %c0_41 = arith.constant 0 : index
    %73 = vector.load %arg13[%c0_40, %c0_41] : memref<128x128xf32, #tpu.memory_space<vmem>>, vector<128x128xf32>
    %cst_42 = arith.constant dense<0.000000e+00> : vector<16x128xf32>
    %74 = tpu.matmul %70, %73, %cst_42 {dimension_numbers = #tpu.dot_dimension_numbers<[1], [0], [0], [1], [0, 0, 1, 1], [], []>} : vector<16x128xf32>, vector<128x128xf32>, vector<16x128xf32> -> vector<16x128xf32>
    %75 = arith.addf %72, %74 : vector<16x128xf32>
    %c0_43 = arith.constant 0 : index
    %c0_44 = arith.constant 0 : index
    %76 = vector.load %arg14[%c0_43, %c0_44] : memref<1x128xf32, #tpu.memory_space<vmem>>, vector<1x128xf32>
    %77 = vector.broadcast %76 : vector<1x128xf32> to vector<16x128xf32>
    %78 = arith.addf %75, %77 : vector<16x128xf32>
    %79 = arith.negf %78 : vector<16x128xf32>
    %80 = math.exp %79 : vector<16x128xf32>
    %cst_45 = arith.constant 1.000000e+00 : f32
    %81 = vector.broadcast %cst_45 : f32 to vector<16x128xf32>
    %82 = arith.addf %81, %80 : vector<16x128xf32>
    %83 = arith.divf %81, %82 : vector<16x128xf32>
    %84 = arith.subf %41, %70 : vector<16x128xf32>
    %85 = arith.mulf %83, %84 : vector<16x128xf32>
    %86 = arith.addf %70, %85 : vector<16x128xf32>
    %87 = vector.shape_cast %0 : vector<2x8x128xf32> to vector<16x128xf32>
    %c0_46 = arith.constant 0 : index
    %c0_47 = arith.constant 0 : index
    %88 = vector.load %arg15[%c0_46, %c0_47] : memref<128x128xf32, #tpu.memory_space<vmem>>, vector<128x128xf32>
    %cst_48 = arith.constant dense<0.000000e+00> : vector<16x128xf32>
    %89 = tpu.matmul %87, %88, %cst_48 {dimension_numbers = #tpu.dot_dimension_numbers<[1], [0], [0], [1], [0, 0, 1, 1], [], []>} : vector<16x128xf32>, vector<128x128xf32>, vector<16x128xf32> -> vector<16x128xf32>
    %c0_49 = arith.constant 0 : index
    %c0_50 = arith.constant 0 : index
    %90 = vector.load %arg16[%c0_49, %c0_50] : memref<128x128xf32, #tpu.memory_space<vmem>>, vector<128x128xf32>
    %cst_51 = arith.constant dense<0.000000e+00> : vector<16x128xf32>
    %91 = tpu.matmul %86, %90, %cst_51 {dimension_numbers = #tpu.dot_dimension_numbers<[1], [0], [0], [1], [0, 0, 1, 1], [], []>} : vector<16x128xf32>, vector<128x128xf32>, vector<16x128xf32> -> vector<16x128xf32>
    %92 = arith.addf %89, %91 : vector<16x128xf32>
    %c0_52 = arith.constant 0 : index
    %c0_53 = arith.constant 0 : index
    %93 = vector.load %arg17[%c0_52, %c0_53] : memref<1x128xf32, #tpu.memory_space<vmem>>, vector<1x128xf32>
    %94 = vector.broadcast %93 : vector<1x128xf32> to vector<16x128xf32>
    %95 = arith.addf %92, %94 : vector<16x128xf32>
    %cst_54 = arith.constant 0.000000e+00 : f32
    %96 = vector.broadcast %cst_54 : f32 to vector<16x128xf32>
    %97 = arith.maximumf %95, %96 : vector<16x128xf32>
    %98 = vector.shape_cast %97 : vector<16x128xf32> to vector<2x8x128xf32>
    %c0_55 = arith.constant 0 : index
    %c0_56 = arith.constant 0 : index
    %c0_57 = arith.constant 0 : index
    %99 = vector.load %arg18[%c0_55, %c0_56, %c0_57] : memref<2x8x128xf32, #tpu.memory_space<vmem>>, vector<2x8x128xf32>
    tpu.vector_store %arg18[%c0_55, %c0_56, %c0_57], %98 {strides = array<i32>} : memref<2x8x128xf32, #tpu.memory_space<vmem>>, vector<2x8x128xf32>,
    return
  }
  func.func @transform_0(%arg0: i32) -> (i32, i32, i32) {
    %c0_i32 = arith.constant 0 : i32
    %c0_i32_0 = arith.constant 0 : i32
    %c0_i32_1 = arith.constant 0 : i32
    return %arg0, %c0_i32, %c0_i32_0 : i32, i32, i32
  }
  func.func @transform_1(%arg0: i32) -> (i32, i32, i32) {
    %c0_i32 = arith.constant 0 : i32
    %c0_i32_0 = arith.constant 0 : i32
    %c0_i32_1 = arith.constant 0 : i32
    return %arg0, %c0_i32, %c0_i32_0 : i32, i32, i32
  }
  func.func @transform_2(%arg0: i32) -> (i32, i32, i32) {
    %c0_i32 = arith.constant 0 : i32
    %c0_i32_0 = arith.constant 0 : i32
    %c0_i32_1 = arith.constant 0 : i32
    return %arg0, %c0_i32, %c0_i32_0 : i32, i32, i32
  }
  func.func @transform_3(%arg0: i32) -> (i32, i32) {
    %c0_i32 = arith.constant 0 : i32
    %c0_i32_0 = arith.constant 0 : i32
    %c0_i32_1 = arith.constant 0 : i32
    return %c0_i32, %c0_i32_0 : i32, i32
  }
  func.func @transform_4(%arg0: i32) -> (i32, i32) {
    %c0_i32 = arith.constant 0 : i32
    %c0_i32_0 = arith.constant 0 : i32
    %c0_i32_1 = arith.constant 0 : i32
    return %c0_i32, %c0_i32_0 : i32, i32
  }
  func.func @transform_5(%arg0: i32) -> (i32, i32) {
    %c0_i32 = arith.constant 0 : i32
    %c0_i32_0 = arith.constant 0 : i32
    %c0_i32_1 = arith.constant 0 : i32
    return %c0_i32, %c0_i32_0 : i32, i32
  }
  func.func @transform_6(%arg0: i32) -> (i32, i32) {
    %c0_i32 = arith.constant 0 : i32
    %c0_i32_0 = arith.constant 0 : i32
    %c0_i32_1 = arith.constant 0 : i32
    return %c0_i32, %c0_i32_0 : i32, i32
  }
  func.func @transform_7(%arg0: i32) -> (i32, i32) {
    %c0_i32 = arith.constant 0 : i32
    %c0_i32_0 = arith.constant 0 : i32
    %c0_i32_1 = arith.constant 0 : i32
    return %c0_i32, %c0_i32_0 : i32, i32
  }
  func.func @transform_8(%arg0: i32) -> (i32, i32) {
    %c0_i32 = arith.constant 0 : i32
    %c0_i32_0 = arith.constant 0 : i32
    %c0_i32_1 = arith.constant 0 : i32
    return %c0_i32, %c0_i32_0 : i32, i32
  }
  func.func @transform_9(%arg0: i32) -> (i32, i32) {
    %c0_i32 = arith.constant 0 : i32
    %c0_i32_0 = arith.constant 0 : i32
    %c0_i32_1 = arith.constant 0 : i32
    return %c0_i32, %c0_i32_0 : i32, i32
  }
  func.func @transform_10(%arg0: i32) -> (i32, i32) {
    %c0_i32 = arith.constant 0 : i32
    %c0_i32_0 = arith.constant 0 : i32
    %c0_i32_1 = arith.constant 0 : i32
    return %c0_i32, %c0_i32_0 : i32, i32
  }
  func.func @transform_11(%arg0: i32) -> (i32, i32) {
    %c0_i32 = arith.constant 0 : i32
    %c0_i32_0 = arith.constant 0 : i32
    %c0_i32_1 = arith.constant 0 : i32
    return %c0_i32, %c0_i32_0 : i32, i32
  }
  func.func @transform_12(%arg0: i32) -> (i32, i32) {
    %c0_i32 = arith.constant 0 : i32
    %c0_i32_0 = arith.constant 0 : i32
    %c0_i32_1 = arith.constant 0 : i32
    return %c0_i32, %c0_i32_0 : i32, i32
  }
  func.func @transform_13(%arg0: i32) -> (i32, i32) {
    %c0_i32 = arith.constant 0 : i32
    %c0_i32_0 = arith.constant 0 : i32
    %c0_i32_1 = arith.constant 0 : i32
    return %c0_i32, %c0_i32_0 : i32, i32
  }
  func.func @transform_14(%arg0: i32) -> (i32, i32) {
    %c0_i32 = arith.constant 0 : i32
    %c0_i32_0 = arith.constant 0 : i32
    %c0_i32_1 = arith.constant 0 : i32
    return %c0_i32, %c0_i32_0 : i32, i32
  }
  func.func @transform_15(%arg0: i32) -> (i32, i32) {
    %c0_i32 = arith.constant 0 : i32
    %c0_i32_0 = arith.constant 0 : i32
    %c0_i32_1 = arith.constant 0 : i32
    return %c0_i32, %c0_i32_0 : i32, i32
  }
  func.func @transform_16(%arg0: i32) -> (i32, i32) {
    %c0_i32 = arith.constant 0 : i32
    %c0_i32_0 = arith.constant 0 : i32
    %c0_i32_1 = arith.constant 0 : i32
    return %c0_i32, %c0_i32_0 : i32, i32
  }
  func.func @transform_17(%arg0: i32) -> (i32, i32, i32) {
    %c0_i32 = arith.constant 0 : i32
    %c0_i32_0 = arith.constant 0 : i32
    %c0_i32_1 = arith.constant 0 : i32
    return %arg0, %c0_i32, %c0_i32_0 : i32, i32, i32
  }
}

module attributes {stable_mosaic.version = 11 : i64} {
  func.func @_num_graph_kernel(%arg0: i32, %arg1: memref<2x8x128xf32, #tpu.memory_space<vmem>>, %arg2: memref<2x8x8xf32, #tpu.memory_space<vmem>>, %arg3: memref<2x8x8xf32, #tpu.memory_space<vmem>>, %arg4: memref<128x128xf32, #tpu.memory_space<vmem>>, %arg5: memref<1x128xf32, #tpu.memory_space<vmem>>, %arg6: memref<128x128xf32, #tpu.memory_space<vmem>>, %arg7: memref<1x128xf32, #tpu.memory_space<vmem>>, %arg8: memref<128x128xf32, #tpu.memory_space<vmem>>, %arg9: memref<1x128xf32, #tpu.memory_space<vmem>>, %arg10: memref<128x128xf32, #tpu.memory_space<vmem>>, %arg11: memref<1x128xf32, #tpu.memory_space<vmem>>, %arg12: memref<128x128xf32, #tpu.memory_space<vmem>>, %arg13: memref<128x128xf32, #tpu.memory_space<vmem>>, %arg14: memref<1x128xf32, #tpu.memory_space<vmem>>, %arg15: memref<128x128xf32, #tpu.memory_space<vmem>>, %arg16: memref<128x128xf32, #tpu.memory_space<vmem>>, %arg17: memref<1x128xf32, #tpu.memory_space<vmem>>, %arg18: memref<2x8x128xf32, #tpu.memory_space<vmem>>) attributes {dimension_semantics = [#tpu.dimension_semantics<parallel>], iteration_bounds = array<i64: 1>, scalar_prefetch = 0 : i64, scratch_operands = 0 : i64, tpu.core_type = #tpu.core_type<tc>, window_params = [{transform_indices = @transform_0, window_bounds = array<i64: 2, 8, 128>}, {transform_indices = @transform_1, window_bounds = array<i64: 2, 8, 8>}, {transform_indices = @transform_2, window_bounds = array<i64: 2, 8, 8>}, {pipeline_mode = #tpu.pipeline_mode<synchronous>, transform_indices = @transform_3, window_bounds = array<i64: 128, 128>}, {pipeline_mode = #tpu.pipeline_mode<synchronous>, transform_indices = @transform_4, window_bounds = array<i64: 1, 128>}, {pipeline_mode = #tpu.pipeline_mode<synchronous>, transform_indices = @transform_5, window_bounds = array<i64: 128, 128>}, {pipeline_mode = #tpu.pipeline_mode<synchronous>, transform_indices = @transform_6, window_bounds = array<i64: 1, 128>}, {pipeline_mode = #tpu.pipeline_mode<synchronous>, transform_indices = @transform_7, window_bounds = array<i64: 128, 128>}, {pipeline_mode = #tpu.pipeline_mode<synchronous>, transform_indices = @transform_8, window_bounds = array<i64: 1, 128>}, {pipeline_mode = #tpu.pipeline_mode<synchronous>, transform_indices = @transform_9, window_bounds = array<i64: 128, 128>}, {pipeline_mode = #tpu.pipeline_mode<synchronous>, transform_indices = @transform_10, window_bounds = array<i64: 1, 128>}, {pipeline_mode = #tpu.pipeline_mode<synchronous>, transform_indices = @transform_11, window_bounds = array<i64: 128, 128>}, {pipeline_mode = #tpu.pipeline_mode<synchronous>, transform_indices = @transform_12, window_bounds = array<i64: 128, 128>}, {pipeline_mode = #tpu.pipeline_mode<synchronous>, transform_indices = @transform_13, window_bounds = array<i64: 1, 128>}, {pipeline_mode = #tpu.pipeline_mode<synchronous>, transform_indices = @transform_14, window_bounds = array<i64: 128, 128>}, {pipeline_mode = #tpu.pipeline_mode<synchronous>, transform_indices = @transform_15, window_bounds = array<i64: 128, 128>}, {pipeline_mode = #tpu.pipeline_mode<synchronous>, transform_indices = @transform_16, window_bounds = array<i64: 1, 128>}, {transform_indices = @transform_17, window_bounds = array<i64: 2, 8, 128>}]} {
    %c0 = arith.constant 0 : index
    %c0_0 = arith.constant 0 : index
    %c0_1 = arith.constant 0 : index
    %0 = vector.load %arg1[%c0, %c0_0, %c0_1] : memref<2x8x128xf32, #tpu.memory_space<vmem>>, vector<2x8x128xf32>
    %c0_2 = arith.constant 0 : index
    %c0_3 = arith.constant 0 : index
    %c0_4 = arith.constant 0 : index
    %1 = vector.load %arg2[%c0_2, %c0_3, %c0_4] : memref<2x8x8xf32, #tpu.memory_space<vmem>>, vector<2x8x8xf32>
    %c0_5 = arith.constant 0 : index
    %c0_6 = arith.constant 0 : index
    %c0_7 = arith.constant 0 : index
    %2 = vector.load %arg3[%c0_5, %c0_6, %c0_7] : memref<2x8x8xf32, #tpu.memory_space<vmem>>, vector<2x8x8xf32>
    %cst = arith.constant dense<0.000000e+00> : vector<2x8xf32>
    %3 = vector.multi_reduction <add>, %1, %cst [2] : vector<2x8x8xf32> to vector<2x8xf32>
    %4 = vector.shape_cast %3 : vector<2x8xf32> to vector<2x8x1xf32>
    %5 = tpu.reciprocal %4 {approx = true} : vector<2x8x1xf32> -> vector<2x8x1xf32>
    %6 = vector.broadcast %5 : vector<2x8x1xf32> to vector<2x8x8xf32>
    %7 = arith.mulf %1, %6 : vector<2x8x8xf32>
    %cst_8 = arith.constant dense<0.000000e+00> : vector<2x8xf32>
    %8 = vector.multi_reduction <add>, %2, %cst_8 [2] : vector<2x8x8xf32> to vector<2x8xf32>
    %9 = vector.shape_cast %8 : vector<2x8xf32> to vector<2x8x1xf32>
    %10 = tpu.reciprocal %9 {approx = true} : vector<2x8x1xf32> -> vector<2x8x1xf32>
    %11 = vector.broadcast %10 : vector<2x8x1xf32> to vector<2x8x8xf32>
    %12 = arith.mulf %2, %11 : vector<2x8x8xf32>
    %13 = vector.shape_cast %7 : vector<2x8x8xf32> to vector<2x8x8x1xf32>
    %14 = vector.shape_cast %0 : vector<2x8x128xf32> to vector<2x1x8x128xf32>
    %15 = vector.broadcast %13 : vector<2x8x8x1xf32> to vector<2x8x8x128xf32>
    %16 = vector.broadcast %14 : vector<2x1x8x128xf32> to vector<2x8x8x128xf32>
    %17 = arith.mulf %15, %16 : vector<2x8x8x128xf32>
    %cst_9 = arith.constant dense<0.000000e+00> : vector<2x8x128xf32>
    %18 = vector.multi_reduction <add>, %17, %cst_9 [2] : vector<2x8x8x128xf32> to vector<2x8x128xf32>
    %19 = vector.shape_cast %18 : vector<2x8x128xf32> to vector<16x128xf32>
    %c0_10 = arith.constant 0 : index
    %c0_11 = arith.constant 0 : index
    %20 = vector.load %arg4[%c0_10, %c0_11] : memref<128x128xf32, #tpu.memory_space<vmem>>, vector<128x128xf32>
    %cst_12 = arith.constant dense<0.000000e+00> : vector<16x128xf32>
    %21 = tpu.matmul %19, %20, %cst_12 {dimension_numbers = #tpu.dot_dimension_numbers<[1], [0], [0], [1], [0, 0, 1, 1], [], []>} : vector<16x128xf32>, vector<128x128xf32>, vector<16x128xf32> -> vector<16x128xf32>
    %c0_13 = arith.constant 0 : index
    %c0_14 = arith.constant 0 : index
    %22 = vector.load %arg5[%c0_13, %c0_14] : memref<1x128xf32, #tpu.memory_space<vmem>>, vector<1x128xf32>
    %23 = vector.broadcast %22 : vector<1x128xf32> to vector<16x128xf32>
    %24 = arith.addf %21, %23 : vector<16x128xf32>
    %cst_15 = arith.constant 0.000000e+00 : f32
    %25 = vector.broadcast %cst_15 : f32 to vector<16x128xf32>
    %26 = arith.maximumf %24, %25 : vector<16x128xf32>
    %27 = vector.shape_cast %26 : vector<16x128xf32> to vector<2x8x128xf32>
    %28 = vector.shape_cast %7 : vector<2x8x8xf32> to vector<2x8x8x1xf32>
    %29 = vector.shape_cast %27 : vector<2x8x128xf32> to vector<2x1x8x128xf32>
    %30 = vector.broadcast %28 : vector<2x8x8x1xf32> to vector<2x8x8x128xf32>
    %31 = vector.broadcast %29 : vector<2x1x8x128xf32> to vector<2x8x8x128xf32>
    %32 = arith.mulf %30, %31 : vector<2x8x8x128xf32>
    %cst_16 = arith.constant dense<0.000000e+00> : vector<2x8x128xf32>
    %33 = vector.multi_reduction <add>, %32, %cst_16 [2] : vector<2x8x8x128xf32> to vector<2x8x128xf32>
    %34 = vector.shape_cast %33 : vector<2x8x128xf32> to vector<16x128xf32>
    %c0_17 = arith.constant 0 : index
    %c0_18 = arith.constant 0 : index
    %35 = vector.load %arg6[%c0_17, %c0_18] : memref<128x128xf32, #tpu.memory_space<vmem>>, vector<128x128xf32>
    %cst_19 = arith.constant dense<0.000000e+00> : vector<16x128xf32>
    %36 = tpu.matmul %34, %35, %cst_19 {dimension_numbers = #tpu.dot_dimension_numbers<[1], [0], [0], [1], [0, 0, 1, 1], [], []>} : vector<16x128xf32>, vector<128x128xf32>, vector<16x128xf32> -> vector<16x128xf32>
    %c0_20 = arith.constant 0 : index
    %c0_21 = arith.constant 0 : index
    %37 = vector.load %arg7[%c0_20, %c0_21] : memref<1x128xf32, #tpu.memory_space<vmem>>, vector<1x128xf32>
    %38 = vector.broadcast %37 : vector<1x128xf32> to vector<16x128xf32>
    %39 = arith.addf %36, %38 : vector<16x128xf32>
    %cst_22 = arith.constant 0.000000e+00 : f32
    %40 = vector.broadcast %cst_22 : f32 to vector<16x128xf32>
    %41 = arith.maximumf %39, %40 : vector<16x128xf32>
    %42 = vector.shape_cast %12 : vector<2x8x8xf32> to vector<2x8x8x1xf32>
    %43 = vector.shape_cast %0 : vector<2x8x128xf32> to vector<2x1x8x128xf32>
    %44 = vector.broadcast %42 : vector<2x8x8x1xf32> to vector<2x8x8x128xf32>
    %45 = vector.broadcast %43 : vector<2x1x8x128xf32> to vector<2x8x8x128xf32>
    %46 = arith.mulf %44, %45 : vector<2x8x8x128xf32>
    %cst_23 = arith.constant dense<0.000000e+00> : vector<2x8x128xf32>
    %47 = vector.multi_reduction <add>, %46, %cst_23 [2] : vector<2x8x8x128xf32> to vector<2x8x128xf32>
    %48 = vector.shape_cast %47 : vector<2x8x128xf32> to vector<16x128xf32>
    %c0_24 = arith.constant 0 : index
    %c0_25 = arith.constant 0 : index
    %49 = vector.load %arg8[%c0_24, %c0_25] : memref<128x128xf32, #tpu.memory_space<vmem>>, vector<128x128xf32>
    %cst_26 = arith.constant dense<0.000000e+00> : vector<16x128xf32>
    %50 = tpu.matmul %48, %49, %cst_26 {dimension_numbers = #tpu.dot_dimension_numbers<[1], [0], [0], [1], [0, 0, 1, 1], [], []>} : vector<16x128xf32>, vector<128x128xf32>, vector<16x128xf32> -> vector<16x128xf32>
    %c0_27 = arith.constant 0 : index
    %c0_28 = arith.constant 0 : index
    %51 = vector.load %arg9[%c0_27, %c0_28] : memref<1x128xf32, #tpu.memory_space<vmem>>, vector<1x128xf32>
    %52 = vector.broadcast %51 : vector<1x128xf32> to vector<16x128xf32>
    %53 = arith.addf %50, %52 : vector<16x128xf32>
    %cst_29 = arith.constant 0.000000e+00 : f32
    %54 = vector.broadcast %cst_29 : f32 to vector<16x128xf32>
    %55 = arith.maximumf %53, %54 : vector<16x128xf32>
    %56 = vector.shape_cast %55 : vector<16x128xf32> to vector<2x8x128xf32>
    %57 = vector.shape_cast %12 : vector<2x8x8xf32> to vector<2x8x8x1xf32>
    %58 = vector.shape_cast %56 : vector<2x8x128xf32> to vector<2x1x8x128xf32>
    %59 = vector.broadcast %57 : vector<2x8x8x1xf32> to vector<2x8x8x128xf32>
    %60 = vector.broadcast %58 : vector<2x1x8x128xf32> to vector<2x8x8x128xf32>
    %61 = arith.mulf %59, %60 : vector<2x8x8x128xf32>
    %cst_30 = arith.constant dense<0.000000e+00> : vector<2x8x128xf32>
    %62 = vector.multi_reduction <add>, %61, %cst_30 [2] : vector<2x8x8x128xf32> to vector<2x8x128xf32>
    %63 = vector.shape_cast %62 : vector<2x8x128xf32> to vector<16x128xf32>
    %c0_31 = arith.constant 0 : index
    %c0_32 = arith.constant 0 : index
    %64 = vector.load %arg10[%c0_31, %c0_32] : memref<128x128xf32, #tpu.memory_space<vmem>>, vector<128x128xf32>
    %cst_33 = arith.constant dense<0.000000e+00> : vector<16x128xf32>
    %65 = tpu.matmul %63, %64, %cst_33 {dimension_numbers = #tpu.dot_dimension_numbers<[1], [0], [0], [1], [0, 0, 1, 1], [], []>} : vector<16x128xf32>, vector<128x128xf32>, vector<16x128xf32> -> vector<16x128xf32>
    %c0_34 = arith.constant 0 : index
    %c0_35 = arith.constant 0 : index
    %66 = vector.load %arg11[%c0_34, %c0_35] : memref<1x128xf32, #tpu.memory_space<vmem>>, vector<1x128xf32>
    %67 = vector.broadcast %66 : vector<1x128xf32> to vector<16x128xf32>
    %68 = arith.addf %65, %67 : vector<16x128xf32>
    %cst_36 = arith.constant 0.000000e+00 : f32
    %69 = vector.broadcast %cst_36 : f32 to vector<16x128xf32>
    %70 = arith.maximumf %68, %69 : vector<16x128xf32>
    %c0_37 = arith.constant 0 : index
    %c0_38 = arith.constant 0 : index
    %71 = vector.load %arg12[%c0_37, %c0_38] : memref<128x128xf32, #tpu.memory_space<vmem>>, vector<128x128xf32>
    %cst_39 = arith.constant dense<0.000000e+00> : vector<16x128xf32>
    %72 = tpu.matmul %41, %71, %cst_39 {dimension_numbers = #tpu.dot_dimension_numbers<[1], [0], [0], [1], [0, 0, 1, 1], [], []>} : vector<16x128xf32>, vector<128x128xf32>, vector<16x128xf32> -> vector<16x128xf32>
    %c0_40 = arith.constant 0 : index
    %c0_41 = arith.constant 0 : index
    %73 = vector.load %arg13[%c0_40, %c0_41] : memref<128x128xf32, #tpu.memory_space<vmem>>, vector<128x128xf32>
    %cst_42 = arith.constant dense<0.000000e+00> : vector<16x128xf32>
    %74 = tpu.matmul %70, %73, %cst_42 {dimension_numbers = #tpu.dot_dimension_numbers<[1], [0], [0], [1], [0, 0, 1, 1], [], []>} : vector<16x128xf32>, vector<128x128xf32>, vector<16x128xf32> -> vector<16x128xf32>
    %75 = arith.addf %72, %74 : vector<16x128xf32>
    %c0_43 = arith.constant 0 : index
    %c0_44 = arith.constant 0 : index
    %76 = vector.load %arg14[%c0_43, %c0_44] : memref<1x128xf32, #tpu.memory_space<vmem>>, vector<1x128xf32>
    %77 = vector.broadcast %76 : vector<1x128xf32> to vector<16x128xf32>
    %78 = arith.addf %75, %77 : vector<16x128xf32>
    %79 = arith.negf %78 : vector<16x128xf32>
    %80 = math.exp %79 : vector<16x128xf32>
    %cst_45 = arith.constant 1.000000e+00 : f32
    %81 = vector.broadcast %cst_45 : f32 to vector<16x128xf32>
    %82 = arith.addf %81, %80 : vector<16x128xf32>
    %83 = arith.divf %81, %82 : vector<16x128xf32>
    %84 = arith.subf %41, %70 : vector<16x128xf32>
    %85 = arith.mulf %83, %84 : vector<16x128xf32>
    %86 = arith.addf %70, %85 : vector<16x128xf32>
    %87 = vector.shape_cast %0 : vector<2x8x128xf32> to vector<16x128xf32>
    %c0_46 = arith.constant 0 : index
    %c0_47 = arith.constant 0 : index
    %88 = vector.load %arg15[%c0_46, %c0_47] : memref<128x128xf32, #tpu.memory_space<vmem>>, vector<128x128xf32>
    %cst_48 = arith.constant dense<0.000000e+00> : vector<16x128xf32>
    %89 = tpu.matmul %87, %88, %cst_48 {dimension_numbers = #tpu.dot_dimension_numbers<[1], [0], [0], [1], [0, 0, 1, 1], [], []>} : vector<16x128xf32>, vector<128x128xf32>, vector<16x128xf32> -> vector<16x128xf32>
    %c0_49 = arith.constant 0 : index
    %c0_50 = arith.constant 0 : index
    %90 = vector.load %arg16[%c0_49, %c0_50] : memref<128x128xf32, #tpu.memory_space<vmem>>, vector<128x128xf32>
    %cst_51 = arith.constant dense<0.000000e+00> : vector<16x128xf32>
    %91 = tpu.matmul %86, %90, %cst_51 {dimension_numbers = #tpu.dot_dimension_numbers<[1], [0], [0], [1], [0, 0, 1, 1], [], []>} : vector<16x128xf32>, vector<128x128xf32>, vector<16x128xf32> -> vector<16x128xf32>
    %92 = arith.addf %89, %91 : vector<16x128xf32>
    %c0_52 = arith.constant 0 : index
    %c0_53 = arith.constant 0 : index
    %93 = vector.load %arg17[%c0_52, %c0_53] : memref<1x128xf32, #tpu.memory_space<vmem>>, vector<1x128xf32>
    %94 = vector.broadcast %93 : vector<1x128xf32> to vector<16x128xf32>
    %95 = arith.addf %92, %94 : vector<16x128xf32>
    %cst_54 = arith.constant 0.000000e+00 : f32
    %96 = vector.broadcast %cst_54 : f32 to vector<16x128xf32>
    %97 = arith.maximumf %95, %96 : vector<16x128xf32>
    %98 = vector.shape_cast %97 : vector<16x128xf32> to vector<2x8x128xf32>
    %c0_55 = arith.constant 0 : index
    %c0_56 = arith.constant 0 : index
    %c0_57 = arith.constant 0 : index
    %99 = vector.load %arg18[%c0_55, %c0_56, %c0_57] : memref<2x8x128xf32, #tpu.memory_space<vmem>>, vector<2x8x128xf32>
    tpu.vector_store %arg18[%c0_55, %c0_56, %c0_57], %98 {strides = array<i32>} : memref<2x8x128xf32, #tpu.memory_space<vmem>>, vector<2x8x128xf32>,
    return
  }
  func.func @transform_0(%arg0: i32) -> (i32, i32, i32) {
    %c0_i32 = arith.constant 0 : i32
    %c0_i32_0 = arith.constant 0 : i32
    %c0_i32_1 = arith.constant 0 : i32
    return %arg0, %c0_i32, %c0_i32_0 : i32, i32, i32
  }
  func.func @transform_1(%arg0: i32) -> (i32, i32, i32) {
    %c0_i32 = arith.constant 0 : i32
    %c0_i32_0 = arith.constant 0 : i32
    %c0_i32_1 = arith.constant 0 : i32
    return %arg0, %c0_i32, %c0_i32_0 : i32, i32, i32
  }
  func.func @transform_2(%arg0: i32) -> (i32, i32, i32) {
    %c0_i32 = arith.constant 0 : i32
    %c0_i32_0 = arith.constant 0 : i32
    %c0_i32_1 = arith.constant 0 : i32
    return %arg0, %c0_i32, %c0_i32_0 : i32, i32, i32
  }
  func.func @transform_3(%arg0: i32) -> (i32, i32) {
    %c0_i32 = arith.constant 0 : i32
    %c0_i32_0 = arith.constant 0 : i32
    %c0_i32_1 = arith.constant 0 : i32
    return %c0_i32, %c0_i32_0 : i32, i32
  }
  func.func @transform_4(%arg0: i32) -> (i32, i32) {
    %c0_i32 = arith.constant 0 : i32
    %c0_i32_0 = arith.constant 0 : i32
    %c0_i32_1 = arith.constant 0 : i32
    return %c0_i32, %c0_i32_0 : i32, i32
  }
  func.func @transform_5(%arg0: i32) -> (i32, i32) {
    %c0_i32 = arith.constant 0 : i32
    %c0_i32_0 = arith.constant 0 : i32
    %c0_i32_1 = arith.constant 0 : i32
    return %c0_i32, %c0_i32_0 : i32, i32
  }
  func.func @transform_6(%arg0: i32) -> (i32, i32) {
    %c0_i32 = arith.constant 0 : i32
    %c0_i32_0 = arith.constant 0 : i32
    %c0_i32_1 = arith.constant 0 : i32
    return %c0_i32, %c0_i32_0 : i32, i32
  }
  func.func @transform_7(%arg0: i32) -> (i32, i32) {
    %c0_i32 = arith.constant 0 : i32
    %c0_i32_0 = arith.constant 0 : i32
    %c0_i32_1 = arith.constant 0 : i32
    return %c0_i32, %c0_i32_0 : i32, i32
  }
  func.func @transform_8(%arg0: i32) -> (i32, i32) {
    %c0_i32 = arith.constant 0 : i32
    %c0_i32_0 = arith.constant 0 : i32
    %c0_i32_1 = arith.constant 0 : i32
    return %c0_i32, %c0_i32_0 : i32, i32
  }
  func.func @transform_9(%arg0: i32) -> (i32, i32) {
    %c0_i32 = arith.constant 0 : i32
    %c0_i32_0 = arith.constant 0 : i32
    %c0_i32_1 = arith.constant 0 : i32
    return %c0_i32, %c0_i32_0 : i32, i32
  }
  func.func @transform_10(%arg0: i32) -> (i32, i32) {
    %c0_i32 = arith.constant 0 : i32
    %c0_i32_0 = arith.constant 0 : i32
    %c0_i32_1 = arith.constant 0 : i32
    return %c0_i32, %c0_i32_0 : i32, i32
  }
  func.func @transform_11(%arg0: i32) -> (i32, i32) {
    %c0_i32 = arith.constant 0 : i32
    %c0_i32_0 = arith.constant 0 : i32
    %c0_i32_1 = arith.constant 0 : i32
    return %c0_i32, %c0_i32_0 : i32, i32
  }
  func.func @transform_12(%arg0: i32) -> (i32, i32) {
    %c0_i32 = arith.constant 0 : i32
    %c0_i32_0 = arith.constant 0 : i32
    %c0_i32_1 = arith.constant 0 : i32
    return %c0_i32, %c0_i32_0 : i32, i32
  }
  func.func @transform_13(%arg0: i32) -> (i32, i32) {
    %c0_i32 = arith.constant 0 : i32
    %c0_i32_0 = arith.constant 0 : i32
    %c0_i32_1 = arith.constant 0 : i32
    return %c0_i32, %c0_i32_0 : i32, i32
  }
  func.func @transform_14(%arg0: i32) -> (i32, i32) {
    %c0_i32 = arith.constant 0 : i32
    %c0_i32_0 = arith.constant 0 : i32
    %c0_i32_1 = arith.constant 0 : i32
    return %c0_i32, %c0_i32_0 : i32, i32
  }
  func.func @transform_15(%arg0: i32) -> (i32, i32) {
    %c0_i32 = arith.constant 0 : i32
    %c0_i32_0 = arith.constant 0 : i32
    %c0_i32_1 = arith.constant 0 : i32
    return %c0_i32, %c0_i32_0 : i32, i32
  }
  func.func @transform_16(%arg0: i32) -> (i32, i32) {
    %c0_i32 = arith.constant 0 : i32
    %c0_i32_0 = arith.constant 0 : i32
    %c0_i32_1 = arith.constant 0 : i32
    return %c0_i32, %c0_i32_0 : i32, i32
  }
  func.func @transform_17(%arg0: i32) -> (i32, i32, i32) {
    %c0_i32 = arith.constant 0 : i32
    %c0_i32_0 = arith.constant 0 : i32
    %c0_i32_1 = arith.constant 0 : i32
    return %arg0, %c0_i32, %c0_i32_0 : i32, i32, i32
  }
}

</mosaic_0001>

<llo_original>
// kernel: tpu_custom_call.1
$region0: #{tpu_custom_call.1}
  #allocation0 [shape = 'u32[]', space=smem, size = 0x4, offset = 0x4, fixed_abs, tag = 'smem constant byte address 0x4 - core index']
  #allocation1 [shape = 'u32[72,128]{1,0:T(1,128)}', space=vmem, size = 0x9000, scoped, tag = 'internal scratch']
  %s0 = inlined_call_operand.hbm [shape: f32[2,8,128], index: 0, kind: input, shape index: {}]
  %s1 = inlined_call_operand.hbm [shape: f32[2,8,8], index: 1, kind: input, shape index: {}]
  %s2 = inlined_call_operand.hbm [shape: f32[2,8,8], index: 2, kind: input, shape index: {}]
  %s3 = inlined_call_operand.hbm [shape: f32[128,128], index: 3, kind: input, shape index: {}]
  %s4 = inlined_call_operand.vmem [shape: f32[1,128], index: 4, kind: input, shape index: {}]
  %s5 = inlined_call_operand.hbm [shape: f32[128,128], index: 5, kind: input, shape index: {}]
  %s6 = inlined_call_operand.vmem [shape: f32[1,128], index: 6, kind: input, shape index: {}]
  %s7 = inlined_call_operand.hbm [shape: f32[128,128], index: 7, kind: input, shape index: {}]
  %s8 = inlined_call_operand.vmem [shape: f32[1,128], index: 8, kind: input, shape index: {}]
  %s9 = inlined_call_operand.hbm [shape: f32[128,128], index: 9, kind: input, shape index: {}]
  %s10 = inlined_call_operand.vmem [shape: f32[1,128], index: 10, kind: input, shape index: {}]
  %s11 = inlined_call_operand.hbm [shape: f32[128,128], index: 11, kind: input, shape index: {}]
  %s12 = inlined_call_operand.hbm [shape: f32[128,128], index: 12, kind: input, shape index: {}]
  %s13 = inlined_call_operand.vmem [shape: f32[1,128], index: 13, kind: input, shape index: {}]
  %s14 = inlined_call_operand.hbm [shape: f32[128,128], index: 14, kind: input, shape index: {}]
  %s15 = inlined_call_operand.hbm [shape: f32[128,128], index: 15, kind: input, shape index: {}]
  %s16 = inlined_call_operand.vmem [shape: f32[1,128], index: 16, kind: input, shape index: {}]
  %s17 = inlined_call_operand.hbm [shape: f32[2,8,128], index: 17, kind: output, shape index: {}]
  %s18 = sld [smem:[#allocation0]]
  $region122: #{tpu_custom_call.1} parent=0
    _
  %s20 = ssub.s32 1, %s18
  %s21 = scalar_select 0, %s20, %s18
  $region1: #{tpu_custom_call.1} parent=0
    #allocation2 [shape = 'u8[8192]{0}', space=vmem, size = 0x2000, scoped, tag = 'input window, operand 0, single buffered']
    #allocation3 [shape = 's32[1]{0}', space=sflag, size = 0x4, scoped, tag = 'scoped memory for tpu_custom_call.1']
    #allocation4 [shape = 's32[1]{0}', space=sflag, size = 0x4, scoped, tag = 'scoped memory for tpu_custom_call.1']
    #allocation5 [shape = 'u8[8192]{0}', space=vmem, size = 0x2000, scoped, tag = 'input window, operand 1, single buffered']
    #allocation6 [shape = 's32[1]{0}', space=sflag, size = 0x4, scoped, tag = 'scoped memory for tpu_custom_call.1']
    #allocation7 [shape = 'u8[8192]{0}', space=vmem, size = 0x2000, scoped, tag = 'input window, operand 2, single buffered']
    #allocation8 [shape = 'u8[65536]{0}', space=vmem, size = 0x10000, scoped, tag = 'input window, operand 3, single buffered']
    #allocation9 [shape = 's32[1]{0}', space=sflag, size = 0x4, scoped, tag = 'scoped memory for tpu_custom_call.1']
    #allocation10 [shape = 'u8[65536]{0}', space=vmem, size = 0x10000, scoped, tag = 'input window, operand 5, single buffered']
    #allocation11 [shape = 'u8[65536]{0}', space=vmem, size = 0x10000, scoped, tag = 'input window, operand 7, single buffered']
    #allocation12 [shape = 's32[1]{0}', space=sflag, size = 0x4, scoped, tag = 'scoped memory for tpu_custom_call.1']
    #allocation13 [shape = 'u8[65536]{0}', space=vmem, size = 0x10000, scoped, tag = 'input window, operand 9, single buffered']
    #allocation14 [shape = 'u8[65536]{0}', space=vmem, size = 0x10000, scoped, tag = 'input window, operand 11, single buffered']
    #allocation15 [shape = 's32[1]{0}', space=sflag, size = 0x4, scoped, tag = 'scoped memory for tpu_custom_call.1']
    #allocation16 [shape = 'u8[65536]{0}', space=vmem, size = 0x10000, scoped, tag = 'input window, operand 12, single buffered']
    #allocation17 [shape = 'u8[65536]{0}', space=vmem, size = 0x10000, scoped, tag = 'input window, operand 14, single buffered']
    #allocation18 [shape = 's32[1]{0}', space=sflag, size = 0x4, scoped, tag = 'scoped memory for tpu_custom_call.1']
    #allocation19 [shape = 'u8[65536]{0}', space=vmem, size = 0x10000, scoped, tag = 'input window, operand 15, single buffered']
    #allocation20 [shape = 'u8[8192]{0}', space=vmem, size = 0x2000, scoped, tag = 'output window, operand 0, single buffered']
    %22 = vsyncpa [#allocation3], 0
    %23 = vsyncpa [#allocation6], 0
    %24 = vsyncpa [#allocation9], 0
    %25 = vsyncpa [#allocation12], 0
    %26 = vsyncpa [#allocation15], 0
    %27 = vsyncpa [#allocation18], 0
    %28 = vsyncpa [#allocation4], 0
    // Predicated region
    $region2: #{tpu_custom_call.1} parent=1 // pred_check
      _
    $region3: #{tpu_custom_call.1} parent=1 // pred_check_branch
      %30 = sbr.rel (0) target = $region5
    $region4: #{tpu_custom_call.1} parent=1 // pred_region
      %32 = vsyncadd [#allocation3], 0
      %s33 = sshll.u32 %s0, 4
      %s34 = int_to_ptr.hbm [resolvable:$true] %s33
      %s35 = sshll.u32 [#allocation2], 4
      %s36 = int_to_ptr.vmem [resolvable:$true] %s35
      %41 = dma.hbm_to_vmem [thread:$0]  %s34, 256, %s36, [#allocation3], 128, 128, 8
    $region5: #{tpu_custom_call.1} parent=1 // pred_fallthru
      _
    // Predicated region
    $region6: #{tpu_custom_call.1} parent=1 // pred_check
      _
    $region7: #{tpu_custom_call.1} parent=1 // pred_check_branch
      %43 = sbr.rel (0) target = $region9
    $region8: #{tpu_custom_call.1} parent=1 // pred_region
      %45 = vsyncadd [#allocation6], 0
      %s46 = sshll.u32 %s1, 4
      %s47 = int_to_ptr.hbm [resolvable:$true] %s46
      %s48 = sshll.u32 [#allocation5], 4
      %s49 = int_to_ptr.vmem [resolvable:$true] %s48
      %54 = dma.hbm_to_vmem [thread:$0]  %s47, 256, %s49, [#allocation6], 128, 128, 8
    $region9: #{tpu_custom_call.1} parent=1 // pred_fallthru
      _
    // Predicated region
    $region10: #{tpu_custom_call.1} parent=1 // pred_check
      _
    $region11: #{tpu_custom_call.1} parent=1 // pred_check_branch
      %56 = sbr.rel (0) target = $region13
    $region12: #{tpu_custom_call.1} parent=1 // pred_region
      %58 = vsyncadd [#allocation6], 0
      %s59 = sshll.u32 %s2, 4
      %s60 = int_to_ptr.hbm [resolvable:$true] %s59
      %s61 = sshll.u32 [#allocation7], 4
      %s62 = int_to_ptr.vmem [resolvable:$true] %s61
      %67 = dma.hbm_to_vmem [thread:$0]  %s60, 256, %s62, [#allocation6], 128, 128, 8
    $region13: #{tpu_custom_call.1} parent=1 // pred_fallthru
      _
    // Predicated region
    $region14: #{tpu_custom_call.1} parent=1 // pred_check
      _
    $region15: #{tpu_custom_call.1} parent=1 // pred_check_branch
      %69 = sbr.rel (0) target = $region17
    $region16: #{tpu_custom_call.1} parent=1 // pred_region
      %71 = vsyncadd [#allocation9], 0
      %s72 = sshll.u32 %s3, 4
      %s73 = int_to_ptr.hbm [resolvable:$true] %s72
      %s74 = sshll.u32 [#allocation8], 4
      %s75 = int_to_ptr.vmem [resolvable:$true] %s74
      %80 = dma.hbm_to_vmem [thread:$0]  %s73, 2048, %s75, [#allocation9], 128, 128, 8
    $region17: #{tpu_custom_call.1} parent=1 // pred_fallthru
      _
    // Predicated region
    $region18: #{tpu_custom_call.1} parent=1 // pred_check
      _
    $region19: #{tpu_custom_call.1} parent=1 // pred_check_branch
      %82 = sbr.rel (0) target = $region21
    $region20: #{tpu_custom_call.1} parent=1 // pred_region
      _
    $region21: #{tpu_custom_call.1} parent=1 // pred_fallthru
      _
    // Predicated region
    $region22: #{tpu_custom_call.1} parent=1 // pred_check
      _
    $region23: #{tpu_custom_call.1} parent=1 // pred_check_branch
      %84 = sbr.rel (0) target = $region25
    $region24: #{tpu_custom_call.1} parent=1 // pred_region
      %86 = vsyncadd [#allocation9], 0
      %s87 = sshll.u32 %s5, 4
      %s88 = int_to_ptr.hbm [resolvable:$true] %s87
      %s89 = sshll.u32 [#allocation10], 4
      %s90 = int_to_ptr.vmem [resolvable:$true] %s89
      %95 = dma.hbm_to_vmem [thread:$0]  %s88, 2048, %s90, [#allocation9], 128, 128, 8
    $region25: #{tpu_custom_call.1} parent=1 // pred_fallthru
      _
    // Predicated region
    $region26: #{tpu_custom_call.1} parent=1 // pred_check
      _
    $region27: #{tpu_custom_call.1} parent=1 // pred_check_branch
      %97 = sbr.rel (0) target = $region29
    $region28: #{tpu_custom_call.1} parent=1 // pred_region
      _
    $region29: #{tpu_custom_call.1} parent=1 // pred_fallthru
      _
    // Predicated region
    $region30: #{tpu_custom_call.1} parent=1 // pred_check
      _
    $region31: #{tpu_custom_call.1} parent=1 // pred_check_branch
      %99 = sbr.rel (0) target = $region33
    $region32: #{tpu_custom_call.1} parent=1 // pred_region
      %101 = vsyncadd [#allocation12], 0
      %s102 = sshll.u32 %s7, 4
      %s103 = int_to_ptr.hbm [resolvable:$true] %s102
      %s104 = sshll.u32 [#allocation11], 4
      %s105 = int_to_ptr.vmem [resolvable:$true] %s104
      %110 = dma.hbm_to_vmem [thread:$0]  %s103, 2048, %s105, [#allocation12], 128, 128, 8
    $region33: #{tpu_custom_call.1} parent=1 // pred_fallthru
      _
    // Predicated region
    $region34: #{tpu_custom_call.1} parent=1 // pred_check
      _
    $region35: #{tpu_custom_call.1} parent=1 // pred_check_branch
      %112 = sbr.rel (0) target = $region37
    $region36: #{tpu_custom_call.1} parent=1 // pred_region
      _
    $region37: #{tpu_custom_call.1} parent=1 // pred_fallthru
      _
    // Predicated region
    $region38: #{tpu_custom_call.1} parent=1 // pred_check
      _
    $region39: #{tpu_custom_call.1} parent=1 // pred_check_branch
      %114 = sbr.rel (0) target = $region41
    $region40: #{tpu_custom_call.1} parent=1 // pred_region
      %116 = vsyncadd [#allocation12], 0
      %s117 = sshll.u32 %s9, 4
      %s118 = int_to_ptr.hbm [resolvable:$true] %s117
      %s119 = sshll.u32 [#allocation13], 4
      %s120 = int_to_ptr.vmem [resolvable:$true] %s119
      %125 = dma.hbm_to_vmem [thread:$0]  %s118, 2048, %s120, [#allocation12], 128, 128, 8
    $region41: #{tpu_custom_call.1} parent=1 // pred_fallthru
      _
    // Predicated region
    $region42: #{tpu_custom_call.1} parent=1 // pred_check
      _
    $region43: #{tpu_custom_call.1} parent=1 // pred_check_branch
      %127 = sbr.rel (0) target = $region45
    $region44: #{tpu_custom_call.1} parent=1 // pred_region
      _
    $region45: #{tpu_custom_call.1} parent=1 // pred_fallthru
      _
    // Predicated region
    $region46: #{tpu_custom_call.1} parent=1 // pred_check
      _
    $region47: #{tpu_custom_call.1} parent=1 // pred_check_branch
      %129 = sbr.rel (0) target = $region49
    $region48: #{tpu_custom_call.1} parent=1 // pred_region
      %131 = vsyncadd [#allocation15], 0
      %s132 = sshll.u32 %s11, 4
      %s133 = int_to_ptr.hbm [resolvable:$true] %s132
      %s134 = sshll.u32 [#allocation14], 4
      %s135 = int_to_ptr.vmem [resolvable:$true] %s134
      %140 = dma.hbm_to_vmem [thread:$0]  %s133, 2048, %s135, [#allocation15], 128, 128, 8
    $region49: #{tpu_custom_call.1} parent=1 // pred_fallthru
      _
    // Predicated region
    $region50: #{tpu_custom_call.1} parent=1 // pred_check
      _
    $region51: #{tpu_custom_call.1} parent=1 // pred_check_branch
      %142 = sbr.rel (0) target = $region53
    $region52: #{tpu_custom_call.1} parent=1 // pred_region
      %144 = vsyncadd [#allocation15], 0
      %s145 = sshll.u32 %s12, 4
      %s146 = int_to_ptr.hbm [resolvable:$true] %s145
      %s147 = sshll.u32 [#allocation16], 4
      %s148 = int_to_ptr.vmem [resolvable:$true] %s147
      %153 = dma.hbm_to_vmem [thread:$0]  %s146, 2048, %s148, [#allocation15], 128, 128, 8
    $region53: #{tpu_custom_call.1} parent=1 // pred_fallthru
      _
    // Predicated region
    $region54: #{tpu_custom_call.1} parent=1 // pred_check
      _
    $region55: #{tpu_custom_call.1} parent=1 // pred_check_branch
      %155 = sbr.rel (0) target = $region57
    $region56: #{tpu_custom_call.1} parent=1 // pred_region
      _
    $region57: #{tpu_custom_call.1} parent=1 // pred_fallthru
      _
    // Predicated region
    $region58: #{tpu_custom_call.1} parent=1 // pred_check
      _
    $region59: #{tpu_custom_call.1} parent=1 // pred_check_branch
      %157 = sbr.rel (0) target = $region61
    $region60: #{tpu_custom_call.1} parent=1 // pred_region
      %159 = vsyncadd [#allocation18], 0
      %s160 = sshll.u32 %s14, 4
      %s161 = int_to_ptr.hbm [resolvable:$true] %s160
      %s162 = sshll.u32 [#allocation17], 4
      %s163 = int_to_ptr.vmem [resolvable:$true] %s162
      %168 = dma.hbm_to_vmem [thread:$0]  %s161, 2048, %s163, [#allocation18], 128, 128, 8
    $region61: #{tpu_custom_call.1} parent=1 // pred_fallthru
      _
    // Predicated region
    $region62: #{tpu_custom_call.1} parent=1 // pred_check
      _
    $region63: #{tpu_custom_call.1} parent=1 // pred_check_branch
      %170 = sbr.rel (0) target = $region65
    $region64: #{tpu_custom_call.1} parent=1 // pred_region
      %172 = vsyncadd [#allocation18], 0
      %s173 = sshll.u32 %s15, 4
      %s174 = int_to_ptr.hbm [resolvable:$true] %s173
      %s175 = sshll.u32 [#allocation19], 4
      %s176 = int_to_ptr.vmem [resolvable:$true] %s175
      %181 = dma.hbm_to_vmem [thread:$0]  %s174, 2048, %s176, [#allocation18], 128, 128, 8
    $region65: #{tpu_custom_call.1} parent=1 // pred_fallthru
      _
    // Predicated region
    $region66: #{tpu_custom_call.1} parent=1 // pred_check
      _
    $region67: #{tpu_custom_call.1} parent=1 // pred_check_branch
      %183 = sbr.rel (0) target = $region69
    $region68: #{tpu_custom_call.1} parent=1 // pred_region
      _
    $region69: #{tpu_custom_call.1} parent=1 // pred_fallthru
      _
    // Predicated region
    $region70: #{tpu_custom_call.1} parent=1 // pred_check
      _
    $region71: #{tpu_custom_call.1} parent=1 // pred_check_branch
      %185 = sbr.rel (0) target = $region73
    $region72: #{tpu_custom_call.1} parent=1 // pred_region
      %187 = dma.done [#allocation3], 256
    $region73: #{tpu_custom_call.1} parent=1 // pred_fallthru
      _
    // Predicated region
    $region74: #{tpu_custom_call.1} parent=1 // pred_check
      _
    $region75: #{tpu_custom_call.1} parent=1 // pred_check_branch
      %189 = sbr.rel (0) target = $region77
    $region76: #{tpu_custom_call.1} parent=1 // pred_region
      %191 = dma.done [#allocation6], 256
    $region77: #{tpu_custom_call.1} parent=1 // pred_fallthru
      _
    // Predicated region
    $region78: #{tpu_custom_call.1} parent=1 // pred_check
      _
    $region79: #{tpu_custom_call.1} parent=1 // pred_check_branch
      %193 = sbr.rel (0) target = $region81
    $region80: #{tpu_custom_call.1} parent=1 // pred_region
      %195 = dma.done [#allocation6], 256
    $region81: #{tpu_custom_call.1} parent=1 // pred_fallthru
      _
    // Predicated region
    $region82: #{tpu_custom_call.1} parent=1 // pred_check
      _
    $region83: #{tpu_custom_call.1} parent=1 // pred_check_branch
      %197 = sbr.rel (0) target = $region85
    $region84: #{tpu_custom_call.1} parent=1 // pred_region
      %199 = dma.done [#allocation9], 2048
    $region85: #{tpu_custom_call.1} parent=1 // pred_fallthru
      _
    // Predicated region
    $region86: #{tpu_custom_call.1} parent=1 // pred_check
      _
    $region87: #{tpu_custom_call.1} parent=1 // pred_check_branch
      %201 = sbr.rel (0) target = $region89
    $region88: #{tpu_custom_call.1} parent=1 // pred_region
      %203 = dma.done [#allocation9], 2048
    $region89: #{tpu_custom_call.1} parent=1 // pred_fallthru
      _
    // Predicated region
    $region90: #{tpu_custom_call.1} parent=1 // pred_check
      _
    $region91: #{tpu_custom_call.1} parent=1 // pred_check_branch
      %205 = sbr.rel (0) target = $region93
    $region92: #{tpu_custom_call.1} parent=1 // pred_region
      %207 = dma.done [#allocation12], 2048
    $region93: #{tpu_custom_call.1} parent=1 // pred_fallthru
      _
    // Predicated region
    $region94: #{tpu_custom_call.1} parent=1 // pred_check
      _
    $region95: #{tpu_custom_call.1} parent=1 // pred_check_branch
      %209 = sbr.rel (0) target = $region97
    $region96: #{tpu_custom_call.1} parent=1 // pred_region
      %211 = dma.done [#allocation12], 2048
    $region97: #{tpu_custom_call.1} parent=1 // pred_fallthru
      _
    // Predicated region
    $region98: #{tpu_custom_call.1} parent=1 // pred_check
      _
    $region99: #{tpu_custom_call.1} parent=1 // pred_check_branch
      %213 = sbr.rel (0) target = $region101
    $region100: #{tpu_custom_call.1} parent=1 // pred_region
      %215 = dma.done [#allocation15], 2048
    $region101: #{tpu_custom_call.1} parent=1 // pred_fallthru
      _
    // Predicated region
    $region102: #{tpu_custom_call.1} parent=1 // pred_check
      _
    $region103: #{tpu_custom_call.1} parent=1 // pred_check_branch
      %217 = sbr.rel (0) target = $region105
    $region104: #{tpu_custom_call.1} parent=1 // pred_region
      %219 = dma.done [#allocation15], 2048
    $region105: #{tpu_custom_call.1} parent=1 // pred_fallthru
      _
    // Predicated region
    $region106: #{tpu_custom_call.1} parent=1 // pred_check
      _
    $region107: #{tpu_custom_call.1} parent=1 // pred_check_branch
      %221 = sbr.rel (0) target = $region109
    $region108: #{tpu_custom_call.1} parent=1 // pred_region
      %223 = dma.done [#allocation18], 2048
    $region109: #{tpu_custom_call.1} parent=1 // pred_fallthru
      _
    // Predicated region
    $region110: #{tpu_custom_call.1} parent=1 // pred_check
      _
    $region111: #{tpu_custom_call.1} parent=1 // pred_check_branch
      %225 = sbr.rel (0) target = $region113
    $region112: #{tpu_custom_call.1} parent=1 // pred_region
      %227 = dma.done [#allocation18], 2048
    $region113: #{tpu_custom_call.1} parent=1 // pred_fallthru
      _
    %v228 = vld [vmem:[#allocation2] sm:$0xff]
    %v229 = vld [vmem:[#allocation2 + $0x8] sm:$0xff]
    %v230 = vld [vmem:[#allocation5] sm:$0xff]
    %v231 = vld [vmem:[#allocation5 + $0x8] sm:$0xff]
    %v232 = vld [vmem:[#allocation7] sm:$0xff]
    %v233 = vld [vmem:[#allocation7 + $0x8] sm:$0xff]
    %vm234 = vcmask 64512
    %v235 = vsel %vm234, %v230, 0.0
    %236 = vadd.xlane.f32.xlu0 %v235
    %v237 = vpop.xlane.xlu0 %236
    %v238 = vsel %vm234, %v231, 0.0
    %239 = vadd.xlane.f32.xlu0 %v238
    %v240 = vpop.xlane.xlu0 %239
    %v241 = vrcp.pop %v237
    %v242 = vrcp.pop %v240
    %v243 = vmul.f32 %v230, %v241
    %v244 = vmul.f32 %v231, %v242
    %v245 = vsel %vm234, %v232, 0.0
    %246 = vadd.xlane.f32.xlu0 %v245
    %v247 = vpop.xlane.xlu0 %246
    %v248 = vsel %vm234, %v233, 0.0
    %249 = vadd.xlane.f32.xlu0 %v248
    %v250 = vpop.xlane.xlu0 %249
    %v251 = vrcp.pop %v247
    %v252 = vrcp.pop %v250
    %v253 = vmul.f32 %v232, %v251
    %v254 = vmul.f32 %v233, %v252
    %v255 = vperm.slane %v243, 0
    %v256 = vlaneseq
    %v257 = vshrl.u32 %v256, 7
    %259 = vset.pattern.permute.xlu0 %v257
    %260 = vperm.xlu0 %259, %v255
    %v261 = vpop.permute.xlu0 %260
    %v262 = vperm.slane %v243, 1
    %v263 = vlaneseq
    %v264 = vshrl.u32 %v263, 7
    %266 = vset.pattern.permute.xlu0 %v264
    %267 = vperm.xlu0 %266, %v262
    %v268 = vpop.permute.xlu0 %267
    %v269 = vperm.slane %v243, 2
    %v270 = vlaneseq
    %v271 = vshrl.u32 %v270, 7
    %273 = vset.pattern.permute.xlu0 %v271
    %274 = vperm.xlu0 %273, %v269
    %v275 = vpop.permute.xlu0 %274
    %v276 = vperm.slane %v243, 3
    %v277 = vlaneseq
    %v278 = vshrl.u32 %v277, 7
    %280 = vset.pattern.permute.xlu0 %v278
    %281 = vperm.xlu0 %280, %v276
    %v282 = vpop.permute.xlu0 %281
    %v283 = vperm.slane %v243, 4
    %v284 = vlaneseq
    %v285 = vshrl.u32 %v284, 7
    %287 = vset.pattern.permute.xlu0 %v285
    %288 = vperm.xlu0 %287, %v283
    %v289 = vpop.permute.xlu0 %288
    %v290 = vperm.slane %v243, 5
    %v291 = vlaneseq
    %v292 = vshrl.u32 %v291, 7
    %294 = vset.pattern.permute.xlu0 %v292
    %295 = vperm.xlu0 %294, %v290
    %v296 = vpop.permute.xlu0 %295
    %v297 = vperm.slane %v243, 6
    %v298 = vlaneseq
    %v299 = vshrl.u32 %v298, 7
    %301 = vset.pattern.permute.xlu0 %v299
    %302 = vperm.xlu0 %301, %v297
    %v303 = vpop.permute.xlu0 %302
    %v304 = vperm.slane %v243, 7
    %v305 = vlaneseq
    %v306 = vshrl.u32 %v305, 7
    %308 = vset.pattern.permute.xlu0 %v306
    %309 = vperm.xlu0 %308, %v304
    %v310 = vpop.permute.xlu0 %309
    %v311 = vperm.slane %v244, 0
    %v312 = vlaneseq
    %v313 = vshrl.u32 %v312, 7
    %315 = vset.pattern.permute.xlu0 %v313
    %316 = vperm.xlu0 %315, %v311
    %v317 = vpop.permute.xlu0 %316
    %v318 = vperm.slane %v244, 1
    %v319 = vlaneseq
    %v320 = vshrl.u32 %v319, 7
    %322 = vset.pattern.permute.xlu0 %v320
    %323 = vperm.xlu0 %322, %v318
    %v324 = vpop.permute.xlu0 %323
    %v325 = vperm.slane %v244, 2
    %v326 = vlaneseq
    %v327 = vshrl.u32 %v326, 7
    %329 = vset.pattern.permute.xlu0 %v327
    %330 = vperm.xlu0 %329, %v325
    %v331 = vpop.permute.xlu0 %330
    %v332 = vperm.slane %v244, 3
    %v333 = vlaneseq
    %v334 = vshrl.u32 %v333, 7
    %336 = vset.pattern.permute.xlu0 %v334
    %337 = vperm.xlu0 %336, %v332
    %v338 = vpop.permute.xlu0 %337
    %v339 = vperm.slane %v244, 4
    %v340 = vlaneseq
    %v341 = vshrl.u32 %v340, 7
    %343 = vset.pattern.permute.xlu0 %v341
    %344 = vperm.xlu0 %343, %v339
    %v345 = vpop.permute.xlu0 %344
    %v346 = vperm.slane %v244, 5
    %v347 = vlaneseq
    %v348 = vshrl.u32 %v347, 7
    %350 = vset.pattern.permute.xlu0 %v348
    %351 = vperm.xlu0 %350, %v346
    %v352 = vpop.permute.xlu0 %351
    %v353 = vperm.slane %v244, 6
    %v354 = vlaneseq
    %v355 = vshrl.u32 %v354, 7
    %357 = vset.pattern.permute.xlu0 %v355
    %358 = vperm.xlu0 %357, %v353
    %v359 = vpop.permute.xlu0 %358
    %v360 = vperm.slane %v244, 7
    %v361 = vlaneseq
    %v362 = vshrl.u32 %v361, 7
    %364 = vset.pattern.permute.xlu0 %v362
    %365 = vperm.xlu0 %364, %v360
    %v366 = vpop.permute.xlu0 %365
    %v367 = vmul.f32 %v261, %v228
    %v368 = vmul.f32 %v268, %v228
    %v369 = vmul.f32 %v275, %v228
    %v370 = vmul.f32 %v282, %v228
    %v371 = vmul.f32 %v289, %v228
    %v372 = vmul.f32 %v296, %v228
    %v373 = vmul.f32 %v303, %v228
    %v374 = vmul.f32 %v310, %v228
    %v375 = vmul.f32 %v317, %v229
    %v376 = vmul.f32 %v324, %v229
    %v377 = vmul.f32 %v331, %v229
    %v378 = vmul.f32 %v338, %v229
    %v379 = vmul.f32 %v345, %v229
    %v380 = vmul.f32 %v352, %v229
    %v381 = vmul.f32 %v359, %v229
    %v382 = vmul.f32 %v366, %v229
    %v383 = vrot.slane %v367, 4
    %v384 = vadd.f32 %v367, %v383
    %v385 = vrot.slane %v384, 2
    %v386 = vadd.f32 %v384, %v385
    %v387 = vrot.slane %v386, 1
    %v388 = vadd.f32 %v386, %v387
    %v389 = vrot.slane %v368, 4
    %v390 = vadd.f32 %v368, %v389
    %v391 = vrot.slane %v390, 2
    %v392 = vadd.f32 %v390, %v391
    %v393 = vrot.slane %v392, 1
    %v394 = vadd.f32 %v392, %v393
    %v395 = vrot.slane %v369, 4
    %v396 = vadd.f32 %v369, %v395
    %v397 = vrot.slane %v396, 2
    %v398 = vadd.f32 %v396, %v397
    %v399 = vrot.slane %v398, 1
    %v400 = vadd.f32 %v398, %v399
    %v401 = vrot.slane %v370, 4
    %v402 = vadd.f32 %v370, %v401
    %v403 = vrot.slane %v402, 2
    %v404 = vadd.f32 %v402, %v403
    %v405 = vrot.slane %v404, 1
    %v406 = vadd.f32 %v404, %v405
    %v407 = vrot.slane %v371, 4
    %v408 = vadd.f32 %v371, %v407
    %v409 = vrot.slane %v408, 2
    %v410 = vadd.f32 %v408, %v409
    %v411 = vrot.slane %v410, 1
    %v412 = vadd.f32 %v410, %v411
    %v413 = vrot.slane %v372, 4
    %v414 = vadd.f32 %v372, %v413
    %v415 = vrot.slane %v414, 2
    %v416 = vadd.f32 %v414, %v415
    %v417 = vrot.slane %v416, 1
    %v418 = vadd.f32 %v416, %v417
    %v419 = vrot.slane %v373, 4
    %v420 = vadd.f32 %v373, %v419
    %v421 = vrot.slane %v420, 2
    %v422 = vadd.f32 %v420, %v421
    %v423 = vrot.slane %v422, 1
    %v424 = vadd.f32 %v422, %v423
    %v425 = vrot.slane %v374, 4
    %v426 = vadd.f32 %v374, %v425
    %v427 = vrot.slane %v426, 2
    %v428 = vadd.f32 %v426, %v427
    %v429 = vrot.slane %v428, 1
    %v430 = vadd.f32 %v428, %v429
    %v431 = vrot.slane %v375, 4
    %v432 = vadd.f32 %v375, %v431
    %v433 = vrot.slane %v432, 2
    %v434 = vadd.f32 %v432, %v433
    %v435 = vrot.slane %v434, 1
    %v436 = vadd.f32 %v434, %v435
    %v437 = vrot.slane %v376, 4
    %v438 = vadd.f32 %v376, %v437
    %v439 = vrot.slane %v438, 2
    %v440 = vadd.f32 %v438, %v439
    %v441 = vrot.slane %v440, 1
    %v442 = vadd.f32 %v440, %v441
    %v443 = vrot.slane %v377, 4
    %v444 = vadd.f32 %v377, %v443
    %v445 = vrot.slane %v444, 2
    %v446 = vadd.f32 %v444, %v445
    %v447 = vrot.slane %v446, 1
    %v448 = vadd.f32 %v446, %v447
    %v449 = vrot.slane %v378, 4
    %v450 = vadd.f32 %v378, %v449
    %v451 = vrot.slane %v450, 2
    %v452 = vadd.f32 %v450, %v451
    %v453 = vrot.slane %v452, 1
    %v454 = vadd.f32 %v452, %v453
    %v455 = vrot.slane %v379, 4
    %v456 = vadd.f32 %v379, %v455
    %v457 = vrot.slane %v456, 2
    %v458 = vadd.f32 %v456, %v457
    %v459 = vrot.slane %v458, 1
    %v460 = vadd.f32 %v458, %v459
    %v461 = vrot.slane %v380, 4
    %v462 = vadd.f32 %v380, %v461
    %v463 = vrot.slane %v462, 2
    %v464 = vadd.f32 %v462, %v463
    %v465 = vrot.slane %v464, 1
    %v466 = vadd.f32 %v464, %v465
    %v467 = vrot.slane %v381, 4
    %v468 = vadd.f32 %v381, %v467
    %v469 = vrot.slane %v468, 2
    %v470 = vadd.f32 %v468, %v469
    %v471 = vrot.slane %v470, 1
    %v472 = vadd.f32 %v470, %v471
    %v473 = vrot.slane %v382, 4
    %v474 = vadd.f32 %v382, %v473
    %v475 = vrot.slane %v474, 2
    %v476 = vadd.f32 %v474, %v475
    %v477 = vrot.slane %v476, 1
    %v478 = vadd.f32 %v476, %v477
    %v479 = vld [vmem:[#allocation8] sm:$0xff]
    %v480 = vld [vmem:[#allocation8 + $0x8] sm:$0xff]
    %v481 = vld [vmem:[#allocation8 + $0x10] sm:$0xff]
    %v482 = vld [vmem:[#allocation8 + $0x18] sm:$0xff]
    %v483 = vld [vmem:[#allocation8 + $0x20] sm:$0xff]
    %v484 = vld [vmem:[#allocation8 + $0x28] sm:$0xff]
    %v485 = vld [vmem:[#allocation8 + $0x30] sm:$0xff]
    %v486 = vld [vmem:[#allocation8 + $0x38] sm:$0xff]
    %v487 = vld [vmem:[#allocation8 + $0x40] sm:$0xff]
    %v488 = vld [vmem:[#allocation8 + $0x48] sm:$0xff]
    %v489 = vld [vmem:[#allocation8 + $0x50] sm:$0xff]
    %v490 = vld [vmem:[#allocation8 + $0x58] sm:$0xff]
    %v491 = vld [vmem:[#allocation8 + $0x60] sm:$0xff]
    %v492 = vld [vmem:[#allocation8 + $0x68] sm:$0xff]
    %v493 = vld [vmem:[#allocation8 + $0x70] sm:$0xff]
    %v494 = vld [vmem:[#allocation8 + $0x78] sm:$0xff]
    %v495 = vld [vmem:[%s4] sm:$0x1]
    %v497 = vperm.slane %v495, 0
    %vm515 = vcmask 1041409
    %v516 = vsel %vm515, %v394, %v388
    %vm517 = vcmask 1042434
    %v518 = vsel %vm517, %v400, %v516
    %vm519 = vcmask 1043459
    %v520 = vsel %vm519, %v406, %v518
    %vm521 = vcmask 1044484
    %v522 = vsel %vm521, %v412, %v520
    %vm523 = vcmask 1045509
    %v524 = vsel %vm523, %v418, %v522
    %vm525 = vcmask 1046534
    %v526 = vsel %vm525, %v424, %v524
    %vm527 = vcmask 1047559
    %v528 = vsel %vm527, %v430, %v526
    %v529 = vsel %vm515, %v442, %v436
    %v530 = vsel %vm517, %v448, %v529
    %v531 = vsel %vm519, %v454, %v530
    %v532 = vsel %vm521, %v460, %v531
    %v533 = vsel %vm523, %v466, %v532
    %v534 = vsel %vm525, %v472, %v533
    %v535 = vsel %vm527, %v478, %v534
    %538 = vmatpush.msra.mxu0 %v494
    %539 = vmatpush.msra.mxu0 %v493
    %540 = vmatpush.msra.mxu0 %v492
    %541 = vmatpush.msra.mxu0 %v491
    %542 = vmatpush.msra.mxu0 %v490
    %543 = vmatpush.msra.mxu0 %v489
    %544 = vmatpush.msra.mxu0 %v488
    %545 = vmatpush.msra.mxu0 %v487
    %546 = vmatpush.msra.mxu0 %v486
    %547 = vmatpush.msra.mxu0 %v485
    %548 = vmatpush.msra.mxu0 %v484
    %549 = vmatpush.msra.mxu0 %v483
    %550 = vmatpush.msra.mxu0 %v482
    %551 = vmatpush.msra.mxu0 %v481
    %552 = vmatpush.msra.mxu0 %v480
    %553 = vmatpush.msra.mxu0 %v479
    %554 = vmatmul.f32.gmra.mxu0 %v528
    %v555 = vpop.f32.mrf.mxu0
    %v556 = vadd.f32 %v497, %v555
    %557 = vmatmul.f32.gmra.mxu0 %v535
    %v558 = vpop.f32.mrf.mxu0
    %v559 = vadd.f32 %v497, %v558
    %560 = vdwg.mxu0
    %v561 = vmax.f32 %v556, 0.0
    %v562 = vmax.f32 %v559, 0.0
    %v563 = vmul.f32 %v261, %v561
    %v564 = vmul.f32 %v268, %v561
    %v565 = vmul.f32 %v275, %v561
    %v566 = vmul.f32 %v282, %v561
    %v567 = vmul.f32 %v289, %v561
    %v568 = vmul.f32 %v296, %v561
    %v569 = vmul.f32 %v303, %v561
    %v570 = vmul.f32 %v310, %v561
    %v571 = vmul.f32 %v317, %v562
    %v572 = vmul.f32 %v324, %v562
    %v573 = vmul.f32 %v331, %v562
    %v574 = vmul.f32 %v338, %v562
    %v575 = vmul.f32 %v345, %v562
    %v576 = vmul.f32 %v352, %v562
    %v577 = vmul.f32 %v359, %v562
    %v578 = vmul.f32 %v366, %v562
    %v579 = vrot.slane %v563, 4
    %v580 = vadd.f32 %v563, %v579
    %v581 = vrot.slane %v580, 2
    %v582 = vadd.f32 %v580, %v581
    %v583 = vrot.slane %v582, 1
    %v584 = vadd.f32 %v582, %v583
    %v585 = vrot.slane %v564, 4
    %v586 = vadd.f32 %v564, %v585
    %v587 = vrot.slane %v586, 2
    %v588 = vadd.f32 %v586, %v587
    %v589 = vrot.slane %v588, 1
    %v590 = vadd.f32 %v588, %v589
    %v591 = vrot.slane %v565, 4
    %v592 = vadd.f32 %v565, %v591
    %v593 = vrot.slane %v592, 2
    %v594 = vadd.f32 %v592, %v593
    %v595 = vrot.slane %v594, 1
    %v596 = vadd.f32 %v594, %v595
    %v597 = vrot.slane %v566, 4
    %v598 = vadd.f32 %v566, %v597
    %v599 = vrot.slane %v598, 2
    %v600 = vadd.f32 %v598, %v599
    %v601 = vrot.slane %v600, 1
    %v602 = vadd.f32 %v600, %v601
    %v603 = vrot.slane %v567, 4
    %v604 = vadd.f32 %v567, %v603
    %v605 = vrot.slane %v604, 2
    %v606 = vadd.f32 %v604, %v605
    %v607 = vrot.slane %v606, 1
    %v608 = vadd.f32 %v606, %v607
    %v609 = vrot.slane %v568, 4
    %v610 = vadd.f32 %v568, %v609
    %v611 = vrot.slane %v610, 2
    %v612 = vadd.f32 %v610, %v611
    %v613 = vrot.slane %v612, 1
    %v614 = vadd.f32 %v612, %v613
    %v615 = vrot.slane %v569, 4
    %v616 = vadd.f32 %v569, %v615
    %v617 = vrot.slane %v616, 2
    %v618 = vadd.f32 %v616, %v617
    %v619 = vrot.slane %v618, 1
    %v620 = vadd.f32 %v618, %v619
    %v621 = vrot.slane %v570, 4
    %v622 = vadd.f32 %v570, %v621
    %v623 = vrot.slane %v622, 2
    %v624 = vadd.f32 %v622, %v623
    %v625 = vrot.slane %v624, 1
    %v626 = vadd.f32 %v624, %v625
    %v627 = vrot.slane %v571, 4
    %v628 = vadd.f32 %v571, %v627
    %v629 = vrot.slane %v628, 2
    %v630 = vadd.f32 %v628, %v629
    %v631 = vrot.slane %v630, 1
    %v632 = vadd.f32 %v630, %v631
    %v633 = vrot.slane %v572, 4
    %v634 = vadd.f32 %v572, %v633
    %v635 = vrot.slane %v634, 2
    %v636 = vadd.f32 %v634, %v635
    %v637 = vrot.slane %v636, 1
    %v638 = vadd.f32 %v636, %v637
    %v639 = vrot.slane %v573, 4
    %v640 = vadd.f32 %v573, %v639
    %v641 = vrot.slane %v640, 2
    %v642 = vadd.f32 %v640, %v641
    %v643 = vrot.slane %v642, 1
    %v644 = vadd.f32 %v642, %v643
    %v645 = vrot.slane %v574, 4
    %v646 = vadd.f32 %v574, %v645
    %v647 = vrot.slane %v646, 2
    %v648 = vadd.f32 %v646, %v647
    %v649 = vrot.slane %v648, 1
    %v650 = vadd.f32 %v648, %v649
    %v651 = vrot.slane %v575, 4
    %v652 = vadd.f32 %v575, %v651
    %v653 = vrot.slane %v652, 2
    %v654 = vadd.f32 %v652, %v653
    %v655 = vrot.slane %v654, 1
    %v656 = vadd.f32 %v654, %v655
    %v657 = vrot.slane %v576, 4
    %v658 = vadd.f32 %v576, %v657
    %v659 = vrot.slane %v658, 2
    %v660 = vadd.f32 %v658, %v659
    %v661 = vrot.slane %v660, 1
    %v662 = vadd.f32 %v660, %v661
    %v663 = vrot.slane %v577, 4
    %v664 = vadd.f32 %v577, %v663
    %v665 = vrot.slane %v664, 2
    %v666 = vadd.f32 %v664, %v665
    %v667 = vrot.slane %v666, 1
    %v668 = vadd.f32 %v666, %v667
    %v669 = vrot.slane %v578, 4
    %v670 = vadd.f32 %v578, %v669
    %v671 = vrot.slane %v670, 2
    %v672 = vadd.f32 %v670, %v671
    %v673 = vrot.slane %v672, 1
    %v674 = vadd.f32 %v672, %v673
    %v675 = vld [vmem:[#allocation10] sm:$0xff]
    %v676 = vld [vmem:[#allocation10 + $0x8] sm:$0xff]
    %v677 = vld [vmem:[#allocation10 + $0x10] sm:$0xff]
    %v678 = vld [vmem:[#allocation10 + $0x18] sm:$0xff]
    %v679 = vld [vmem:[#allocation10 + $0x20] sm:$0xff]
    %v680 = vld [vmem:[#allocation10 + $0x28] sm:$0xff]
    %v681 = vld [vmem:[#allocation10 + $0x30] sm:$0xff]
    %v682 = vld [vmem:[#allocation10 + $0x38] sm:$0xff]
    %v683 = vld [vmem:[#allocation10 + $0x40] sm:$0xff]
    %v684 = vld [vmem:[#allocation10 + $0x48] sm:$0xff]
    %v685 = vld [vmem:[#allocation10 + $0x50] sm:$0xff]
    %v686 = vld [vmem:[#allocation10 + $0x58] sm:$0xff]
    %v687 = vld [vmem:[#allocation10 + $0x60] sm:$0xff]
    %v688 = vld [vmem:[#allocation10 + $0x68] sm:$0xff]
    %v689 = vld [vmem:[#allocation10 + $0x70] sm:$0xff]
    %v690 = vld [vmem:[#allocation10 + $0x78] sm:$0xff]
    %v691 = vld [vmem:[%s6] sm:$0x1]
    %v693 = vperm.slane %v691, 0
    %v711 = vsel %vm515, %v590, %v584
    %v712 = vsel %vm517, %v596, %v711
    %v713 = vsel %vm519, %v602, %v712
    %v714 = vsel %vm521, %v608, %v713
    %v715 = vsel %vm523, %v614, %v714
    %v716 = vsel %vm525, %v620, %v715
    %v717 = vsel %vm527, %v626, %v716
    %v718 = vsel %vm515, %v638, %v632
    %v719 = vsel %vm517, %v644, %v718
    %v720 = vsel %vm519, %v650, %v719
    %v721 = vsel %vm521, %v656, %v720
    %v722 = vsel %vm523, %v662, %v721
    %v723 = vsel %vm525, %v668, %v722
    %v724 = vsel %vm527, %v674, %v723
    %727 = vmatpush.msra.mxu0 %v690
    %728 = vmatpush.msra.mxu0 %v689
    %729 = vmatpush.msra.mxu0 %v688
    %730 = vmatpush.msra.mxu0 %v687
    %731 = vmatpush.msra.mxu0 %v686
    %732 = vmatpush.msra.mxu0 %v685
    %733 = vmatpush.msra.mxu0 %v684
    %734 = vmatpush.msra.mxu0 %v683
    %735 = vmatpush.msra.mxu0 %v682
    %736 = vmatpush.msra.mxu0 %v681
    %737 = vmatpush.msra.mxu0 %v680
    %738 = vmatpush.msra.mxu0 %v679
    %739 = vmatpush.msra.mxu0 %v678
    %740 = vmatpush.msra.mxu0 %v677
    %741 = vmatpush.msra.mxu0 %v676
    %742 = vmatpush.msra.mxu0 %v675
    %743 = vmatmul.f32.gmra.mxu0 %v717
    %v744 = vpop.f32.mrf.mxu0
    %v745 = vadd.f32 %v693, %v744
    %746 = vmatmul.f32.gmra.mxu0 %v724
    %v747 = vpop.f32.mrf.mxu0
    %v748 = vadd.f32 %v693, %v747
    %749 = vdwg.mxu0
    %v750 = vmax.f32 %v745, 0.0
    %v751 = vmax.f32 %v748, 0.0
    %v752 = vperm.slane %v253, 0
    %v753 = vlaneseq
    %v754 = vshrl.u32 %v753, 7
    %756 = vset.pattern.permute.xlu0 %v754
    %757 = vperm.xlu0 %756, %v752
    %v758 = vpop.permute.xlu0 %757
    %v759 = vperm.slane %v253, 1
    %v760 = vlaneseq
    %v761 = vshrl.u32 %v760, 7
    %763 = vset.pattern.permute.xlu0 %v761
    %764 = vperm.xlu0 %763, %v759
    %v765 = vpop.permute.xlu0 %764
    %v766 = vperm.slane %v253, 2
    %v767 = vlaneseq
    %v768 = vshrl.u32 %v767, 7
    %770 = vset.pattern.permute.xlu0 %v768
    %771 = vperm.xlu0 %770, %v766
    %v772 = vpop.permute.xlu0 %771
    %v773 = vperm.slane %v253, 3
    %v774 = vlaneseq
    %v775 = vshrl.u32 %v774, 7
    %777 = vset.pattern.permute.xlu0 %v775
    %778 = vperm.xlu0 %777, %v773
    %v779 = vpop.permute.xlu0 %778
    %v780 = vperm.slane %v253, 4
    %v781 = vlaneseq
    %v782 = vshrl.u32 %v781, 7
    %784 = vset.pattern.permute.xlu0 %v782
    %785 = vperm.xlu0 %784, %v780
    %v786 = vpop.permute.xlu0 %785
    %v787 = vperm.slane %v253, 5
    %v788 = vlaneseq
    %v789 = vshrl.u32 %v788, 7
    %791 = vset.pattern.permute.xlu0 %v789
    %792 = vperm.xlu0 %791, %v787
    %v793 = vpop.permute.xlu0 %792
    %v794 = vperm.slane %v253, 6
    %v795 = vlaneseq
    %v796 = vshrl.u32 %v795, 7
    %798 = vset.pattern.permute.xlu0 %v796
    %799 = vperm.xlu0 %798, %v794
    %v800 = vpop.permute.xlu0 %799
    %v801 = vperm.slane %v253, 7
    %v802 = vlaneseq
    %v803 = vshrl.u32 %v802, 7
    %805 = vset.pattern.permute.xlu0 %v803
    %806 = vperm.xlu0 %805, %v801
    %v807 = vpop.permute.xlu0 %806
    %v808 = vperm.slane %v254, 0
    %v809 = vlaneseq
    %v810 = vshrl.u32 %v809, 7
    %812 = vset.pattern.permute.xlu0 %v810
    %813 = vperm.xlu0 %812, %v808
    %v814 = vpop.permute.xlu0 %813
    %v815 = vperm.slane %v254, 1
    %v816 = vlaneseq
    %v817 = vshrl.u32 %v816, 7
    %819 = vset.pattern.permute.xlu0 %v817
    %820 = vperm.xlu0 %819, %v815
    %v821 = vpop.permute.xlu0 %820
    %v822 = vperm.slane %v254, 2
    %v823 = vlaneseq
    %v824 = vshrl.u32 %v823, 7
    %826 = vset.pattern.permute.xlu0 %v824
    %827 = vperm.xlu0 %826, %v822
    %v828 = vpop.permute.xlu0 %827
    %v829 = vperm.slane %v254, 3
    %v830 = vlaneseq
    %v831 = vshrl.u32 %v830, 7
    %833 = vset.pattern.permute.xlu0 %v831
    %834 = vperm.xlu0 %833, %v829
    %v835 = vpop.permute.xlu0 %834
    %v836 = vperm.slane %v254, 4
    %v837 = vlaneseq
    %v838 = vshrl.u32 %v837, 7
    %840 = vset.pattern.permute.xlu0 %v838
    %841 = vperm.xlu0 %840, %v836
    %v842 = vpop.permute.xlu0 %841
    %v843 = vperm.slane %v254, 5
    %v844 = vlaneseq
    %v845 = vshrl.u32 %v844, 7
    %847 = vset.pattern.permute.xlu0 %v845
    %848 = vperm.xlu0 %847, %v843
    %v849 = vpop.permute.xlu0 %848
    %v850 = vperm.slane %v254, 6
    %v851 = vlaneseq
    %v852 = vshrl.u32 %v851, 7
    %854 = vset.pattern.permute.xlu0 %v852
    %855 = vperm.xlu0 %854, %v850
    %v856 = vpop.permute.xlu0 %855
    %v857 = vperm.slane %v254, 7
    %v858 = vlaneseq
    %v859 = vshrl.u32 %v858, 7
    %861 = vset.pattern.permute.xlu0 %v859
    %862 = vperm.xlu0 %861, %v857
    %v863 = vpop.permute.xlu0 %862
    %v864 = vmul.f32 %v758, %v228
    %v865 = vmul.f32 %v765, %v228
    %v866 = vmul.f32 %v772, %v228
    %v867 = vmul.f32 %v779, %v228
    %v868 = vmul.f32 %v786, %v228
    %v869 = vmul.f32 %v793, %v228
    %v870 = vmul.f32 %v800, %v228
    %v871 = vmul.f32 %v807, %v228
    %v872 = vmul.f32 %v814, %v229
    %v873 = vmul.f32 %v821, %v229
    %v874 = vmul.f32 %v828, %v229
    %v875 = vmul.f32 %v835, %v229
    %v876 = vmul.f32 %v842, %v229
    %v877 = vmul.f32 %v849, %v229
    %v878 = vmul.f32 %v856, %v229
    %v879 = vmul.f32 %v863, %v229
    %v880 = vrot.slane %v864, 4
    %v881 = vadd.f32 %v864, %v880
    %v882 = vrot.slane %v881, 2
    %v883 = vadd.f32 %v881, %v882
    %v884 = vrot.slane %v883, 1
    %v885 = vadd.f32 %v883, %v884
    %v886 = vrot.slane %v865, 4
    %v887 = vadd.f32 %v865, %v886
    %v888 = vrot.slane %v887, 2
    %v889 = vadd.f32 %v887, %v888
    %v890 = vrot.slane %v889, 1
    %v891 = vadd.f32 %v889, %v890
    %v892 = vrot.slane %v866, 4
    %v893 = vadd.f32 %v866, %v892
    %v894 = vrot.slane %v893, 2
    %v895 = vadd.f32 %v893, %v894
    %v896 = vrot.slane %v895, 1
    %v897 = vadd.f32 %v895, %v896
    %v898 = vrot.slane %v867, 4
    %v899 = vadd.f32 %v867, %v898
    %v900 = vrot.slane %v899, 2
    %v901 = vadd.f32 %v899, %v900
    %v902 = vrot.slane %v901, 1
    %v903 = vadd.f32 %v901, %v902
    %v904 = vrot.slane %v868, 4
    %v905 = vadd.f32 %v868, %v904
    %v906 = vrot.slane %v905, 2
    %v907 = vadd.f32 %v905, %v906
    %v908 = vrot.slane %v907, 1
    %v909 = vadd.f32 %v907, %v908
    %v910 = vrot.slane %v869, 4
    %v911 = vadd.f32 %v869, %v910
    %v912 = vrot.slane %v911, 2
    %v913 = vadd.f32 %v911, %v912
    %v914 = vrot.slane %v913, 1
    %v915 = vadd.f32 %v913, %v914
    %v916 = vrot.slane %v870, 4
    %v917 = vadd.f32 %v870, %v916
    %v918 = vrot.slane %v917, 2
    %v919 = vadd.f32 %v917, %v918
    %v920 = vrot.slane %v919, 1
    %v921 = vadd.f32 %v919, %v920
    %v922 = vrot.slane %v871, 4
    %v923 = vadd.f32 %v871, %v922
    %v924 = vrot.slane %v923, 2
    %v925 = vadd.f32 %v923, %v924
    %v926 = vrot.slane %v925, 1
    %v927 = vadd.f32 %v925, %v926
    %v928 = vrot.slane %v872, 4
    %v929 = vadd.f32 %v872, %v928
    %v930 = vrot.slane %v929, 2
    %v931 = vadd.f32 %v929, %v930
    %v932 = vrot.slane %v931, 1
    %v933 = vadd.f32 %v931, %v932
    %v934 = vrot.slane %v873, 4
    %v935 = vadd.f32 %v873, %v934
    %v936 = vrot.slane %v935, 2
    %v937 = vadd.f32 %v935, %v936
    %v938 = vrot.slane %v937, 1
    %v939 = vadd.f32 %v937, %v938
    %v940 = vrot.slane %v874, 4
    %v941 = vadd.f32 %v874, %v940
    %v942 = vrot.slane %v941, 2
    %v943 = vadd.f32 %v941, %v942
    %v944 = vrot.slane %v943, 1
    %v945 = vadd.f32 %v943, %v944
    %v946 = vrot.slane %v875, 4
    %v947 = vadd.f32 %v875, %v946
    %v948 = vrot.slane %v947, 2
    %v949 = vadd.f32 %v947, %v948
    %v950 = vrot.slane %v949, 1
    %v951 = vadd.f32 %v949, %v950
    %v952 = vrot.slane %v876, 4
    %v953 = vadd.f32 %v876, %v952
    %v954 = vrot.slane %v953, 2
    %v955 = vadd.f32 %v953, %v954
    %v956 = vrot.slane %v955, 1
    %v957 = vadd.f32 %v955, %v956
    %v958 = vrot.slane %v877, 4
    %v959 = vadd.f32 %v877, %v958
    %v960 = vrot.slane %v959, 2
    %v961 = vadd.f32 %v959, %v960
    %v962 = vrot.slane %v961, 1
    %v963 = vadd.f32 %v961, %v962
    %v964 = vrot.slane %v878, 4
    %v965 = vadd.f32 %v878, %v964
    %v966 = vrot.slane %v965, 2
    %v967 = vadd.f32 %v965, %v966
    %v968 = vrot.slane %v967, 1
    %v969 = vadd.f32 %v967, %v968
    %v970 = vrot.slane %v879, 4
    %v971 = vadd.f32 %v879, %v970
    %v972 = vrot.slane %v971, 2
    %v973 = vadd.f32 %v971, %v972
    %v974 = vrot.slane %v973, 1
    %v975 = vadd.f32 %v973, %v974
    %v976 = vld [vmem:[#allocation11] sm:$0xff]
    %v977 = vld [vmem:[#allocation11 + $0x8] sm:$0xff]
    %v978 = vld [vmem:[#allocation11 + $0x10] sm:$0xff]
    %v979 = vld [vmem:[#allocation11 + $0x18] sm:$0xff]
    %v980 = vld [vmem:[#allocation11 + $0x20] sm:$0xff]
    %v981 = vld [vmem:[#allocation11 + $0x28] sm:$0xff]
    %v982 = vld [vmem:[#allocation11 + $0x30] sm:$0xff]
    %v983 = vld [vmem:[#allocation11 + $0x38] sm:$0xff]
    %v984 = vld [vmem:[#allocation11 + $0x40] sm:$0xff]
    %v985 = vld [vmem:[#allocation11 + $0x48] sm:$0xff]
    %v986 = vld [vmem:[#allocation11 + $0x50] sm:$0xff]
    %v987 = vld [vmem:[#allocation11 + $0x58] sm:$0xff]
    %v988 = vld [vmem:[#allocation11 + $0x60] sm:$0xff]
    %v989 = vld [vmem:[#allocation11 + $0x68] sm:$0xff]
    %v990 = vld [vmem:[#allocation11 + $0x70] sm:$0xff]
    %v991 = vld [vmem:[#allocation11 + $0x78] sm:$0xff]
    %v992 = vld [vmem:[%s8] sm:$0x1]
    %v994 = vperm.slane %v992, 0
    %v1012 = vsel %vm515, %v891, %v885
    %v1013 = vsel %vm517, %v897, %v1012
    %v1014 = vsel %vm519, %v903, %v1013
    %v1015 = vsel %vm521, %v909, %v1014
    %v1016 = vsel %vm523, %v915, %v1015
    %v1017 = vsel %vm525, %v921, %v1016
    %v1018 = vsel %vm527, %v927, %v1017
    %v1019 = vsel %vm515, %v939, %v933
    %v1020 = vsel %vm517, %v945, %v1019
    %v1021 = vsel %vm519, %v951, %v1020
    %v1022 = vsel %vm521, %v957, %v1021
    %v1023 = vsel %vm523, %v963, %v1022
    %v1024 = vsel %vm525, %v969, %v1023
    %v1025 = vsel %vm527, %v975, %v1024
    %1028 = vmatpush.msra.mxu0 %v991
    %1029 = vmatpush.msra.mxu0 %v990
    %1030 = vmatpush.msra.mxu0 %v989
    %1031 = vmatpush.msra.mxu0 %v988
    %1032 = vmatpush.msra.mxu0 %v987
    %1033 = vmatpush.msra.mxu0 %v986
    %1034 = vmatpush.msra.mxu0 %v985
    %1035 = vmatpush.msra.mxu0 %v984
    %1036 = vmatpush.msra.mxu0 %v983
    %1037 = vmatpush.msra.mxu0 %v982
    %1038 = vmatpush.msra.mxu0 %v981
    %1039 = vmatpush.msra.mxu0 %v980
    %1040 = vmatpush.msra.mxu0 %v979
    %1041 = vmatpush.msra.mxu0 %v978
    %1042 = vmatpush.msra.mxu0 %v977
    %1043 = vmatpush.msra.mxu0 %v976
    %1044 = vmatmul.f32.gmra.mxu0 %v1018
    %v1045 = vpop.f32.mrf.mxu0
    %v1046 = vadd.f32 %v994, %v1045
    %1047 = vmatmul.f32.gmra.mxu0 %v1025
    %v1048 = vpop.f32.mrf.mxu0
    %v1049 = vadd.f32 %v994, %v1048
    %1050 = vdwg.mxu0
    %v1051 = vmax.f32 %v1046, 0.0
    %v1052 = vmax.f32 %v1049, 0.0
    %v1053 = vmul.f32 %v758, %v1051
    %v1054 = vmul.f32 %v765, %v1051
    %v1055 = vmul.f32 %v772, %v1051
    %v1056 = vmul.f32 %v779, %v1051
    %v1057 = vmul.f32 %v786, %v1051
    %v1058 = vmul.f32 %v793, %v1051
    %v1059 = vmul.f32 %v800, %v1051
    %v1060 = vmul.f32 %v807, %v1051
    %v1061 = vmul.f32 %v814, %v1052
    %v1062 = vmul.f32 %v821, %v1052
    %v1063 = vmul.f32 %v828, %v1052
    %v1064 = vmul.f32 %v835, %v1052
    %v1065 = vmul.f32 %v842, %v1052
    %v1066 = vmul.f32 %v849, %v1052
    %v1067 = vmul.f32 %v856, %v1052
    %v1068 = vmul.f32 %v863, %v1052
    %v1069 = vrot.slane %v1053, 4
    %v1070 = vadd.f32 %v1053, %v1069
    %v1071 = vrot.slane %v1070, 2
    %v1072 = vadd.f32 %v1070, %v1071
    %v1073 = vrot.slane %v1072, 1
    %v1074 = vadd.f32 %v1072, %v1073
    %v1075 = vrot.slane %v1054, 4
    %v1076 = vadd.f32 %v1054, %v1075
    %v1077 = vrot.slane %v1076, 2
    %v1078 = vadd.f32 %v1076, %v1077
    %v1079 = vrot.slane %v1078, 1
    %v1080 = vadd.f32 %v1078, %v1079
    %v1081 = vrot.slane %v1055, 4
    %v1082 = vadd.f32 %v1055, %v1081
    %v1083 = vrot.slane %v1082, 2
    %v1084 = vadd.f32 %v1082, %v1083
    %v1085 = vrot.slane %v1084, 1
    %v1086 = vadd.f32 %v1084, %v1085
    %v1087 = vrot.slane %v1056, 4
    %v1088 = vadd.f32 %v1056, %v1087
    %v1089 = vrot.slane %v1088, 2
    %v1090 = vadd.f32 %v1088, %v1089
    %v1091 = vrot.slane %v1090, 1
    %v1092 = vadd.f32 %v1090, %v1091
    %v1093 = vrot.slane %v1057, 4
    %v1094 = vadd.f32 %v1057, %v1093
    %v1095 = vrot.slane %v1094, 2
    %v1096 = vadd.f32 %v1094, %v1095
    %v1097 = vrot.slane %v1096, 1
    %v1098 = vadd.f32 %v1096, %v1097
    %v1099 = vrot.slane %v1058, 4
    %v1100 = vadd.f32 %v1058, %v1099
    %v1101 = vrot.slane %v1100, 2
    %v1102 = vadd.f32 %v1100, %v1101
    %v1103 = vrot.slane %v1102, 1
    %v1104 = vadd.f32 %v1102, %v1103
    %v1105 = vrot.slane %v1059, 4
    %v1106 = vadd.f32 %v1059, %v1105
    %v1107 = vrot.slane %v1106, 2
    %v1108 = vadd.f32 %v1106, %v1107
    %v1109 = vrot.slane %v1108, 1
    %v1110 = vadd.f32 %v1108, %v1109
    %v1111 = vrot.slane %v1060, 4
    %v1112 = vadd.f32 %v1060, %v1111
    %v1113 = vrot.slane %v1112, 2
    %v1114 = vadd.f32 %v1112, %v1113
    %v1115 = vrot.slane %v1114, 1
    %v1116 = vadd.f32 %v1114, %v1115
    %v1117 = vrot.slane %v1061, 4
    %v1118 = vadd.f32 %v1061, %v1117
    %v1119 = vrot.slane %v1118, 2
    %v1120 = vadd.f32 %v1118, %v1119
    %v1121 = vrot.slane %v1120, 1
    %v1122 = vadd.f32 %v1120, %v1121
    %v1123 = vrot.slane %v1062, 4
    %v1124 = vadd.f32 %v1062, %v1123
    %v1125 = vrot.slane %v1124, 2
    %v1126 = vadd.f32 %v1124, %v1125
    %v1127 = vrot.slane %v1126, 1
    %v1128 = vadd.f32 %v1126, %v1127
    %v1129 = vrot.slane %v1063, 4
    %v1130 = vadd.f32 %v1063, %v1129
    %v1131 = vrot.slane %v1130, 2
    %v1132 = vadd.f32 %v1130, %v1131
    %v1133 = vrot.slane %v1132, 1
    %v1134 = vadd.f32 %v1132, %v1133
    %v1135 = vrot.slane %v1064, 4
    %v1136 = vadd.f32 %v1064, %v1135
    %v1137 = vrot.slane %v1136, 2
    %v1138 = vadd.f32 %v1136, %v1137
    %v1139 = vrot.slane %v1138, 1
    %v1140 = vadd.f32 %v1138, %v1139
    %v1141 = vrot.slane %v1065, 4
    %v1142 = vadd.f32 %v1065, %v1141
    %v1143 = vrot.slane %v1142, 2
    %v1144 = vadd.f32 %v1142, %v1143
    %v1145 = vrot.slane %v1144, 1
    %v1146 = vadd.f32 %v1144, %v1145
    %v1147 = vrot.slane %v1066, 4
    %v1148 = vadd.f32 %v1066, %v1147
    %v1149 = vrot.slane %v1148, 2
    %v1150 = vadd.f32 %v1148, %v1149
    %v1151 = vrot.slane %v1150, 1
    %v1152 = vadd.f32 %v1150, %v1151
    %v1153 = vrot.slane %v1067, 4
    %v1154 = vadd.f32 %v1067, %v1153
    %v1155 = vrot.slane %v1154, 2
    %v1156 = vadd.f32 %v1154, %v1155
    %v1157 = vrot.slane %v1156, 1
    %v1158 = vadd.f32 %v1156, %v1157
    %v1159 = vrot.slane %v1068, 4
    %v1160 = vadd.f32 %v1068, %v1159
    %v1161 = vrot.slane %v1160, 2
    %v1162 = vadd.f32 %v1160, %v1161
    %v1163 = vrot.slane %v1162, 1
    %v1164 = vadd.f32 %v1162, %v1163
    %v1165 = vld [vmem:[#allocation13] sm:$0xff]
    %v1166 = vld [vmem:[#allocation13 + $0x8] sm:$0xff]
    %v1167 = vld [vmem:[#allocation13 + $0x10] sm:$0xff]
    %v1168 = vld [vmem:[#allocation13 + $0x18] sm:$0xff]
    %v1169 = vld [vmem:[#allocation13 + $0x20] sm:$0xff]
    %v1170 = vld [vmem:[#allocation13 + $0x28] sm:$0xff]
    %v1171 = vld [vmem:[#allocation13 + $0x30] sm:$0xff]
    %v1172 = vld [vmem:[#allocation13 + $0x38] sm:$0xff]
    %v1173 = vld [vmem:[#allocation13 + $0x40] sm:$0xff]
    %v1174 = vld [vmem:[#allocation13 + $0x48] sm:$0xff]
    %v1175 = vld [vmem:[#allocation13 + $0x50] sm:$0xff]
    %v1176 = vld [vmem:[#allocation13 + $0x58] sm:$0xff]
    %v1177 = vld [vmem:[#allocation13 + $0x60] sm:$0xff]
    %v1178 = vld [vmem:[#allocation13 + $0x68] sm:$0xff]
    %v1179 = vld [vmem:[#allocation13 + $0x70] sm:$0xff]
    %v1180 = vld [vmem:[#allocation13 + $0x78] sm:$0xff]
    %v1181 = vld [vmem:[%s10] sm:$0x1]
    %v1183 = vperm.slane %v1181, 0
    %v1201 = vsel %vm515, %v1080, %v1074
    %v1202 = vsel %vm517, %v1086, %v1201
    %v1203 = vsel %vm519, %v1092, %v1202
    %v1204 = vsel %vm521, %v1098, %v1203
    %v1205 = vsel %vm523, %v1104, %v1204
    %v1206 = vsel %vm525, %v1110, %v1205
    %v1207 = vsel %vm527, %v1116, %v1206
    %v1208 = vsel %vm515, %v1128, %v1122
    %v1209 = vsel %vm517, %v1134, %v1208
    %v1210 = vsel %vm519, %v1140, %v1209
    %v1211 = vsel %vm521, %v1146, %v1210
    %v1212 = vsel %vm523, %v1152, %v1211
    %v1213 = vsel %vm525, %v1158, %v1212
    %v1214 = vsel %vm527, %v1164, %v1213
    %1217 = vmatpush.msra.mxu0 %v1180
    %1218 = vmatpush.msra.mxu0 %v1179
    %1219 = vmatpush.msra.mxu0 %v1178
    %1220 = vmatpush.msra.mxu0 %v1177
    %1221 = vmatpush.msra.mxu0 %v1176
    %1222 = vmatpush.msra.mxu0 %v1175
    %1223 = vmatpush.msra.mxu0 %v1174
    %1224 = vmatpush.msra.mxu0 %v1173
    %1225 = vmatpush.msra.mxu0 %v1172
    %1226 = vmatpush.msra.mxu0 %v1171
    %1227 = vmatpush.msra.mxu0 %v1170
    %1228 = vmatpush.msra.mxu0 %v1169
    %1229 = vmatpush.msra.mxu0 %v1168
    %1230 = vmatpush.msra.mxu0 %v1167
    %1231 = vmatpush.msra.mxu0 %v1166
    %1232 = vmatpush.msra.mxu0 %v1165
    %1233 = vmatmul.f32.gmra.mxu0 %v1207
    %v1234 = vpop.f32.mrf.mxu0
    %v1235 = vadd.f32 %v1183, %v1234
    %1236 = vmatmul.f32.gmra.mxu0 %v1214
    %v1237 = vpop.f32.mrf.mxu0
    %v1238 = vadd.f32 %v1183, %v1237
    %1239 = vdwg.mxu0
    %v1240 = vmax.f32 %v1235, 0.0
    %v1241 = vmax.f32 %v1238, 0.0
    %v1242 = vld [vmem:[#allocation14] sm:$0xff]
    %v1243 = vld [vmem:[#allocation14 + $0x8] sm:$0xff]
    %v1244 = vld [vmem:[#allocation14 + $0x10] sm:$0xff]
    %v1245 = vld [vmem:[#allocation14 + $0x18] sm:$0xff]
    %v1246 = vld [vmem:[#allocation14 + $0x20] sm:$0xff]
    %v1247 = vld [vmem:[#allocation14 + $0x28] sm:$0xff]
    %v1248 = vld [vmem:[#allocation14 + $0x30] sm:$0xff]
    %v1249 = vld [vmem:[#allocation14 + $0x38] sm:$0xff]
    %v1250 = vld [vmem:[#allocation14 + $0x40] sm:$0xff]
    %v1251 = vld [vmem:[#allocation14 + $0x48] sm:$0xff]
    %v1252 = vld [vmem:[#allocation14 + $0x50] sm:$0xff]
    %v1253 = vld [vmem:[#allocation14 + $0x58] sm:$0xff]
    %v1254 = vld [vmem:[#allocation14 + $0x60] sm:$0xff]
    %v1255 = vld [vmem:[#allocation14 + $0x68] sm:$0xff]
    %v1256 = vld [vmem:[#allocation14 + $0x70] sm:$0xff]
    %v1257 = vld [vmem:[#allocation14 + $0x78] sm:$0xff]
    %v1258 = vld [vmem:[#allocation16] sm:$0xff]
    %v1259 = vld [vmem:[#allocation16 + $0x8] sm:$0xff]
    %v1260 = vld [vmem:[#allocation16 + $0x10] sm:$0xff]
    %v1261 = vld [vmem:[#allocation16 + $0x18] sm:$0xff]
    %v1262 = vld [vmem:[#allocation16 + $0x20] sm:$0xff]
    %v1263 = vld [vmem:[#allocation16 + $0x28] sm:$0xff]
    %v1264 = vld [vmem:[#allocation16 + $0x30] sm:$0xff]
    %v1265 = vld [vmem:[#allocation16 + $0x38] sm:$0xff]
    %v1266 = vld [vmem:[#allocation16 + $0x40] sm:$0xff]
    %v1267 = vld [vmem:[#allocation16 + $0x48] sm:$0xff]
    %v1268 = vld [vmem:[#allocation16 + $0x50] sm:$0xff]
    %v1269 = vld [vmem:[#allocation16 + $0x58] sm:$0xff]
    %v1270 = vld [vmem:[#allocation16 + $0x60] sm:$0xff]
    %v1271 = vld [vmem:[#allocation16 + $0x68] sm:$0xff]
    %v1272 = vld [vmem:[#allocation16 + $0x70] sm:$0xff]
    %v1273 = vld [vmem:[#allocation16 + $0x78] sm:$0xff]
    %1274 = vmatpush.msra.mxu0 %v1273
    %1275 = vmatpush.msra.mxu0 %v1272
    %1276 = vmatpush.msra.mxu0 %v1271
    %1277 = vmatpush.msra.mxu0 %v1270
    %1278 = vmatpush.msra.mxu0 %v1269
    %1279 = vmatpush.msra.mxu0 %v1268
    %1280 = vmatpush.msra.mxu0 %v1267
    %1281 = vmatpush.msra.mxu0 %v1266
    %1282 = vmatpush.msra.mxu0 %v1265
    %1283 = vmatpush.msra.mxu0 %v1264
    %1284 = vmatpush.msra.mxu0 %v1263
    %1285 = vmatpush.msra.mxu0 %v1262
    %1286 = vmatpush.msra.mxu0 %v1261
    %1287 = vmatpush.msra.mxu0 %v1260
    %1288 = vmatpush.msra.mxu0 %v1259
    %1289 = vmatpush.msra.mxu0 %v1258
    %1290 = vmatmul.f32.gmra.mxu0 %v1240
    %v1291 = vpop.f32.mrf.mxu0
    %v1292 = vadd.f32 0.0, %v1291
    %1293 = vmatmul.f32.gmra.mxu0 %v1241
    %v1294 = vpop.f32.mrf.mxu0
    %v1295 = vadd.f32 0.0, %v1294
    %1296 = vdwg.mxu0
    %1297 = vmatpush.msra.mxu0 %v1257
    %1298 = vmatpush.msra.mxu0 %v1256
    %1299 = vmatpush.msra.mxu0 %v1255
    %1300 = vmatpush.msra.mxu0 %v1254
    %1301 = vmatpush.msra.mxu0 %v1253
    %1302 = vmatpush.msra.mxu0 %v1252
    %1303 = vmatpush.msra.mxu0 %v1251
    %1304 = vmatpush.msra.mxu0 %v1250
    %1305 = vmatpush.msra.mxu0 %v1249
    %1306 = vmatpush.msra.mxu0 %v1248
    %1307 = vmatpush.msra.mxu0 %v1247
    %1308 = vmatpush.msra.mxu0 %v1246
    %1309 = vmatpush.msra.mxu0 %v1245
    %1310 = vmatpush.msra.mxu0 %v1244
    %1311 = vmatpush.msra.mxu0 %v1243
    %1312 = vmatpush.msra.mxu0 %v1242
    %1313 = vmatmul.f32.gmra.mxu0 %v750
    %v1314 = vpop.f32.mrf.mxu0
    %v1315 = vadd.f32 %v1292, %v1314
    %1316 = vmatmul.f32.gmra.mxu0 %v751
    %v1317 = vpop.f32.mrf.mxu0
    %v1318 = vadd.f32 %v1295, %v1317
    %1319 = vdwg.mxu0
    %v1320 = vld [vmem:[%s13] sm:$0x1]
    %v1322 = vperm.slane %v1320, 0
    %v1324 = vadd.f32 %v1315, %v1322
    %v1325 = vadd.f32 %v1318, %v1322
    %v1326 = vxor.u32 %v1324, 2147483648
    %v1327 = vxor.u32 %v1325, 2147483648
    %v1328 = vmul.f32 %v1326, 1.442695
    %v1329 = vpow.pop %v1328
    %v1330 = vmul.f32 %v1327, 1.442695
    %v1331 = vpow.pop %v1330
    %v1332 = vadd.f32 %v1329, 1.0
    %v1333 = vadd.f32 %v1331, 1.0
    %v1334 = vrcp.pop %v1332
    %v1335 = vmul.f32 %v1332, %v1334
    %v1336 = vsub.f32 1.0, %v1335
    %v1337 = vmul.f32 %v1334, %v1336
    %v1338 = vadd.f32 %v1334, %v1337
    %vm1339 = vweird.f32 %v1332
    %vm1340 = vweird.f32 %v1334
    %vm1341 = vmor %vm1339, %vm1340
    %v1342 = vsel %vm1341, %v1334, %v1338
    %v1343 = vand.u32 2147483647, %v1332
    %vm1344 = vcmp.eq.f32.partialorder %v1343, 8.507059e+37
    %v1345 = vand.u32 %v1332, 2147483648
    %v1346 = vor.u32 1.1754944e-38, %v1345
    %v1347 = vsel %vm1344, %v1346, %v1342
    %v1348 = vmul.f32 1.0, %v1347
    %v1349 = vrcp.pop %v1333
    %v1350 = vmul.f32 %v1333, %v1349
    %v1351 = vsub.f32 1.0, %v1350
    %v1352 = vmul.f32 %v1349, %v1351
    %v1353 = vadd.f32 %v1349, %v1352
    %vm1354 = vweird.f32 %v1333
    %vm1355 = vweird.f32 %v1349
    %vm1356 = vmor %vm1354, %vm1355
    %v1357 = vsel %vm1356, %v1349, %v1353
    %v1358 = vand.u32 2147483647, %v1333
    %vm1359 = vcmp.eq.f32.partialorder %v1358, 8.507059e+37
    %v1360 = vand.u32 %v1333, 2147483648
    %v1361 = vor.u32 1.1754944e-38, %v1360
    %v1362 = vsel %vm1359, %v1361, %v1357
    %v1363 = vmul.f32 1.0, %v1362
    %v1364 = vsub.f32 %v750, %v1240
    %v1365 = vsub.f32 %v751, %v1241
    %v1366 = vmul.f32 %v1348, %v1364
    %v1367 = vmul.f32 %v1363, %v1365
    %v1368 = vadd.f32 %v1240, %v1366
    %v1369 = vadd.f32 %v1241, %v1367
    %v1370 = vld [vmem:[#allocation17] sm:$0xff]
    %v1371 = vld [vmem:[#allocation17 + $0x8] sm:$0xff]
    %v1372 = vld [vmem:[#allocation17 + $0x10] sm:$0xff]
    %v1373 = vld [vmem:[#allocation17 + $0x18] sm:$0xff]
    %v1374 = vld [vmem:[#allocation17 + $0x20] sm:$0xff]
    %v1375 = vld [vmem:[#allocation17 + $0x28] sm:$0xff]
    %v1376 = vld [vmem:[#allocation17 + $0x30] sm:$0xff]
    %v1377 = vld [vmem:[#allocation17 + $0x38] sm:$0xff]
    %v1378 = vld [vmem:[#allocation17 + $0x40] sm:$0xff]
    %v1379 = vld [vmem:[#allocation17 + $0x48] sm:$0xff]
    %v1380 = vld [vmem:[#allocation17 + $0x50] sm:$0xff]
    %v1381 = vld [vmem:[#allocation17 + $0x58] sm:$0xff]
    %v1382 = vld [vmem:[#allocation17 + $0x60] sm:$0xff]
    %v1383 = vld [vmem:[#allocation17 + $0x68] sm:$0xff]
    %v1384 = vld [vmem:[#allocation17 + $0x70] sm:$0xff]
    %v1385 = vld [vmem:[#allocation17 + $0x78] sm:$0xff]
    %v1386 = vld [vmem:[#allocation19] sm:$0xff]
    %v1387 = vld [vmem:[#allocation19 + $0x8] sm:$0xff]
    %v1388 = vld [vmem:[#allocation19 + $0x10] sm:$0xff]
    %v1389 = vld [vmem:[#allocation19 + $0x18] sm:$0xff]
    %v1390 = vld [vmem:[#allocation19 + $0x20] sm:$0xff]
    %v1391 = vld [vmem:[#allocation19 + $0x28] sm:$0xff]
    %v1392 = vld [vmem:[#allocation19 + $0x30] sm:$0xff]
    %v1393 = vld [vmem:[#allocation19 + $0x38] sm:$0xff]
    %v1394 = vld [vmem:[#allocation19 + $0x40] sm:$0xff]
    %v1395 = vld [vmem:[#allocation19 + $0x48] sm:$0xff]
    %v1396 = vld [vmem:[#allocation19 + $0x50] sm:$0xff]
    %v1397 = vld [vmem:[#allocation19 + $0x58] sm:$0xff]
    %v1398 = vld [vmem:[#allocation19 + $0x60] sm:$0xff]
    %v1399 = vld [vmem:[#allocation19 + $0x68] sm:$0xff]
    %v1400 = vld [vmem:[#allocation19 + $0x70] sm:$0xff]
    %v1401 = vld [vmem:[#allocation19 + $0x78] sm:$0xff]
    %1402 = vmatpush.msra.mxu0 %v1401
    %1403 = vmatpush.msra.mxu0 %v1400
    %1404 = vmatpush.msra.mxu0 %v1399
    %1405 = vmatpush.msra.mxu0 %v1398
    %1406 = vmatpush.msra.mxu0 %v1397
    %1407 = vmatpush.msra.mxu0 %v1396
    %1408 = vmatpush.msra.mxu0 %v1395
    %1409 = vmatpush.msra.mxu0 %v1394
    %1410 = vmatpush.msra.mxu0 %v1393
    %1411 = vmatpush.msra.mxu0 %v1392
    %1412 = vmatpush.msra.mxu0 %v1391
    %1413 = vmatpush.msra.mxu0 %v1390
    %1414 = vmatpush.msra.mxu0 %v1389
    %1415 = vmatpush.msra.mxu0 %v1388
    %1416 = vmatpush.msra.mxu0 %v1387
    %1417 = vmatpush.msra.mxu0 %v1386
    %1418 = vmatmul.f32.gmra.mxu0 %v1368
    %v1419 = vpop.f32.mrf.mxu0
    %v1420 = vadd.f32 0.0, %v1419
    %1421 = vmatmul.f32.gmra.mxu0 %v1369
    %v1422 = vpop.f32.mrf.mxu0
    %v1423 = vadd.f32 0.0, %v1422
    %1424 = vdwg.mxu0
    %1425 = vmatpush.msra.mxu0 %v1385
    %1426 = vmatpush.msra.mxu0 %v1384
    %1427 = vmatpush.msra.mxu0 %v1383
    %1428 = vmatpush.msra.mxu0 %v1382
    %1429 = vmatpush.msra.mxu0 %v1381
    %1430 = vmatpush.msra.mxu0 %v1380
    %1431 = vmatpush.msra.mxu0 %v1379
    %1432 = vmatpush.msra.mxu0 %v1378
    %1433 = vmatpush.msra.mxu0 %v1377
    %1434 = vmatpush.msra.mxu0 %v1376
    %1435 = vmatpush.msra.mxu0 %v1375
    %1436 = vmatpush.msra.mxu0 %v1374
    %1437 = vmatpush.msra.mxu0 %v1373
    %1438 = vmatpush.msra.mxu0 %v1372
    %1439 = vmatpush.msra.mxu0 %v1371
    %1440 = vmatpush.msra.mxu0 %v1370
    %1441 = vmatmul.f32.gmra.mxu0 %v228
    %v1442 = vpop.f32.mrf.mxu0
    %v1443 = vadd.f32 %v1420, %v1442
    %1444 = vmatmul.f32.gmra.mxu0 %v229
    %v1445 = vpop.f32.mrf.mxu0
    %v1446 = vadd.f32 %v1423, %v1445
    %1447 = vdwg.mxu0
    %v1448 = vld [vmem:[%s16] sm:$0x1]
    %v1450 = vperm.slane %v1448, 0
    %v1452 = vadd.f32 %v1443, %v1450
    %v1453 = vadd.f32 %v1446, %v1450
    %v1454 = vmax.f32 %v1452, 0.0
    %v1455 = vmax.f32 %v1453, 0.0
    %1456 = vst [vmem:[#allocation20] sm:$0xff] %v1454
    %1457 = vst [vmem:[#allocation20 + $0x8] sm:$0xff] %v1455
    // Predicated region
    $region114: #{tpu_custom_call.1} parent=1 // pred_check
      _
    $region115: #{tpu_custom_call.1} parent=1 // pred_check_branch
      %1459 = sbr.rel (0) target = $region117
    $region116: #{tpu_custom_call.1} parent=1 // pred_region
      %1461 = vsyncadd [#allocation4], 0
      %s1462 = sshll.u32 [#allocation20], 4
      %s1463 = int_to_ptr.vmem [resolvable:$true] %s1462
      %s1464 = sshll.u32 %s17, 4
      %s1465 = int_to_ptr.hbm [resolvable:$true] %s1464
      %1470 = dma.vmem_to_hbm [thread:$0]  %s1463, 256, %s1465, [#allocation4], 128, 128, 8
    $region117: #{tpu_custom_call.1} parent=1 // pred_fallthru
      _
    // Predicated region
    $region118: #{tpu_custom_call.1} parent=1 // pred_check
      _
    $region119: #{tpu_custom_call.1} parent=1 // pred_check_branch
      %1472 = sbr.rel (0) target = $region121
    $region120: #{tpu_custom_call.1} parent=1 // pred_region
      %1474 = dma.done [#allocation4], 256
    $region121: #{tpu_custom_call.1} parent=1 // pred_fallthru
      _
    %1475 = vsyncpa [#allocation3], 1
    %1476 = vsyncpa [#allocation6], 1
    %1477 = vsyncpa [#allocation9], 1
    %1478 = vsyncpa [#allocation12], 1
    %1479 = vsyncpa [#allocation15], 1
    %1480 = vsyncpa [#allocation18], 1
    %1481 = vsyncpa [#allocation4], 1

// kernel: tpu_custom_call.1
$region0: #{tpu_custom_call.1}
  #allocation0 [shape = 'u32[]', space=smem, size = 0x4, offset = 0x4, fixed_abs, tag = 'smem constant byte address 0x4 - core index']
  #allocation1 [shape = 'u32[72,128]{1,0:T(1,128)}', space=vmem, size = 0x9000, scoped, tag = 'internal scratch']
  %s0 = inlined_call_operand.hbm [shape: f32[2,8,128], index: 0, kind: input, shape index: {}]
  %s1 = inlined_call_operand.hbm [shape: f32[2,8,8], index: 1, kind: input, shape index: {}]
  %s2 = inlined_call_operand.hbm [shape: f32[2,8,8], index: 2, kind: input, shape index: {}]
  %s3 = inlined_call_operand.hbm [shape: f32[128,128], index: 3, kind: input, shape index: {}]
  %s4 = inlined_call_operand.vmem [shape: f32[1,128], index: 4, kind: input, shape index: {}]
  %s5 = inlined_call_operand.hbm [shape: f32[128,128], index: 5, kind: input, shape index: {}]
  %s6 = inlined_call_operand.vmem [shape: f32[1,128], index: 6, kind: input, shape index: {}]
  %s7 = inlined_call_operand.hbm [shape: f32[128,128], index: 7, kind: input, shape index: {}]
  %s8 = inlined_call_operand.vmem [shape: f32[1,128], index: 8, kind: input, shape index: {}]
  %s9 = inlined_call_operand.hbm [shape: f32[128,128], index: 9, kind: input, shape index: {}]
  %s10 = inlined_call_operand.vmem [shape: f32[1,128], index: 10, kind: input, shape index: {}]
  %s11 = inlined_call_operand.hbm [shape: f32[128,128], index: 11, kind: input, shape index: {}]
  %s12 = inlined_call_operand.hbm [shape: f32[128,128], index: 12, kind: input, shape index: {}]
  %s13 = inlined_call_operand.vmem [shape: f32[1,128], index: 13, kind: input, shape index: {}]
  %s14 = inlined_call_operand.hbm [shape: f32[128,128], index: 14, kind: input, shape index: {}]
  %s15 = inlined_call_operand.hbm [shape: f32[128,128], index: 15, kind: input, shape index: {}]
  %s16 = inlined_call_operand.vmem [shape: f32[1,128], index: 16, kind: input, shape index: {}]
  %s17 = inlined_call_operand.hbm [shape: f32[2,8,128], index: 17, kind: output, shape index: {}]
  %s18 = sld [smem:[#allocation0]]
  $region122: #{tpu_custom_call.1} parent=0
    _
  %s20 = ssub.s32 1, %s18
  %s21 = scalar_select 0, %s20, %s18
  $region1: #{tpu_custom_call.1} parent=0
    #allocation2 [shape = 'u8[8192]{0}', space=vmem, size = 0x2000, scoped, tag = 'input window, operand 0, single buffered']
    #allocation3 [shape = 's32[1]{0}', space=sflag, size = 0x4, scoped, tag = 'scoped memory for tpu_custom_call.1']
    #allocation4 [shape = 's32[1]{0}', space=sflag, size = 0x4, scoped, tag = 'scoped memory for tpu_custom_call.1']
    #allocation5 [shape = 'u8[8192]{0}', space=vmem, size = 0x2000, scoped, tag = 'input window, operand 1, single buffered']
    #allocation6 [shape = 's32[1]{0}', space=sflag, size = 0x4, scoped, tag = 'scoped memory for tpu_custom_call.1']
    #allocation7 [shape = 'u8[8192]{0}', space=vmem, size = 0x2000, scoped, tag = 'input window, operand 2, single buffered']
    #allocation8 [shape = 'u8[65536]{0}', space=vmem, size = 0x10000, scoped, tag = 'input window, operand 3, single buffered']
    #allocation9 [shape = 's32[1]{0}', space=sflag, size = 0x4, scoped, tag = 'scoped memory for tpu_custom_call.1']
    #allocation10 [shape = 'u8[65536]{0}', space=vmem, size = 0x10000, scoped, tag = 'input window, operand 5, single buffered']
    #allocation11 [shape = 'u8[65536]{0}', space=vmem, size = 0x10000, scoped, tag = 'input window, operand 7, single buffered']
    #allocation12 [shape = 's32[1]{0}', space=sflag, size = 0x4, scoped, tag = 'scoped memory for tpu_custom_call.1']
    #allocation13 [shape = 'u8[65536]{0}', space=vmem, size = 0x10000, scoped, tag = 'input window, operand 9, single buffered']
    #allocation14 [shape = 'u8[65536]{0}', space=vmem, size = 0x10000, scoped, tag = 'input window, operand 11, single buffered']
    #allocation15 [shape = 's32[1]{0}', space=sflag, size = 0x4, scoped, tag = 'scoped memory for tpu_custom_call.1']
    #allocation16 [shape = 'u8[65536]{0}', space=vmem, size = 0x10000, scoped, tag = 'input window, operand 12, single buffered']
    #allocation17 [shape = 'u8[65536]{0}', space=vmem, size = 0x10000, scoped, tag = 'input window, operand 14, single buffered']
    #allocation18 [shape = 's32[1]{0}', space=sflag, size = 0x4, scoped, tag = 'scoped memory for tpu_custom_call.1']
    #allocation19 [shape = 'u8[65536]{0}', space=vmem, size = 0x10000, scoped, tag = 'input window, operand 15, single buffered']
    #allocation20 [shape = 'u8[8192]{0}', space=vmem, size = 0x2000, scoped, tag = 'output window, operand 0, single buffered']
    %22 = vsyncpa [#allocation3], 0
    %23 = vsyncpa [#allocation6], 0
    %24 = vsyncpa [#allocation9], 0
    %25 = vsyncpa [#allocation12], 0
    %26 = vsyncpa [#allocation15], 0
    %27 = vsyncpa [#allocation18], 0
    %28 = vsyncpa [#allocation4], 0
    // Predicated region
    $region2: #{tpu_custom_call.1} parent=1 // pred_check
      _
    $region3: #{tpu_custom_call.1} parent=1 // pred_check_branch
      %30 = sbr.rel (0) target = $region5
    $region4: #{tpu_custom_call.1} parent=1 // pred_region
      %32 = vsyncadd [#allocation3], 0
      %s33 = sshll.u32 %s0, 4
      %s34 = int_to_ptr.hbm [resolvable:$true] %s33
      %s35 = sshll.u32 [#allocation2], 4
      %s36 = int_to_ptr.vmem [resolvable:$true] %s35
      %41 = dma.hbm_to_vmem [thread:$0]  %s34, 256, %s36, [#allocation3], 128, 128, 8
    $region5: #{tpu_custom_call.1} parent=1 // pred_fallthru
      _
    // Predicated region
    $region6: #{tpu_custom_call.1} parent=1 // pred_check
      _
    $region7: #{tpu_custom_call.1} parent=1 // pred_check_branch
      %43 = sbr.rel (0) target = $region9
    $region8: #{tpu_custom_call.1} parent=1 // pred_region
      %45 = vsyncadd [#allocation6], 0
      %s46 = sshll.u32 %s1, 4
      %s47 = int_to_ptr.hbm [resolvable:$true] %s46
      %s48 = sshll.u32 [#allocation5], 4
      %s49 = int_to_ptr.vmem [resolvable:$true] %s48
      %54 = dma.hbm_to_vmem [thread:$0]  %s47, 256, %s49, [#allocation6], 128, 128, 8
    $region9: #{tpu_custom_call.1} parent=1 // pred_fallthru
      _
    // Predicated region
    $region10: #{tpu_custom_call.1} parent=1 // pred_check
      _
    $region11: #{tpu_custom_call.1} parent=1 // pred_check_branch
      %56 = sbr.rel (0) target = $region13
    $region12: #{tpu_custom_call.1} parent=1 // pred_region
      %58 = vsyncadd [#allocation6], 0
      %s59 = sshll.u32 %s2, 4
      %s60 = int_to_ptr.hbm [resolvable:$true] %s59
      %s61 = sshll.u32 [#allocation7], 4
      %s62 = int_to_ptr.vmem [resolvable:$true] %s61
      %67 = dma.hbm_to_vmem [thread:$0]  %s60, 256, %s62, [#allocation6], 128, 128, 8
    $region13: #{tpu_custom_call.1} parent=1 // pred_fallthru
      _
    // Predicated region
    $region14: #{tpu_custom_call.1} parent=1 // pred_check
      _
    $region15: #{tpu_custom_call.1} parent=1 // pred_check_branch
      %69 = sbr.rel (0) target = $region17
    $region16: #{tpu_custom_call.1} parent=1 // pred_region
      %71 = vsyncadd [#allocation9], 0
      %s72 = sshll.u32 %s3, 4
      %s73 = int_to_ptr.hbm [resolvable:$true] %s72
      %s74 = sshll.u32 [#allocation8], 4
      %s75 = int_to_ptr.vmem [resolvable:$true] %s74
      %80 = dma.hbm_to_vmem [thread:$0]  %s73, 2048, %s75, [#allocation9], 128, 128, 8
    $region17: #{tpu_custom_call.1} parent=1 // pred_fallthru
      _
    // Predicated region
    $region18: #{tpu_custom_call.1} parent=1 // pred_check
      _
    $region19: #{tpu_custom_call.1} parent=1 // pred_check_branch
      %82 = sbr.rel (0) target = $region21
    $region20: #{tpu_custom_call.1} parent=1 // pred_region
      _
    $region21: #{tpu_custom_call.1} parent=1 // pred_fallthru
      _
    // Predicated region
    $region22: #{tpu_custom_call.1} parent=1 // pred_check
      _
    $region23: #{tpu_custom_call.1} parent=1 // pred_check_branch
      %84 = sbr.rel (0) target = $region25
    $region24: #{tpu_custom_call.1} parent=1 // pred_region
      %86 = vsyncadd [#allocation9], 0
      %s87 = sshll.u32 %s5, 4
      %s88 = int_to_ptr.hbm [resolvable:$true] %s87
      %s89 = sshll.u32 [#allocation10], 4
      %s90 = int_to_ptr.vmem [resolvable:$true] %s89
      %95 = dma.hbm_to_vmem [thread:$0]  %s88, 2048, %s90, [#allocation9], 128, 128, 8
    $region25: #{tpu_custom_call.1} parent=1 // pred_fallthru
      _
    // Predicated region
    $region26: #{tpu_custom_call.1} parent=1 // pred_check
      _
    $region27: #{tpu_custom_call.1} parent=1 // pred_check_branch
      %97 = sbr.rel (0) target = $region29
    $region28: #{tpu_custom_call.1} parent=1 // pred_region
      _
    $region29: #{tpu_custom_call.1} parent=1 // pred_fallthru
      _
    // Predicated region
    $region30: #{tpu_custom_call.1} parent=1 // pred_check
      _
    $region31: #{tpu_custom_call.1} parent=1 // pred_check_branch
      %99 = sbr.rel (0) target = $region33
    $region32: #{tpu_custom_call.1} parent=1 // pred_region
      %101 = vsyncadd [#allocation12], 0
      %s102 = sshll.u32 %s7, 4
      %s103 = int_to_ptr.hbm [resolvable:$true] %s102
      %s104 = sshll.u32 [#allocation11], 4
      %s105 = int_to_ptr.vmem [resolvable:$true] %s104
      %110 = dma.hbm_to_vmem [thread:$0]  %s103, 2048, %s105, [#allocation12], 128, 128, 8
    $region33: #{tpu_custom_call.1} parent=1 // pred_fallthru
      _
    // Predicated region
    $region34: #{tpu_custom_call.1} parent=1 // pred_check
      _
    $region35: #{tpu_custom_call.1} parent=1 // pred_check_branch
      %112 = sbr.rel (0) target = $region37
    $region36: #{tpu_custom_call.1} parent=1 // pred_region
      _
    $region37: #{tpu_custom_call.1} parent=1 // pred_fallthru
      _
    // Predicated region
    $region38: #{tpu_custom_call.1} parent=1 // pred_check
      _
    $region39: #{tpu_custom_call.1} parent=1 // pred_check_branch
      %114 = sbr.rel (0) target = $region41
    $region40: #{tpu_custom_call.1} parent=1 // pred_region
      %116 = vsyncadd [#allocation12], 0
      %s117 = sshll.u32 %s9, 4
      %s118 = int_to_ptr.hbm [resolvable:$true] %s117
      %s119 = sshll.u32 [#allocation13], 4
      %s120 = int_to_ptr.vmem [resolvable:$true] %s119
      %125 = dma.hbm_to_vmem [thread:$0]  %s118, 2048, %s120, [#allocation12], 128, 128, 8
    $region41: #{tpu_custom_call.1} parent=1 // pred_fallthru
      _
    // Predicated region
    $region42: #{tpu_custom_call.1} parent=1 // pred_check
      _
    $region43: #{tpu_custom_call.1} parent=1 // pred_check_branch
      %127 = sbr.rel (0) target = $region45
    $region44: #{tpu_custom_call.1} parent=1 // pred_region
      _
    $region45: #{tpu_custom_call.1} parent=1 // pred_fallthru
      _
    // Predicated region
    $region46: #{tpu_custom_call.1} parent=1 // pred_check
      _
    $region47: #{tpu_custom_call.1} parent=1 // pred_check_branch
      %129 = sbr.rel (0) target = $region49
    $region48: #{tpu_custom_call.1} parent=1 // pred_region
      %131 = vsyncadd [#allocation15], 0
      %s132 = sshll.u32 %s11, 4
      %s133 = int_to_ptr.hbm [resolvable:$true] %s132
      %s134 = sshll.u32 [#allocation14], 4
      %s135 = int_to_ptr.vmem [resolvable:$true] %s134
      %140 = dma.hbm_to_vmem [thread:$0]  %s133, 2048, %s135, [#allocation15], 128, 128, 8
    $region49: #{tpu_custom_call.1} parent=1 // pred_fallthru
      _
    // Predicated region
    $region50: #{tpu_custom_call.1} parent=1 // pred_check
      _
    $region51: #{tpu_custom_call.1} parent=1 // pred_check_branch
      %142 = sbr.rel (0) target = $region53
    $region52: #{tpu_custom_call.1} parent=1 // pred_region
      %144 = vsyncadd [#allocation15], 0
      %s145 = sshll.u32 %s12, 4
      %s146 = int_to_ptr.hbm [resolvable:$true] %s145
      %s147 = sshll.u32 [#allocation16], 4
      %s148 = int_to_ptr.vmem [resolvable:$true] %s147
      %153 = dma.hbm_to_vmem [thread:$0]  %s146, 2048, %s148, [#allocation15], 128, 128, 8
    $region53: #{tpu_custom_call.1} parent=1 // pred_fallthru
      _
    // Predicated region
    $region54: #{tpu_custom_call.1} parent=1 // pred_check
      _
    $region55: #{tpu_custom_call.1} parent=1 // pred_check_branch
      %155 = sbr.rel (0) target = $region57
    $region56: #{tpu_custom_call.1} parent=1 // pred_region
      _
    $region57: #{tpu_custom_call.1} parent=1 // pred_fallthru
      _
    // Predicated region
    $region58: #{tpu_custom_call.1} parent=1 // pred_check
      _
    $region59: #{tpu_custom_call.1} parent=1 // pred_check_branch
      %157 = sbr.rel (0) target = $region61
    $region60: #{tpu_custom_call.1} parent=1 // pred_region
      %159 = vsyncadd [#allocation18], 0
      %s160 = sshll.u32 %s14, 4
      %s161 = int_to_ptr.hbm [resolvable:$true] %s160
      %s162 = sshll.u32 [#allocation17], 4
      %s163 = int_to_ptr.vmem [resolvable:$true] %s162
      %168 = dma.hbm_to_vmem [thread:$0]  %s161, 2048, %s163, [#allocation18], 128, 128, 8
    $region61: #{tpu_custom_call.1} parent=1 // pred_fallthru
      _
    // Predicated region
    $region62: #{tpu_custom_call.1} parent=1 // pred_check
      _
    $region63: #{tpu_custom_call.1} parent=1 // pred_check_branch
      %170 = sbr.rel (0) target = $region65
    $region64: #{tpu_custom_call.1} parent=1 // pred_region
      %172 = vsyncadd [#allocation18], 0
      %s173 = sshll.u32 %s15, 4
      %s174 = int_to_ptr.hbm [resolvable:$true] %s173
      %s175 = sshll.u32 [#allocation19], 4
      %s176 = int_to_ptr.vmem [resolvable:$true] %s175
      %181 = dma.hbm_to_vmem [thread:$0]  %s174, 2048, %s176, [#allocation18], 128, 128, 8
    $region65: #{tpu_custom_call.1} parent=1 // pred_fallthru
      _
    // Predicated region
    $region66: #{tpu_custom_call.1} parent=1 // pred_check
      _
    $region67: #{tpu_custom_call.1} parent=1 // pred_check_branch
      %183 = sbr.rel (0) target = $region69
    $region68: #{tpu_custom_call.1} parent=1 // pred_region
      _
    $region69: #{tpu_custom_call.1} parent=1 // pred_fallthru
      _
    // Predicated region
    $region70: #{tpu_custom_call.1} parent=1 // pred_check
      _
    $region71: #{tpu_custom_call.1} parent=1 // pred_check_branch
      %185 = sbr.rel (0) target = $region73
    $region72: #{tpu_custom_call.1} parent=1 // pred_region
      %187 = dma.done [#allocation3], 256
    $region73: #{tpu_custom_call.1} parent=1 // pred_fallthru
      _
    // Predicated region
    $region74: #{tpu_custom_call.1} parent=1 // pred_check
      _
    $region75: #{tpu_custom_call.1} parent=1 // pred_check_branch
      %189 = sbr.rel (0) target = $region77
    $region76: #{tpu_custom_call.1} parent=1 // pred_region
      %191 = dma.done [#allocation6], 256
    $region77: #{tpu_custom_call.1} parent=1 // pred_fallthru
      _
    // Predicated region
    $region78: #{tpu_custom_call.1} parent=1 // pred_check
      _
    $region79: #{tpu_custom_call.1} parent=1 // pred_check_branch
      %193 = sbr.rel (0) target = $region81
    $region80: #{tpu_custom_call.1} parent=1 // pred_region
      %195 = dma.done [#allocation6], 256
    $region81: #{tpu_custom_call.1} parent=1 // pred_fallthru
      _
    // Predicated region
    $region82: #{tpu_custom_call.1} parent=1 // pred_check
      _
    $region83: #{tpu_custom_call.1} parent=1 // pred_check_branch
      %197 = sbr.rel (0) target = $region85
    $region84: #{tpu_custom_call.1} parent=1 // pred_region
      %199 = dma.done [#allocation9], 2048
    $region85: #{tpu_custom_call.1} parent=1 // pred_fallthru
      _
    // Predicated region
    $region86: #{tpu_custom_call.1} parent=1 // pred_check
      _
    $region87: #{tpu_custom_call.1} parent=1 // pred_check_branch
      %201 = sbr.rel (0) target = $region89
    $region88: #{tpu_custom_call.1} parent=1 // pred_region
      %203 = dma.done [#allocation9], 2048
    $region89: #{tpu_custom_call.1} parent=1 // pred_fallthru
      _
    // Predicated region
    $region90: #{tpu_custom_call.1} parent=1 // pred_check
      _
    $region91: #{tpu_custom_call.1} parent=1 // pred_check_branch
      %205 = sbr.rel (0) target = $region93
    $region92: #{tpu_custom_call.1} parent=1 // pred_region
      %207 = dma.done [#allocation12], 2048
    $region93: #{tpu_custom_call.1} parent=1 // pred_fallthru
      _
    // Predicated region
    $region94: #{tpu_custom_call.1} parent=1 // pred_check
      _
    $region95: #{tpu_custom_call.1} parent=1 // pred_check_branch
      %209 = sbr.rel (0) target = $region97
    $region96: #{tpu_custom_call.1} parent=1 // pred_region
      %211 = dma.done [#allocation12], 2048
    $region97: #{tpu_custom_call.1} parent=1 // pred_fallthru
      _
    // Predicated region
    $region98: #{tpu_custom_call.1} parent=1 // pred_check
      _
    $region99: #{tpu_custom_call.1} parent=1 // pred_check_branch
      %213 = sbr.rel (0) target = $region101
    $region100: #{tpu_custom_call.1} parent=1 // pred_region
      %215 = dma.done [#allocation15], 2048
    $region101: #{tpu_custom_call.1} parent=1 // pred_fallthru
      _
    // Predicated region
    $region102: #{tpu_custom_call.1} parent=1 // pred_check
      _
    $region103: #{tpu_custom_call.1} parent=1 // pred_check_branch
      %217 = sbr.rel (0) target = $region105
    $region104: #{tpu_custom_call.1} parent=1 // pred_region
      %219 = dma.done [#allocation15], 2048
    $region105: #{tpu_custom_call.1} parent=1 // pred_fallthru
      _
    // Predicated region
    $region106: #{tpu_custom_call.1} parent=1 // pred_check
      _
    $region107: #{tpu_custom_call.1} parent=1 // pred_check_branch
      %221 = sbr.rel (0) target = $region109
    $region108: #{tpu_custom_call.1} parent=1 // pred_region
      %223 = dma.done [#allocation18], 2048
    $region109: #{tpu_custom_call.1} parent=1 // pred_fallthru
      _
    // Predicated region
    $region110: #{tpu_custom_call.1} parent=1 // pred_check
      _
    $region111: #{tpu_custom_call.1} parent=1 // pred_check_branch
      %225 = sbr.rel (0) target = $region113
    $region112: #{tpu_custom_call.1} parent=1 // pred_region
      %227 = dma.done [#allocation18], 2048
    $region113: #{tpu_custom_call.1} parent=1 // pred_fallthru
      _
    %v228 = vld [vmem:[#allocation2] sm:$0xff]
    %v229 = vld [vmem:[#allocation2 + $0x8] sm:$0xff]
    %v230 = vld [vmem:[#allocation5] sm:$0xff]
    %v231 = vld [vmem:[#allocation5 + $0x8] sm:$0xff]
    %v232 = vld [vmem:[#allocation7] sm:$0xff]
    %v233 = vld [vmem:[#allocation7 + $0x8] sm:$0xff]
    %vm234 = vcmask 64512
    %v235 = vsel %vm234, %v230, 0.0
    %236 = vadd.xlane.f32.xlu0 %v235
    %v237 = vpop.xlane.xlu0 %236
    %v238 = vsel %vm234, %v231, 0.0
    %239 = vadd.xlane.f32.xlu0 %v238
    %v240 = vpop.xlane.xlu0 %239
    %v241 = vrcp.pop %v237
    %v242 = vrcp.pop %v240
    %v243 = vmul.f32 %v230, %v241
    %v244 = vmul.f32 %v231, %v242
    %v245 = vsel %vm234, %v232, 0.0
    %246 = vadd.xlane.f32.xlu0 %v245
    %v247 = vpop.xlane.xlu0 %246
    %v248 = vsel %vm234, %v233, 0.0
    %249 = vadd.xlane.f32.xlu0 %v248
    %v250 = vpop.xlane.xlu0 %249
    %v251 = vrcp.pop %v247
    %v252 = vrcp.pop %v250
    %v253 = vmul.f32 %v232, %v251
    %v254 = vmul.f32 %v233, %v252
    %v255 = vperm.slane %v243, 0
    %v256 = vlaneseq
    %v257 = vshrl.u32 %v256, 7
    %259 = vset.pattern.permute.xlu0 %v257
    %260 = vperm.xlu0 %259, %v255
    %v261 = vpop.permute.xlu0 %260
    %v262 = vperm.slane %v243, 1
    %v263 = vlaneseq
    %v264 = vshrl.u32 %v263, 7
    %266 = vset.pattern.permute.xlu0 %v264
    %267 = vperm.xlu0 %266, %v262
    %v268 = vpop.permute.xlu0 %267
    %v269 = vperm.slane %v243, 2
    %v270 = vlaneseq
    %v271 = vshrl.u32 %v270, 7
    %273 = vset.pattern.permute.xlu0 %v271
    %274 = vperm.xlu0 %273, %v269
    %v275 = vpop.permute.xlu0 %274
    %v276 = vperm.slane %v243, 3
    %v277 = vlaneseq
    %v278 = vshrl.u32 %v277, 7
    %280 = vset.pattern.permute.xlu0 %v278
    %281 = vperm.xlu0 %280, %v276
    %v282 = vpop.permute.xlu0 %281
    %v283 = vperm.slane %v243, 4
    %v284 = vlaneseq
    %v285 = vshrl.u32 %v284, 7
    %287 = vset.pattern.permute.xlu0 %v285
    %288 = vperm.xlu0 %287, %v283
    %v289 = vpop.permute.xlu0 %288
    %v290 = vperm.slane %v243, 5
    %v291 = vlaneseq
    %v292 = vshrl.u32 %v291, 7
    %294 = vset.pattern.permute.xlu0 %v292
    %295 = vperm.xlu0 %294, %v290
    %v296 = vpop.permute.xlu0 %295
    %v297 = vperm.slane %v243, 6
    %v298 = vlaneseq
    %v299 = vshrl.u32 %v298, 7
    %301 = vset.pattern.permute.xlu0 %v299
    %302 = vperm.xlu0 %301, %v297
    %v303 = vpop.permute.xlu0 %302
    %v304 = vperm.slane %v243, 7
    %v305 = vlaneseq
    %v306 = vshrl.u32 %v305, 7
    %308 = vset.pattern.permute.xlu0 %v306
    %309 = vperm.xlu0 %308, %v304
    %v310 = vpop.permute.xlu0 %309
    %v311 = vperm.slane %v244, 0
    %v312 = vlaneseq
    %v313 = vshrl.u32 %v312, 7
    %315 = vset.pattern.permute.xlu0 %v313
    %316 = vperm.xlu0 %315, %v311
    %v317 = vpop.permute.xlu0 %316
    %v318 = vperm.slane %v244, 1
    %v319 = vlaneseq
    %v320 = vshrl.u32 %v319, 7
    %322 = vset.pattern.permute.xlu0 %v320
    %323 = vperm.xlu0 %322, %v318
    %v324 = vpop.permute.xlu0 %323
    %v325 = vperm.slane %v244, 2
    %v326 = vlaneseq
    %v327 = vshrl.u32 %v326, 7
    %329 = vset.pattern.permute.xlu0 %v327
    %330 = vperm.xlu0 %329, %v325
    %v331 = vpop.permute.xlu0 %330
    %v332 = vperm.slane %v244, 3
    %v333 = vlaneseq
    %v334 = vshrl.u32 %v333, 7
    %336 = vset.pattern.permute.xlu0 %v334
    %337 = vperm.xlu0 %336, %v332
    %v338 = vpop.permute.xlu0 %337
    %v339 = vperm.slane %v244, 4
    %v340 = vlaneseq
    %v341 = vshrl.u32 %v340, 7
    %343 = vset.pattern.permute.xlu0 %v341
    %344 = vperm.xlu0 %343, %v339
    %v345 = vpop.permute.xlu0 %344
    %v346 = vperm.slane %v244, 5
    %v347 = vlaneseq
    %v348 = vshrl.u32 %v347, 7
    %350 = vset.pattern.permute.xlu0 %v348
    %351 = vperm.xlu0 %350, %v346
    %v352 = vpop.permute.xlu0 %351
    %v353 = vperm.slane %v244, 6
    %v354 = vlaneseq
    %v355 = vshrl.u32 %v354, 7
    %357 = vset.pattern.permute.xlu0 %v355
    %358 = vperm.xlu0 %357, %v353
    %v359 = vpop.permute.xlu0 %358
    %v360 = vperm.slane %v244, 7
    %v361 = vlaneseq
    %v362 = vshrl.u32 %v361, 7
    %364 = vset.pattern.permute.xlu0 %v362
    %365 = vperm.xlu0 %364, %v360
    %v366 = vpop.permute.xlu0 %365
    %v367 = vmul.f32 %v261, %v228
    %v368 = vmul.f32 %v268, %v228
    %v369 = vmul.f32 %v275, %v228
    %v370 = vmul.f32 %v282, %v228
    %v371 = vmul.f32 %v289, %v228
    %v372 = vmul.f32 %v296, %v228
    %v373 = vmul.f32 %v303, %v228
    %v374 = vmul.f32 %v310, %v228
    %v375 = vmul.f32 %v317, %v229
    %v376 = vmul.f32 %v324, %v229
    %v377 = vmul.f32 %v331, %v229
    %v378 = vmul.f32 %v338, %v229
    %v379 = vmul.f32 %v345, %v229
    %v380 = vmul.f32 %v352, %v229
    %v381 = vmul.f32 %v359, %v229
    %v382 = vmul.f32 %v366, %v229
    %v383 = vrot.slane %v367, 4
    %v384 = vadd.f32 %v367, %v383
    %v385 = vrot.slane %v384, 2
    %v386 = vadd.f32 %v384, %v385
    %v387 = vrot.slane %v386, 1
    %v388 = vadd.f32 %v386, %v387
    %v389 = vrot.slane %v368, 4
    %v390 = vadd.f32 %v368, %v389
    %v391 = vrot.slane %v390, 2
    %v392 = vadd.f32 %v390, %v391
    %v393 = vrot.slane %v392, 1
    %v394 = vadd.f32 %v392, %v393
    %v395 = vrot.slane %v369, 4
    %v396 = vadd.f32 %v369, %v395
    %v397 = vrot.slane %v396, 2
    %v398 = vadd.f32 %v396, %v397
    %v399 = vrot.slane %v398, 1
    %v400 = vadd.f32 %v398, %v399
    %v401 = vrot.slane %v370, 4
    %v402 = vadd.f32 %v370, %v401
    %v403 = vrot.slane %v402, 2
    %v404 = vadd.f32 %v402, %v403
    %v405 = vrot.slane %v404, 1
    %v406 = vadd.f32 %v404, %v405
    %v407 = vrot.slane %v371, 4
    %v408 = vadd.f32 %v371, %v407
    %v409 = vrot.slane %v408, 2
    %v410 = vadd.f32 %v408, %v409
    %v411 = vrot.slane %v410, 1
    %v412 = vadd.f32 %v410, %v411
    %v413 = vrot.slane %v372, 4
    %v414 = vadd.f32 %v372, %v413
    %v415 = vrot.slane %v414, 2
    %v416 = vadd.f32 %v414, %v415
    %v417 = vrot.slane %v416, 1
    %v418 = vadd.f32 %v416, %v417
    %v419 = vrot.slane %v373, 4
    %v420 = vadd.f32 %v373, %v419
    %v421 = vrot.slane %v420, 2
    %v422 = vadd.f32 %v420, %v421
    %v423 = vrot.slane %v422, 1
    %v424 = vadd.f32 %v422, %v423
    %v425 = vrot.slane %v374, 4
    %v426 = vadd.f32 %v374, %v425
    %v427 = vrot.slane %v426, 2
    %v428 = vadd.f32 %v426, %v427
    %v429 = vrot.slane %v428, 1
    %v430 = vadd.f32 %v428, %v429
    %v431 = vrot.slane %v375, 4
    %v432 = vadd.f32 %v375, %v431
    %v433 = vrot.slane %v432, 2
    %v434 = vadd.f32 %v432, %v433
    %v435 = vrot.slane %v434, 1
    %v436 = vadd.f32 %v434, %v435
    %v437 = vrot.slane %v376, 4
    %v438 = vadd.f32 %v376, %v437
    %v439 = vrot.slane %v438, 2
    %v440 = vadd.f32 %v438, %v439
    %v441 = vrot.slane %v440, 1
    %v442 = vadd.f32 %v440, %v441
    %v443 = vrot.slane %v377, 4
    %v444 = vadd.f32 %v377, %v443
    %v445 = vrot.slane %v444, 2
    %v446 = vadd.f32 %v444, %v445
    %v447 = vrot.slane %v446, 1
    %v448 = vadd.f32 %v446, %v447
    %v449 = vrot.slane %v378, 4
    %v450 = vadd.f32 %v378, %v449
    %v451 = vrot.slane %v450, 2
    %v452 = vadd.f32 %v450, %v451
    %v453 = vrot.slane %v452, 1
    %v454 = vadd.f32 %v452, %v453
    %v455 = vrot.slane %v379, 4
    %v456 = vadd.f32 %v379, %v455
    %v457 = vrot.slane %v456, 2
    %v458 = vadd.f32 %v456, %v457
    %v459 = vrot.slane %v458, 1
    %v460 = vadd.f32 %v458, %v459
    %v461 = vrot.slane %v380, 4
    %v462 = vadd.f32 %v380, %v461
    %v463 = vrot.slane %v462, 2
    %v464 = vadd.f32 %v462, %v463
    %v465 = vrot.slane %v464, 1
    %v466 = vadd.f32 %v464, %v465
    %v467 = vrot.slane %v381, 4
    %v468 = vadd.f32 %v381, %v467
    %v469 = vrot.slane %v468, 2
    %v470 = vadd.f32 %v468, %v469
    %v471 = vrot.slane %v470, 1
    %v472 = vadd.f32 %v470, %v471
    %v473 = vrot.slane %v382, 4
    %v474 = vadd.f32 %v382, %v473
    %v475 = vrot.slane %v474, 2
    %v476 = vadd.f32 %v474, %v475
    %v477 = vrot.slane %v476, 1
    %v478 = vadd.f32 %v476, %v477
    %v479 = vld [vmem:[#allocation8] sm:$0xff]
    %v480 = vld [vmem:[#allocation8 + $0x8] sm:$0xff]
    %v481 = vld [vmem:[#allocation8 + $0x10] sm:$0xff]
    %v482 = vld [vmem:[#allocation8 + $0x18] sm:$0xff]
    %v483 = vld [vmem:[#allocation8 + $0x20] sm:$0xff]
    %v484 = vld [vmem:[#allocation8 + $0x28] sm:$0xff]
    %v485 = vld [vmem:[#allocation8 + $0x30] sm:$0xff]
    %v486 = vld [vmem:[#allocation8 + $0x38] sm:$0xff]
    %v487 = vld [vmem:[#allocation8 + $0x40] sm:$0xff]
    %v488 = vld [vmem:[#allocation8 + $0x48] sm:$0xff]
    %v489 = vld [vmem:[#allocation8 + $0x50] sm:$0xff]
    %v490 = vld [vmem:[#allocation8 + $0x58] sm:$0xff]
    %v491 = vld [vmem:[#allocation8 + $0x60] sm:$0xff]
    %v492 = vld [vmem:[#allocation8 + $0x68] sm:$0xff]
    %v493 = vld [vmem:[#allocation8 + $0x70] sm:$0xff]
    %v494 = vld [vmem:[#allocation8 + $0x78] sm:$0xff]
    %v495 = vld [vmem:[%s4] sm:$0x1]
    %v497 = vperm.slane %v495, 0
    %vm515 = vcmask 1041409
    %v516 = vsel %vm515, %v394, %v388
    %vm517 = vcmask 1042434
    %v518 = vsel %vm517, %v400, %v516
    %vm519 = vcmask 1043459
    %v520 = vsel %vm519, %v406, %v518
    %vm521 = vcmask 1044484
    %v522 = vsel %vm521, %v412, %v520
    %vm523 = vcmask 1045509
    %v524 = vsel %vm523, %v418, %v522
    %vm525 = vcmask 1046534
    %v526 = vsel %vm525, %v424, %v524
    %vm527 = vcmask 1047559
    %v528 = vsel %vm527, %v430, %v526
    %v529 = vsel %vm515, %v442, %v436
    %v530 = vsel %vm517, %v448, %v529
    %v531 = vsel %vm519, %v454, %v530
    %v532 = vsel %vm521, %v460, %v531
    %v533 = vsel %vm523, %v466, %v532
    %v534 = vsel %vm525, %v472, %v533
    %v535 = vsel %vm527, %v478, %v534
    %538 = vmatpush.msra.mxu0 %v494
    %539 = vmatpush.msra.mxu0 %v493
    %540 = vmatpush.msra.mxu0 %v492
    %541 = vmatpush.msra.mxu0 %v491
    %542 = vmatpush.msra.mxu0 %v490
    %543 = vmatpush.msra.mxu0 %v489
    %544 = vmatpush.msra.mxu0 %v488
    %545 = vmatpush.msra.mxu0 %v487
    %546 = vmatpush.msra.mxu0 %v486
    %547 = vmatpush.msra.mxu0 %v485
    %548 = vmatpush.msra.mxu0 %v484
    %549 = vmatpush.msra.mxu0 %v483
    %550 = vmatpush.msra.mxu0 %v482
    %551 = vmatpush.msra.mxu0 %v481
    %552 = vmatpush.msra.mxu0 %v480
    %553 = vmatpush.msra.mxu0 %v479
    %554 = vmatmul.f32.gmra.mxu0 %v528
    %v555 = vpop.f32.mrf.mxu0
    %v556 = vadd.f32 %v497, %v555
    %557 = vmatmul.f32.gmra.mxu0 %v535
    %v558 = vpop.f32.mrf.mxu0
    %v559 = vadd.f32 %v497, %v558
    %560 = vdwg.mxu0
    %v561 = vmax.f32 %v556, 0.0
    %v562 = vmax.f32 %v559, 0.0
    %v563 = vmul.f32 %v261, %v561
    %v564 = vmul.f32 %v268, %v561
    %v565 = vmul.f32 %v275, %v561
    %v566 = vmul.f32 %v282, %v561
    %v567 = vmul.f32 %v289, %v561
    %v568 = vmul.f32 %v296, %v561
    %v569 = vmul.f32 %v303, %v561
    %v570 = vmul.f32 %v310, %v561
    %v571 = vmul.f32 %v317, %v562
    %v572 = vmul.f32 %v324, %v562
    %v573 = vmul.f32 %v331, %v562
    %v574 = vmul.f32 %v338, %v562
    %v575 = vmul.f32 %v345, %v562
    %v576 = vmul.f32 %v352, %v562
    %v577 = vmul.f32 %v359, %v562
    %v578 = vmul.f32 %v366, %v562
    %v579 = vrot.slane %v563, 4
    %v580 = vadd.f32 %v563, %v579
    %v581 = vrot.slane %v580, 2
    %v582 = vadd.f32 %v580, %v581
    %v583 = vrot.slane %v582, 1
    %v584 = vadd.f32 %v582, %v583
    %v585 = vrot.slane %v564, 4
    %v586 = vadd.f32 %v564, %v585
    %v587 = vrot.slane %v586, 2
    %v588 = vadd.f32 %v586, %v587
    %v589 = vrot.slane %v588, 1
    %v590 = vadd.f32 %v588, %v589
    %v591 = vrot.slane %v565, 4
    %v592 = vadd.f32 %v565, %v591
    %v593 = vrot.slane %v592, 2
    %v594 = vadd.f32 %v592, %v593
    %v595 = vrot.slane %v594, 1
    %v596 = vadd.f32 %v594, %v595
    %v597 = vrot.slane %v566, 4
    %v598 = vadd.f32 %v566, %v597
    %v599 = vrot.slane %v598, 2
    %v600 = vadd.f32 %v598, %v599
    %v601 = vrot.slane %v600, 1
    %v602 = vadd.f32 %v600, %v601
    %v603 = vrot.slane %v567, 4
    %v604 = vadd.f32 %v567, %v603
    %v605 = vrot.slane %v604, 2
    %v606 = vadd.f32 %v604, %v605
    %v607 = vrot.slane %v606, 1
    %v608 = vadd.f32 %v606, %v607
    %v609 = vrot.slane %v568, 4
    %v610 = vadd.f32 %v568, %v609
    %v611 = vrot.slane %v610, 2
    %v612 = vadd.f32 %v610, %v611
    %v613 = vrot.slane %v612, 1
    %v614 = vadd.f32 %v612, %v613
    %v615 = vrot.slane %v569, 4
    %v616 = vadd.f32 %v569, %v615
    %v617 = vrot.slane %v616, 2
    %v618 = vadd.f32 %v616, %v617
    %v619 = vrot.slane %v618, 1
    %v620 = vadd.f32 %v618, %v619
    %v621 = vrot.slane %v570, 4
    %v622 = vadd.f32 %v570, %v621
    %v623 = vrot.slane %v622, 2
    %v624 = vadd.f32 %v622, %v623
    %v625 = vrot.slane %v624, 1
    %v626 = vadd.f32 %v624, %v625
    %v627 = vrot.slane %v571, 4
    %v628 = vadd.f32 %v571, %v627
    %v629 = vrot.slane %v628, 2
    %v630 = vadd.f32 %v628, %v629
    %v631 = vrot.slane %v630, 1
    %v632 = vadd.f32 %v630, %v631
    %v633 = vrot.slane %v572, 4
    %v634 = vadd.f32 %v572, %v633
    %v635 = vrot.slane %v634, 2
    %v636 = vadd.f32 %v634, %v635
    %v637 = vrot.slane %v636, 1
    %v638 = vadd.f32 %v636, %v637
    %v639 = vrot.slane %v573, 4
    %v640 = vadd.f32 %v573, %v639
    %v641 = vrot.slane %v640, 2
    %v642 = vadd.f32 %v640, %v641
    %v643 = vrot.slane %v642, 1
    %v644 = vadd.f32 %v642, %v643
    %v645 = vrot.slane %v574, 4
    %v646 = vadd.f32 %v574, %v645
    %v647 = vrot.slane %v646, 2
    %v648 = vadd.f32 %v646, %v647
    %v649 = vrot.slane %v648, 1
    %v650 = vadd.f32 %v648, %v649
    %v651 = vrot.slane %v575, 4
    %v652 = vadd.f32 %v575, %v651
    %v653 = vrot.slane %v652, 2
    %v654 = vadd.f32 %v652, %v653
    %v655 = vrot.slane %v654, 1
    %v656 = vadd.f32 %v654, %v655
    %v657 = vrot.slane %v576, 4
    %v658 = vadd.f32 %v576, %v657
    %v659 = vrot.slane %v658, 2
    %v660 = vadd.f32 %v658, %v659
    %v661 = vrot.slane %v660, 1
    %v662 = vadd.f32 %v660, %v661
    %v663 = vrot.slane %v577, 4
    %v664 = vadd.f32 %v577, %v663
    %v665 = vrot.slane %v664, 2
    %v666 = vadd.f32 %v664, %v665
    %v667 = vrot.slane %v666, 1
    %v668 = vadd.f32 %v666, %v667
    %v669 = vrot.slane %v578, 4
    %v670 = vadd.f32 %v578, %v669
    %v671 = vrot.slane %v670, 2
    %v672 = vadd.f32 %v670, %v671
    %v673 = vrot.slane %v672, 1
    %v674 = vadd.f32 %v672, %v673
    %v675 = vld [vmem:[#allocation10] sm:$0xff]
    %v676 = vld [vmem:[#allocation10 + $0x8] sm:$0xff]
    %v677 = vld [vmem:[#allocation10 + $0x10] sm:$0xff]
    %v678 = vld [vmem:[#allocation10 + $0x18] sm:$0xff]
    %v679 = vld [vmem:[#allocation10 + $0x20] sm:$0xff]
    %v680 = vld [vmem:[#allocation10 + $0x28] sm:$0xff]
    %v681 = vld [vmem:[#allocation10 + $0x30] sm:$0xff]
    %v682 = vld [vmem:[#allocation10 + $0x38] sm:$0xff]
    %v683 = vld [vmem:[#allocation10 + $0x40] sm:$0xff]
    %v684 = vld [vmem:[#allocation10 + $0x48] sm:$0xff]
    %v685 = vld [vmem:[#allocation10 + $0x50] sm:$0xff]
    %v686 = vld [vmem:[#allocation10 + $0x58] sm:$0xff]
    %v687 = vld [vmem:[#allocation10 + $0x60] sm:$0xff]
    %v688 = vld [vmem:[#allocation10 + $0x68] sm:$0xff]
    %v689 = vld [vmem:[#allocation10 + $0x70] sm:$0xff]
    %v690 = vld [vmem:[#allocation10 + $0x78] sm:$0xff]
    %v691 = vld [vmem:[%s6] sm:$0x1]
    %v693 = vperm.slane %v691, 0
    %v711 = vsel %vm515, %v590, %v584
    %v712 = vsel %vm517, %v596, %v711
    %v713 = vsel %vm519, %v602, %v712
    %v714 = vsel %vm521, %v608, %v713
    %v715 = vsel %vm523, %v614, %v714
    %v716 = vsel %vm525, %v620, %v715
    %v717 = vsel %vm527, %v626, %v716
    %v718 = vsel %vm515, %v638, %v632
    %v719 = vsel %vm517, %v644, %v718
    %v720 = vsel %vm519, %v650, %v719
    %v721 = vsel %vm521, %v656, %v720
    %v722 = vsel %vm523, %v662, %v721
    %v723 = vsel %vm525, %v668, %v722
    %v724 = vsel %vm527, %v674, %v723
    %727 = vmatpush.msra.mxu0 %v690
    %728 = vmatpush.msra.mxu0 %v689
    %729 = vmatpush.msra.mxu0 %v688
    %730 = vmatpush.msra.mxu0 %v687
    %731 = vmatpush.msra.mxu0 %v686
    %732 = vmatpush.msra.mxu0 %v685
    %733 = vmatpush.msra.mxu0 %v684
    %734 = vmatpush.msra.mxu0 %v683
    %735 = vmatpush.msra.mxu0 %v682
    %736 = vmatpush.msra.mxu0 %v681
    %737 = vmatpush.msra.mxu0 %v680
    %738 = vmatpush.msra.mxu0 %v679
    %739 = vmatpush.msra.mxu0 %v678
    %740 = vmatpush.msra.mxu0 %v677
    %741 = vmatpush.msra.mxu0 %v676
    %742 = vmatpush.msra.mxu0 %v675
    %743 = vmatmul.f32.gmra.mxu0 %v717
    %v744 = vpop.f32.mrf.mxu0
    %v745 = vadd.f32 %v693, %v744
    %746 = vmatmul.f32.gmra.mxu0 %v724
    %v747 = vpop.f32.mrf.mxu0
    %v748 = vadd.f32 %v693, %v747
    %749 = vdwg.mxu0
    %v750 = vmax.f32 %v745, 0.0
    %v751 = vmax.f32 %v748, 0.0
    %v752 = vperm.slane %v253, 0
    %v753 = vlaneseq
    %v754 = vshrl.u32 %v753, 7
    %756 = vset.pattern.permute.xlu0 %v754
    %757 = vperm.xlu0 %756, %v752
    %v758 = vpop.permute.xlu0 %757
    %v759 = vperm.slane %v253, 1
    %v760 = vlaneseq
    %v761 = vshrl.u32 %v760, 7
    %763 = vset.pattern.permute.xlu0 %v761
    %764 = vperm.xlu0 %763, %v759
    %v765 = vpop.permute.xlu0 %764
    %v766 = vperm.slane %v253, 2
    %v767 = vlaneseq
    %v768 = vshrl.u32 %v767, 7
    %770 = vset.pattern.permute.xlu0 %v768
    %771 = vperm.xlu0 %770, %v766
    %v772 = vpop.permute.xlu0 %771
    %v773 = vperm.slane %v253, 3
    %v774 = vlaneseq
    %v775 = vshrl.u32 %v774, 7
    %777 = vset.pattern.permute.xlu0 %v775
    %778 = vperm.xlu0 %777, %v773
    %v779 = vpop.permute.xlu0 %778
    %v780 = vperm.slane %v253, 4
    %v781 = vlaneseq
    %v782 = vshrl.u32 %v781, 7
    %784 = vset.pattern.permute.xlu0 %v782
    %785 = vperm.xlu0 %784, %v780
    %v786 = vpop.permute.xlu0 %785
    %v787 = vperm.slane %v253, 5
    %v788 = vlaneseq
    %v789 = vshrl.u32 %v788, 7
    %791 = vset.pattern.permute.xlu0 %v789
    %792 = vperm.xlu0 %791, %v787
    %v793 = vpop.permute.xlu0 %792
    %v794 = vperm.slane %v253, 6
    %v795 = vlaneseq
    %v796 = vshrl.u32 %v795, 7
    %798 = vset.pattern.permute.xlu0 %v796
    %799 = vperm.xlu0 %798, %v794
    %v800 = vpop.permute.xlu0 %799
    %v801 = vperm.slane %v253, 7
    %v802 = vlaneseq
    %v803 = vshrl.u32 %v802, 7
    %805 = vset.pattern.permute.xlu0 %v803
    %806 = vperm.xlu0 %805, %v801
    %v807 = vpop.permute.xlu0 %806
    %v808 = vperm.slane %v254, 0
    %v809 = vlaneseq
    %v810 = vshrl.u32 %v809, 7
    %812 = vset.pattern.permute.xlu0 %v810
    %813 = vperm.xlu0 %812, %v808
    %v814 = vpop.permute.xlu0 %813
    %v815 = vperm.slane %v254, 1
    %v816 = vlaneseq
    %v817 = vshrl.u32 %v816, 7
    %819 = vset.pattern.permute.xlu0 %v817
    %820 = vperm.xlu0 %819, %v815
    %v821 = vpop.permute.xlu0 %820
    %v822 = vperm.slane %v254, 2
    %v823 = vlaneseq
    %v824 = vshrl.u32 %v823, 7
    %826 = vset.pattern.permute.xlu0 %v824
    %827 = vperm.xlu0 %826, %v822
    %v828 = vpop.permute.xlu0 %827
    %v829 = vperm.slane %v254, 3
    %v830 = vlaneseq
    %v831 = vshrl.u32 %v830, 7
    %833 = vset.pattern.permute.xlu0 %v831
    %834 = vperm.xlu0 %833, %v829
    %v835 = vpop.permute.xlu0 %834
    %v836 = vperm.slane %v254, 4
    %v837 = vlaneseq
    %v838 = vshrl.u32 %v837, 7
    %840 = vset.pattern.permute.xlu0 %v838
    %841 = vperm.xlu0 %840, %v836
    %v842 = vpop.permute.xlu0 %841
    %v843 = vperm.slane %v254, 5
    %v844 = vlaneseq
    %v845 = vshrl.u32 %v844, 7
    %847 = vset.pattern.permute.xlu0 %v845
    %848 = vperm.xlu0 %847, %v843
    %v849 = vpop.permute.xlu0 %848
    %v850 = vperm.slane %v254, 6
    %v851 = vlaneseq
    %v852 = vshrl.u32 %v851, 7
    %854 = vset.pattern.permute.xlu0 %v852
    %855 = vperm.xlu0 %854, %v850
    %v856 = vpop.permute.xlu0 %855
    %v857 = vperm.slane %v254, 7
    %v858 = vlaneseq
    %v859 = vshrl.u32 %v858, 7
    %861 = vset.pattern.permute.xlu0 %v859
    %862 = vperm.xlu0 %861, %v857
    %v863 = vpop.permute.xlu0 %862
    %v864 = vmul.f32 %v758, %v228
    %v865 = vmul.f32 %v765, %v228
    %v866 = vmul.f32 %v772, %v228
    %v867 = vmul.f32 %v779, %v228
    %v868 = vmul.f32 %v786, %v228
    %v869 = vmul.f32 %v793, %v228
    %v870 = vmul.f32 %v800, %v228
    %v871 = vmul.f32 %v807, %v228
    %v872 = vmul.f32 %v814, %v229
    %v873 = vmul.f32 %v821, %v229
    %v874 = vmul.f32 %v828, %v229
    %v875 = vmul.f32 %v835, %v229
    %v876 = vmul.f32 %v842, %v229
    %v877 = vmul.f32 %v849, %v229
    %v878 = vmul.f32 %v856, %v229
    %v879 = vmul.f32 %v863, %v229
    %v880 = vrot.slane %v864, 4
    %v881 = vadd.f32 %v864, %v880
    %v882 = vrot.slane %v881, 2
    %v883 = vadd.f32 %v881, %v882
    %v884 = vrot.slane %v883, 1
    %v885 = vadd.f32 %v883, %v884
    %v886 = vrot.slane %v865, 4
    %v887 = vadd.f32 %v865, %v886
    %v888 = vrot.slane %v887, 2
    %v889 = vadd.f32 %v887, %v888
    %v890 = vrot.slane %v889, 1
    %v891 = vadd.f32 %v889, %v890
    %v892 = vrot.slane %v866, 4
    %v893 = vadd.f32 %v866, %v892
    %v894 = vrot.slane %v893, 2
    %v895 = vadd.f32 %v893, %v894
    %v896 = vrot.slane %v895, 1
    %v897 = vadd.f32 %v895, %v896
    %v898 = vrot.slane %v867, 4
    %v899 = vadd.f32 %v867, %v898
    %v900 = vrot.slane %v899, 2
    %v901 = vadd.f32 %v899, %v900
    %v902 = vrot.slane %v901, 1
    %v903 = vadd.f32 %v901, %v902
    %v904 = vrot.slane %v868, 4
    %v905 = vadd.f32 %v868, %v904
    %v906 = vrot.slane %v905, 2
    %v907 = vadd.f32 %v905, %v906
    %v908 = vrot.slane %v907, 1
    %v909 = vadd.f32 %v907, %v908
    %v910 = vrot.slane %v869, 4
    %v911 = vadd.f32 %v869, %v910
    %v912 = vrot.slane %v911, 2
    %v913 = vadd.f32 %v911, %v912
    %v914 = vrot.slane %v913, 1
    %v915 = vadd.f32 %v913, %v914
    %v916 = vrot.slane %v870, 4
    %v917 = vadd.f32 %v870, %v916
    %v918 = vrot.slane %v917, 2
    %v919 = vadd.f32 %v917, %v918
    %v920 = vrot.slane %v919, 1
    %v921 = vadd.f32 %v919, %v920
    %v922 = vrot.slane %v871, 4
    %v923 = vadd.f32 %v871, %v922
    %v924 = vrot.slane %v923, 2
    %v925 = vadd.f32 %v923, %v924
    %v926 = vrot.slane %v925, 1
    %v927 = vadd.f32 %v925, %v926
    %v928 = vrot.slane %v872, 4
    %v929 = vadd.f32 %v872, %v928
    %v930 = vrot.slane %v929, 2
    %v931 = vadd.f32 %v929, %v930
    %v932 = vrot.slane %v931, 1
    %v933 = vadd.f32 %v931, %v932
    %v934 = vrot.slane %v873, 4
    %v935 = vadd.f32 %v873, %v934
    %v936 = vrot.slane %v935, 2
    %v937 = vadd.f32 %v935, %v936
    %v938 = vrot.slane %v937, 1
    %v939 = vadd.f32 %v937, %v938
    %v940 = vrot.slane %v874, 4
    %v941 = vadd.f32 %v874, %v940
    %v942 = vrot.slane %v941, 2
    %v943 = vadd.f32 %v941, %v942
    %v944 = vrot.slane %v943, 1
    %v945 = vadd.f32 %v943, %v944
    %v946 = vrot.slane %v875, 4
    %v947 = vadd.f32 %v875, %v946
    %v948 = vrot.slane %v947, 2
    %v949 = vadd.f32 %v947, %v948
    %v950 = vrot.slane %v949, 1
    %v951 = vadd.f32 %v949, %v950
    %v952 = vrot.slane %v876, 4
    %v953 = vadd.f32 %v876, %v952
    %v954 = vrot.slane %v953, 2
    %v955 = vadd.f32 %v953, %v954
    %v956 = vrot.slane %v955, 1
    %v957 = vadd.f32 %v955, %v956
    %v958 = vrot.slane %v877, 4
    %v959 = vadd.f32 %v877, %v958
    %v960 = vrot.slane %v959, 2
    %v961 = vadd.f32 %v959, %v960
    %v962 = vrot.slane %v961, 1
    %v963 = vadd.f32 %v961, %v962
    %v964 = vrot.slane %v878, 4
    %v965 = vadd.f32 %v878, %v964
    %v966 = vrot.slane %v965, 2
    %v967 = vadd.f32 %v965, %v966
    %v968 = vrot.slane %v967, 1
    %v969 = vadd.f32 %v967, %v968
    %v970 = vrot.slane %v879, 4
    %v971 = vadd.f32 %v879, %v970
    %v972 = vrot.slane %v971, 2
    %v973 = vadd.f32 %v971, %v972
    %v974 = vrot.slane %v973, 1
    %v975 = vadd.f32 %v973, %v974
    %v976 = vld [vmem:[#allocation11] sm:$0xff]
    %v977 = vld [vmem:[#allocation11 + $0x8] sm:$0xff]
    %v978 = vld [vmem:[#allocation11 + $0x10] sm:$0xff]
    %v979 = vld [vmem:[#allocation11 + $0x18] sm:$0xff]
    %v980 = vld [vmem:[#allocation11 + $0x20] sm:$0xff]
    %v981 = vld [vmem:[#allocation11 + $0x28] sm:$0xff]
    %v982 = vld [vmem:[#allocation11 + $0x30] sm:$0xff]
    %v983 = vld [vmem:[#allocation11 + $0x38] sm:$0xff]
    %v984 = vld [vmem:[#allocation11 + $0x40] sm:$0xff]
    %v985 = vld [vmem:[#allocation11 + $0x48] sm:$0xff]
    %v986 = vld [vmem:[#allocation11 + $0x50] sm:$0xff]
    %v987 = vld [vmem:[#allocation11 + $0x58] sm:$0xff]
    %v988 = vld [vmem:[#allocation11 + $0x60] sm:$0xff]
    %v989 = vld [vmem:[#allocation11 + $0x68] sm:$0xff]
    %v990 = vld [vmem:[#allocation11 + $0x70] sm:$0xff]
    %v991 = vld [vmem:[#allocation11 + $0x78] sm:$0xff]
    %v992 = vld [vmem:[%s8] sm:$0x1]
    %v994 = vperm.slane %v992, 0
    %v1012 = vsel %vm515, %v891, %v885
    %v1013 = vsel %vm517, %v897, %v1012
    %v1014 = vsel %vm519, %v903, %v1013
    %v1015 = vsel %vm521, %v909, %v1014
    %v1016 = vsel %vm523, %v915, %v1015
    %v1017 = vsel %vm525, %v921, %v1016
    %v1018 = vsel %vm527, %v927, %v1017
    %v1019 = vsel %vm515, %v939, %v933
    %v1020 = vsel %vm517, %v945, %v1019
    %v1021 = vsel %vm519, %v951, %v1020
    %v1022 = vsel %vm521, %v957, %v1021
    %v1023 = vsel %vm523, %v963, %v1022
    %v1024 = vsel %vm525, %v969, %v1023
    %v1025 = vsel %vm527, %v975, %v1024
    %1028 = vmatpush.msra.mxu0 %v991
    %1029 = vmatpush.msra.mxu0 %v990
    %1030 = vmatpush.msra.mxu0 %v989
    %1031 = vmatpush.msra.mxu0 %v988
    %1032 = vmatpush.msra.mxu0 %v987
    %1033 = vmatpush.msra.mxu0 %v986
    %1034 = vmatpush.msra.mxu0 %v985
    %1035 = vmatpush.msra.mxu0 %v984
    %1036 = vmatpush.msra.mxu0 %v983
    %1037 = vmatpush.msra.mxu0 %v982
    %1038 = vmatpush.msra.mxu0 %v981
    %1039 = vmatpush.msra.mxu0 %v980
    %1040 = vmatpush.msra.mxu0 %v979
    %1041 = vmatpush.msra.mxu0 %v978
    %1042 = vmatpush.msra.mxu0 %v977
    %1043 = vmatpush.msra.mxu0 %v976
    %1044 = vmatmul.f32.gmra.mxu0 %v1018
    %v1045 = vpop.f32.mrf.mxu0
    %v1046 = vadd.f32 %v994, %v1045
    %1047 = vmatmul.f32.gmra.mxu0 %v1025
    %v1048 = vpop.f32.mrf.mxu0
    %v1049 = vadd.f32 %v994, %v1048
    %1050 = vdwg.mxu0
    %v1051 = vmax.f32 %v1046, 0.0
    %v1052 = vmax.f32 %v1049, 0.0
    %v1053 = vmul.f32 %v758, %v1051
    %v1054 = vmul.f32 %v765, %v1051
    %v1055 = vmul.f32 %v772, %v1051
    %v1056 = vmul.f32 %v779, %v1051
    %v1057 = vmul.f32 %v786, %v1051
    %v1058 = vmul.f32 %v793, %v1051
    %v1059 = vmul.f32 %v800, %v1051
    %v1060 = vmul.f32 %v807, %v1051
    %v1061 = vmul.f32 %v814, %v1052
    %v1062 = vmul.f32 %v821, %v1052
    %v1063 = vmul.f32 %v828, %v1052
    %v1064 = vmul.f32 %v835, %v1052
    %v1065 = vmul.f32 %v842, %v1052
    %v1066 = vmul.f32 %v849, %v1052
    %v1067 = vmul.f32 %v856, %v1052
    %v1068 = vmul.f32 %v863, %v1052
    %v1069 = vrot.slane %v1053, 4
    %v1070 = vadd.f32 %v1053, %v1069
    %v1071 = vrot.slane %v1070, 2
    %v1072 = vadd.f32 %v1070, %v1071
    %v1073 = vrot.slane %v1072, 1
    %v1074 = vadd.f32 %v1072, %v1073
    %v1075 = vrot.slane %v1054, 4
    %v1076 = vadd.f32 %v1054, %v1075
    %v1077 = vrot.slane %v1076, 2
    %v1078 = vadd.f32 %v1076, %v1077
    %v1079 = vrot.slane %v1078, 1
    %v1080 = vadd.f32 %v1078, %v1079
    %v1081 = vrot.slane %v1055, 4
    %v1082 = vadd.f32 %v1055, %v1081
    %v1083 = vrot.slane %v1082, 2
    %v1084 = vadd.f32 %v1082, %v1083
    %v1085 = vrot.slane %v1084, 1
    %v1086 = vadd.f32 %v1084, %v1085
    %v1087 = vrot.slane %v1056, 4
    %v1088 = vadd.f32 %v1056, %v1087
    %v1089 = vrot.slane %v1088, 2
    %v1090 = vadd.f32 %v1088, %v1089
    %v1091 = vrot.slane %v1090, 1
    %v1092 = vadd.f32 %v1090, %v1091
    %v1093 = vrot.slane %v1057, 4
    %v1094 = vadd.f32 %v1057, %v1093
    %v1095 = vrot.slane %v1094, 2
    %v1096 = vadd.f32 %v1094, %v1095
    %v1097 = vrot.slane %v1096, 1
    %v1098 = vadd.f32 %v1096, %v1097
    %v1099 = vrot.slane %v1058, 4
    %v1100 = vadd.f32 %v1058, %v1099
    %v1101 = vrot.slane %v1100, 2
    %v1102 = vadd.f32 %v1100, %v1101
    %v1103 = vrot.slane %v1102, 1
    %v1104 = vadd.f32 %v1102, %v1103
    %v1105 = vrot.slane %v1059, 4
    %v1106 = vadd.f32 %v1059, %v1105
    %v1107 = vrot.slane %v1106, 2
    %v1108 = vadd.f32 %v1106, %v1107
    %v1109 = vrot.slane %v1108, 1
    %v1110 = vadd.f32 %v1108, %v1109
    %v1111 = vrot.slane %v1060, 4
    %v1112 = vadd.f32 %v1060, %v1111
    %v1113 = vrot.slane %v1112, 2
    %v1114 = vadd.f32 %v1112, %v1113
    %v1115 = vrot.slane %v1114, 1
    %v1116 = vadd.f32 %v1114, %v1115
    %v1117 = vrot.slane %v1061, 4
    %v1118 = vadd.f32 %v1061, %v1117
    %v1119 = vrot.slane %v1118, 2
    %v1120 = vadd.f32 %v1118, %v1119
    %v1121 = vrot.slane %v1120, 1
    %v1122 = vadd.f32 %v1120, %v1121
    %v1123 = vrot.slane %v1062, 4
    %v1124 = vadd.f32 %v1062, %v1123
    %v1125 = vrot.slane %v1124, 2
    %v1126 = vadd.f32 %v1124, %v1125
    %v1127 = vrot.slane %v1126, 1
    %v1128 = vadd.f32 %v1126, %v1127
    %v1129 = vrot.slane %v1063, 4
    %v1130 = vadd.f32 %v1063, %v1129
    %v1131 = vrot.slane %v1130, 2
    %v1132 = vadd.f32 %v1130, %v1131
    %v1133 = vrot.slane %v1132, 1
    %v1134 = vadd.f32 %v1132, %v1133
    %v1135 = vrot.slane %v1064, 4
    %v1136 = vadd.f32 %v1064, %v1135
    %v1137 = vrot.slane %v1136, 2
    %v1138 = vadd.f32 %v1136, %v1137
    %v1139 = vrot.slane %v1138, 1
    %v1140 = vadd.f32 %v1138, %v1139
    %v1141 = vrot.slane %v1065, 4
    %v1142 = vadd.f32 %v1065, %v1141
    %v1143 = vrot.slane %v1142, 2
    %v1144 = vadd.f32 %v1142, %v1143
    %v1145 = vrot.slane %v1144, 1
    %v1146 = vadd.f32 %v1144, %v1145
    %v1147 = vrot.slane %v1066, 4
    %v1148 = vadd.f32 %v1066, %v1147
    %v1149 = vrot.slane %v1148, 2
    %v1150 = vadd.f32 %v1148, %v1149
    %v1151 = vrot.slane %v1150, 1
    %v1152 = vadd.f32 %v1150, %v1151
    %v1153 = vrot.slane %v1067, 4
    %v1154 = vadd.f32 %v1067, %v1153
    %v1155 = vrot.slane %v1154, 2
    %v1156 = vadd.f32 %v1154, %v1155
    %v1157 = vrot.slane %v1156, 1
    %v1158 = vadd.f32 %v1156, %v1157
    %v1159 = vrot.slane %v1068, 4
    %v1160 = vadd.f32 %v1068, %v1159
    %v1161 = vrot.slane %v1160, 2
    %v1162 = vadd.f32 %v1160, %v1161
    %v1163 = vrot.slane %v1162, 1
    %v1164 = vadd.f32 %v1162, %v1163
    %v1165 = vld [vmem:[#allocation13] sm:$0xff]
    %v1166 = vld [vmem:[#allocation13 + $0x8] sm:$0xff]
    %v1167 = vld [vmem:[#allocation13 + $0x10] sm:$0xff]
    %v1168 = vld [vmem:[#allocation13 + $0x18] sm:$0xff]
    %v1169 = vld [vmem:[#allocation13 + $0x20] sm:$0xff]
    %v1170 = vld [vmem:[#allocation13 + $0x28] sm:$0xff]
    %v1171 = vld [vmem:[#allocation13 + $0x30] sm:$0xff]
    %v1172 = vld [vmem:[#allocation13 + $0x38] sm:$0xff]
    %v1173 = vld [vmem:[#allocation13 + $0x40] sm:$0xff]
    %v1174 = vld [vmem:[#allocation13 + $0x48] sm:$0xff]
    %v1175 = vld [vmem:[#allocation13 + $0x50] sm:$0xff]
    %v1176 = vld [vmem:[#allocation13 + $0x58] sm:$0xff]
    %v1177 = vld [vmem:[#allocation13 + $0x60] sm:$0xff]
    %v1178 = vld [vmem:[#allocation13 + $0x68] sm:$0xff]
    %v1179 = vld [vmem:[#allocation13 + $0x70] sm:$0xff]
    %v1180 = vld [vmem:[#allocation13 + $0x78] sm:$0xff]
    %v1181 = vld [vmem:[%s10] sm:$0x1]
    %v1183 = vperm.slane %v1181, 0
    %v1201 = vsel %vm515, %v1080, %v1074
    %v1202 = vsel %vm517, %v1086, %v1201
    %v1203 = vsel %vm519, %v1092, %v1202
    %v1204 = vsel %vm521, %v1098, %v1203
    %v1205 = vsel %vm523, %v1104, %v1204
    %v1206 = vsel %vm525, %v1110, %v1205
    %v1207 = vsel %vm527, %v1116, %v1206
    %v1208 = vsel %vm515, %v1128, %v1122
    %v1209 = vsel %vm517, %v1134, %v1208
    %v1210 = vsel %vm519, %v1140, %v1209
    %v1211 = vsel %vm521, %v1146, %v1210
    %v1212 = vsel %vm523, %v1152, %v1211
    %v1213 = vsel %vm525, %v1158, %v1212
    %v1214 = vsel %vm527, %v1164, %v1213
    %1217 = vmatpush.msra.mxu0 %v1180
    %1218 = vmatpush.msra.mxu0 %v1179
    %1219 = vmatpush.msra.mxu0 %v1178
    %1220 = vmatpush.msra.mxu0 %v1177
    %1221 = vmatpush.msra.mxu0 %v1176
    %1222 = vmatpush.msra.mxu0 %v1175
    %1223 = vmatpush.msra.mxu0 %v1174
    %1224 = vmatpush.msra.mxu0 %v1173
    %1225 = vmatpush.msra.mxu0 %v1172
    %1226 = vmatpush.msra.mxu0 %v1171
    %1227 = vmatpush.msra.mxu0 %v1170
    %1228 = vmatpush.msra.mxu0 %v1169
    %1229 = vmatpush.msra.mxu0 %v1168
    %1230 = vmatpush.msra.mxu0 %v1167
    %1231 = vmatpush.msra.mxu0 %v1166
    %1232 = vmatpush.msra.mxu0 %v1165
    %1233 = vmatmul.f32.gmra.mxu0 %v1207
    %v1234 = vpop.f32.mrf.mxu0
    %v1235 = vadd.f32 %v1183, %v1234
    %1236 = vmatmul.f32.gmra.mxu0 %v1214
    %v1237 = vpop.f32.mrf.mxu0
    %v1238 = vadd.f32 %v1183, %v1237
    %1239 = vdwg.mxu0
    %v1240 = vmax.f32 %v1235, 0.0
    %v1241 = vmax.f32 %v1238, 0.0
    %v1242 = vld [vmem:[#allocation14] sm:$0xff]
    %v1243 = vld [vmem:[#allocation14 + $0x8] sm:$0xff]
    %v1244 = vld [vmem:[#allocation14 + $0x10] sm:$0xff]
    %v1245 = vld [vmem:[#allocation14 + $0x18] sm:$0xff]
    %v1246 = vld [vmem:[#allocation14 + $0x20] sm:$0xff]
    %v1247 = vld [vmem:[#allocation14 + $0x28] sm:$0xff]
    %v1248 = vld [vmem:[#allocation14 + $0x30] sm:$0xff]
    %v1249 = vld [vmem:[#allocation14 + $0x38] sm:$0xff]
    %v1250 = vld [vmem:[#allocation14 + $0x40] sm:$0xff]
    %v1251 = vld [vmem:[#allocation14 + $0x48] sm:$0xff]
    %v1252 = vld [vmem:[#allocation14 + $0x50] sm:$0xff]
    %v1253 = vld [vmem:[#allocation14 + $0x58] sm:$0xff]
    %v1254 = vld [vmem:[#allocation14 + $0x60] sm:$0xff]
    %v1255 = vld [vmem:[#allocation14 + $0x68] sm:$0xff]
    %v1256 = vld [vmem:[#allocation14 + $0x70] sm:$0xff]
    %v1257 = vld [vmem:[#allocation14 + $0x78] sm:$0xff]
    %v1258 = vld [vmem:[#allocation16] sm:$0xff]
    %v1259 = vld [vmem:[#allocation16 + $0x8] sm:$0xff]
    %v1260 = vld [vmem:[#allocation16 + $0x10] sm:$0xff]
    %v1261 = vld [vmem:[#allocation16 + $0x18] sm:$0xff]
    %v1262 = vld [vmem:[#allocation16 + $0x20] sm:$0xff]
    %v1263 = vld [vmem:[#allocation16 + $0x28] sm:$0xff]
    %v1264 = vld [vmem:[#allocation16 + $0x30] sm:$0xff]
    %v1265 = vld [vmem:[#allocation16 + $0x38] sm:$0xff]
    %v1266 = vld [vmem:[#allocation16 + $0x40] sm:$0xff]
    %v1267 = vld [vmem:[#allocation16 + $0x48] sm:$0xff]
    %v1268 = vld [vmem:[#allocation16 + $0x50] sm:$0xff]
    %v1269 = vld [vmem:[#allocation16 + $0x58] sm:$0xff]
    %v1270 = vld [vmem:[#allocation16 + $0x60] sm:$0xff]
    %v1271 = vld [vmem:[#allocation16 + $0x68] sm:$0xff]
    %v1272 = vld [vmem:[#allocation16 + $0x70] sm:$0xff]
    %v1273 = vld [vmem:[#allocation16 + $0x78] sm:$0xff]
    %1274 = vmatpush.msra.mxu0 %v1273
    %1275 = vmatpush.msra.mxu0 %v1272
    %1276 = vmatpush.msra.mxu0 %v1271
    %1277 = vmatpush.msra.mxu0 %v1270
    %1278 = vmatpush.msra.mxu0 %v1269
    %1279 = vmatpush.msra.mxu0 %v1268
    %1280 = vmatpush.msra.mxu0 %v1267
    %1281 = vmatpush.msra.mxu0 %v1266
    %1282 = vmatpush.msra.mxu0 %v1265
    %1283 = vmatpush.msra.mxu0 %v1264
    %1284 = vmatpush.msra.mxu0 %v1263
    %1285 = vmatpush.msra.mxu0 %v1262
    %1286 = vmatpush.msra.mxu0 %v1261
    %1287 = vmatpush.msra.mxu0 %v1260
    %1288 = vmatpush.msra.mxu0 %v1259
    %1289 = vmatpush.msra.mxu0 %v1258
    %1290 = vmatmul.f32.gmra.mxu0 %v1240
    %v1291 = vpop.f32.mrf.mxu0
    %v1292 = vadd.f32 0.0, %v1291
    %1293 = vmatmul.f32.gmra.mxu0 %v1241
    %v1294 = vpop.f32.mrf.mxu0
    %v1295 = vadd.f32 0.0, %v1294
    %1296 = vdwg.mxu0
    %1297 = vmatpush.msra.mxu0 %v1257
    %1298 = vmatpush.msra.mxu0 %v1256
    %1299 = vmatpush.msra.mxu0 %v1255
    %1300 = vmatpush.msra.mxu0 %v1254
    %1301 = vmatpush.msra.mxu0 %v1253
    %1302 = vmatpush.msra.mxu0 %v1252
    %1303 = vmatpush.msra.mxu0 %v1251
    %1304 = vmatpush.msra.mxu0 %v1250
    %1305 = vmatpush.msra.mxu0 %v1249
    %1306 = vmatpush.msra.mxu0 %v1248
    %1307 = vmatpush.msra.mxu0 %v1247
    %1308 = vmatpush.msra.mxu0 %v1246
    %1309 = vmatpush.msra.mxu0 %v1245
    %1310 = vmatpush.msra.mxu0 %v1244
    %1311 = vmatpush.msra.mxu0 %v1243
    %1312 = vmatpush.msra.mxu0 %v1242
    %1313 = vmatmul.f32.gmra.mxu0 %v750
    %v1314 = vpop.f32.mrf.mxu0
    %v1315 = vadd.f32 %v1292, %v1314
    %1316 = vmatmul.f32.gmra.mxu0 %v751
    %v1317 = vpop.f32.mrf.mxu0
    %v1318 = vadd.f32 %v1295, %v1317
    %1319 = vdwg.mxu0
    %v1320 = vld [vmem:[%s13] sm:$0x1]
    %v1322 = vperm.slane %v1320, 0
    %v1324 = vadd.f32 %v1315, %v1322
    %v1325 = vadd.f32 %v1318, %v1322
    %v1326 = vxor.u32 %v1324, 2147483648
    %v1327 = vxor.u32 %v1325, 2147483648
    %v1328 = vmul.f32 %v1326, 1.442695
    %v1329 = vpow.pop %v1328
    %v1330 = vmul.f32 %v1327, 1.442695
    %v1331 = vpow.pop %v1330
    %v1332 = vadd.f32 %v1329, 1.0
    %v1333 = vadd.f32 %v1331, 1.0
    %v1334 = vrcp.pop %v1332
    %v1335 = vmul.f32 %v1332, %v1334
    %v1336 = vsub.f32 1.0, %v1335
    %v1337 = vmul.f32 %v1334, %v1336
    %v1338 = vadd.f32 %v1334, %v1337
    %vm1339 = vweird.f32 %v1332
    %vm1340 = vweird.f32 %v1334
    %vm1341 = vmor %vm1339, %vm1340
    %v1342 = vsel %vm1341, %v1334, %v1338
    %v1343 = vand.u32 2147483647, %v1332
    %vm1344 = vcmp.eq.f32.partialorder %v1343, 8.507059e+37
    %v1345 = vand.u32 %v1332, 2147483648
    %v1346 = vor.u32 1.1754944e-38, %v1345
    %v1347 = vsel %vm1344, %v1346, %v1342
    %v1348 = vmul.f32 1.0, %v1347
    %v1349 = vrcp.pop %v1333
    %v1350 = vmul.f32 %v1333, %v1349
    %v1351 = vsub.f32 1.0, %v1350
    %v1352 = vmul.f32 %v1349, %v1351
    %v1353 = vadd.f32 %v1349, %v1352
    %vm1354 = vweird.f32 %v1333
    %vm1355 = vweird.f32 %v1349
    %vm1356 = vmor %vm1354, %vm1355
    %v1357 = vsel %vm1356, %v1349, %v1353
    %v1358 = vand.u32 2147483647, %v1333
    %vm1359 = vcmp.eq.f32.partialorder %v1358, 8.507059e+37
    %v1360 = vand.u32 %v1333, 2147483648
    %v1361 = vor.u32 1.1754944e-38, %v1360
    %v1362 = vsel %vm1359, %v1361, %v1357
    %v1363 = vmul.f32 1.0, %v1362
    %v1364 = vsub.f32 %v750, %v1240
    %v1365 = vsub.f32 %v751, %v1241
    %v1366 = vmul.f32 %v1348, %v1364
    %v1367 = vmul.f32 %v1363, %v1365
    %v1368 = vadd.f32 %v1240, %v1366
    %v1369 = vadd.f32 %v1241, %v1367
    %v1370 = vld [vmem:[#allocation17] sm:$0xff]
    %v1371 = vld [vmem:[#allocation17 + $0x8] sm:$0xff]
    %v1372 = vld [vmem:[#allocation17 + $0x10] sm:$0xff]
    %v1373 = vld [vmem:[#allocation17 + $0x18] sm:$0xff]
    %v1374 = vld [vmem:[#allocation17 + $0x20] sm:$0xff]
    %v1375 = vld [vmem:[#allocation17 + $0x28] sm:$0xff]
    %v1376 = vld [vmem:[#allocation17 + $0x30] sm:$0xff]
    %v1377 = vld [vmem:[#allocation17 + $0x38] sm:$0xff]
    %v1378 = vld [vmem:[#allocation17 + $0x40] sm:$0xff]
    %v1379 = vld [vmem:[#allocation17 + $0x48] sm:$0xff]
    %v1380 = vld [vmem:[#allocation17 + $0x50] sm:$0xff]
    %v1381 = vld [vmem:[#allocation17 + $0x58] sm:$0xff]
    %v1382 = vld [vmem:[#allocation17 + $0x60] sm:$0xff]
    %v1383 = vld [vmem:[#allocation17 + $0x68] sm:$0xff]
    %v1384 = vld [vmem:[#allocation17 + $0x70] sm:$0xff]
    %v1385 = vld [vmem:[#allocation17 + $0x78] sm:$0xff]
    %v1386 = vld [vmem:[#allocation19] sm:$0xff]
    %v1387 = vld [vmem:[#allocation19 + $0x8] sm:$0xff]
    %v1388 = vld [vmem:[#allocation19 + $0x10] sm:$0xff]
    %v1389 = vld [vmem:[#allocation19 + $0x18] sm:$0xff]
    %v1390 = vld [vmem:[#allocation19 + $0x20] sm:$0xff]
    %v1391 = vld [vmem:[#allocation19 + $0x28] sm:$0xff]
    %v1392 = vld [vmem:[#allocation19 + $0x30] sm:$0xff]
    %v1393 = vld [vmem:[#allocation19 + $0x38] sm:$0xff]
    %v1394 = vld [vmem:[#allocation19 + $0x40] sm:$0xff]
    %v1395 = vld [vmem:[#allocation19 + $0x48] sm:$0xff]
    %v1396 = vld [vmem:[#allocation19 + $0x50] sm:$0xff]
    %v1397 = vld [vmem:[#allocation19 + $0x58] sm:$0xff]
    %v1398 = vld [vmem:[#allocation19 + $0x60] sm:$0xff]
    %v1399 = vld [vmem:[#allocation19 + $0x68] sm:$0xff]
    %v1400 = vld [vmem:[#allocation19 + $0x70] sm:$0xff]
    %v1401 = vld [vmem:[#allocation19 + $0x78] sm:$0xff]
    %1402 = vmatpush.msra.mxu0 %v1401
    %1403 = vmatpush.msra.mxu0 %v1400
    %1404 = vmatpush.msra.mxu0 %v1399
    %1405 = vmatpush.msra.mxu0 %v1398
    %1406 = vmatpush.msra.mxu0 %v1397
    %1407 = vmatpush.msra.mxu0 %v1396
    %1408 = vmatpush.msra.mxu0 %v1395
    %1409 = vmatpush.msra.mxu0 %v1394
    %1410 = vmatpush.msra.mxu0 %v1393
    %1411 = vmatpush.msra.mxu0 %v1392
    %1412 = vmatpush.msra.mxu0 %v1391
    %1413 = vmatpush.msra.mxu0 %v1390
    %1414 = vmatpush.msra.mxu0 %v1389
    %1415 = vmatpush.msra.mxu0 %v1388
    %1416 = vmatpush.msra.mxu0 %v1387
    %1417 = vmatpush.msra.mxu0 %v1386
    %1418 = vmatmul.f32.gmra.mxu0 %v1368
    %v1419 = vpop.f32.mrf.mxu0
    %v1420 = vadd.f32 0.0, %v1419
    %1421 = vmatmul.f32.gmra.mxu0 %v1369
    %v1422 = vpop.f32.mrf.mxu0
    %v1423 = vadd.f32 0.0, %v1422
    %1424 = vdwg.mxu0
    %1425 = vmatpush.msra.mxu0 %v1385
    %1426 = vmatpush.msra.mxu0 %v1384
    %1427 = vmatpush.msra.mxu0 %v1383
    %1428 = vmatpush.msra.mxu0 %v1382
    %1429 = vmatpush.msra.mxu0 %v1381
    %1430 = vmatpush.msra.mxu0 %v1380
    %1431 = vmatpush.msra.mxu0 %v1379
    %1432 = vmatpush.msra.mxu0 %v1378
    %1433 = vmatpush.msra.mxu0 %v1377
    %1434 = vmatpush.msra.mxu0 %v1376
    %1435 = vmatpush.msra.mxu0 %v1375
    %1436 = vmatpush.msra.mxu0 %v1374
    %1437 = vmatpush.msra.mxu0 %v1373
    %1438 = vmatpush.msra.mxu0 %v1372
    %1439 = vmatpush.msra.mxu0 %v1371
    %1440 = vmatpush.msra.mxu0 %v1370
    %1441 = vmatmul.f32.gmra.mxu0 %v228
    %v1442 = vpop.f32.mrf.mxu0
    %v1443 = vadd.f32 %v1420, %v1442
    %1444 = vmatmul.f32.gmra.mxu0 %v229
    %v1445 = vpop.f32.mrf.mxu0
    %v1446 = vadd.f32 %v1423, %v1445
    %1447 = vdwg.mxu0
    %v1448 = vld [vmem:[%s16] sm:$0x1]
    %v1450 = vperm.slane %v1448, 0
    %v1452 = vadd.f32 %v1443, %v1450
    %v1453 = vadd.f32 %v1446, %v1450
    %v1454 = vmax.f32 %v1452, 0.0
    %v1455 = vmax.f32 %v1453, 0.0
    %1456 = vst [vmem:[#allocation20] sm:$0xff] %v1454
    %1457 = vst [vmem:[#allocation20 + $0x8] sm:$0xff] %v1455
    // Predicated region
    $region114: #{tpu_custom_call.1} parent=1 // pred_check
      _
    $region115: #{tpu_custom_call.1} parent=1 // pred_check_branch
      %1459 = sbr.rel (0) target = $region117
    $region116: #{tpu_custom_call.1} parent=1 // pred_region
      %1461 = vsyncadd [#allocation4], 0
      %s1462 = sshll.u32 [#allocation20], 4
      %s1463 = int_to_ptr.vmem [resolvable:$true] %s1462
      %s1464 = sshll.u32 %s17, 4
      %s1465 = int_to_ptr.hbm [resolvable:$true] %s1464
      %1470 = dma.vmem_to_hbm [thread:$0]  %s1463, 256, %s1465, [#allocation4], 128, 128, 8
    $region117: #{tpu_custom_call.1} parent=1 // pred_fallthru
      _
    // Predicated region
    $region118: #{tpu_custom_call.1} parent=1 // pred_check
      _
    $region119: #{tpu_custom_call.1} parent=1 // pred_check_branch
      %1472 = sbr.rel (0) target = $region121
    $region120: #{tpu_custom_call.1} parent=1 // pred_region
      %1474 = dma.done [#allocation4], 256
    $region121: #{tpu_custom_call.1} parent=1 // pred_fallthru
      _
    %1475 = vsyncpa [#allocation3], 1
    %1476 = vsyncpa [#allocation6], 1
    %1477 = vsyncpa [#allocation9], 1
    %1478 = vsyncpa [#allocation12], 1
    %1479 = vsyncpa [#allocation15], 1
    %1480 = vsyncpa [#allocation18], 1
    %1481 = vsyncpa [#allocation4], 1

</llo_original>
